<compile_context>
chip_gen: v7x
topology: tpu7x:2x2x1
jax: 0.10.0
libtpu: 0.0.40
codegen_flags: <defaults>
</compile_context>

<pallas_src>
import math

import jax
import jax.numpy as jnp
from jax import lax
from jax.experimental import pallas as pl
from jax.experimental.pallas import tpu as pltpu

D_MODEL = 32
D_FF = 64
NUM_HEADS = 8
D_HEAD = D_MODEL // NUM_HEADS
LN_EPS = 1e-6
ATTN_SCALE = 1.0 / math.sqrt(D_HEAD)


# ----------------------------- fused kernel -------------------------------

def _layer_norm(z, g, b):
    mu = jnp.mean(z, axis=-1, keepdims=True)
    var = jnp.mean(jnp.square(z - mu), axis=-1, keepdims=True)
    return g * ((z - mu) * lax.rsqrt(var + LN_EPS)) + b


def _mha_core(q, k, v, keep_mask, p_ref):
    """q: (Sq, D); k, v: (Sk, D); keep_mask: (Sq, Sk) bool.

    Writes post-softmax attention probs for head h to p_ref[0, h] and returns
    the concatenated per-head context (Sq, D).  The head "split" is just a
    static lane slice of activations already resident in VMEM.
    """
    ctx = []
    for h in range(NUM_HEADS):
        sl = slice(h * D_HEAD, (h + 1) * D_HEAD)
        qh = q[:, sl]
        kh = k[:, sl]
        vh = v[:, sl]
        s = jnp.dot(qh, kh.T, preferred_element_type=jnp.float32) * ATTN_SCALE
        s = jnp.where(keep_mask, s, -1e9)
        s = s - jnp.max(s, axis=-1, keepdims=True)
        e = jnp.exp(s)
        p = e / jnp.sum(e, axis=-1, keepdims=True)
        p_ref[0, h, :, :] = p.astype(p_ref.dtype)
        ctx.append(jnp.dot(p, vh, preferred_element_type=jnp.float32))
    return jnp.concatenate(ctx, axis=-1)  # (Sq, D)


def _decoder_kernel(
    # activations / masks (per-batch blocks)
    x_ref, src_ref, tmask_ref, smask_ref,
    # masked self-attention params
    wqkv_s_ref, bqkv_s_ref, wo_s_ref, bo_s_ref,
    # source attention params
    wq_c_ref, bq_c_ref, wkv_c_ref, bkv_c_ref, wo_c_ref, bo_c_ref,
    # feed-forward params
    w1_ref, b1_ref, w2_ref, b2_ref,
    # layer norm params
    ln1g_ref, ln1b_ref, ln2g_ref, ln2b_ref, ln3g_ref, ln3b_ref,
    # outputs
    out_ref, p_self_ref, p_src_ref):
    D = D_MODEL
    x = x_ref[0].astype(jnp.float32)         # (Sq, D)
    src = src_ref[0].astype(jnp.float32)     # (Ss, D)
    keep_t = tmask_ref[0, 0] != 0            # (Sq, Sq)  -- hoisted mask compare
    keep_s = smask_ref[0, 0] != 0            # (Sq, Ss)

    # ---- masked self attention + add & norm ----
    qkv = (jnp.dot(x, wqkv_s_ref[...], preferred_element_type=jnp.float32)
           + bqkv_s_ref[...])
    ctx = _mha_core(qkv[:, :D], qkv[:, D:2 * D], qkv[:, 2 * D:], keep_t,
                    p_self_ref)
    attn = (jnp.dot(ctx, wo_s_ref[...], preferred_element_type=jnp.float32)
            + bo_s_ref[...])
    x1 = _layer_norm(x + attn, ln1g_ref[...], ln1b_ref[...])

    # ---- source attention + add & norm ----
    qc = (jnp.dot(x1, wq_c_ref[...], preferred_element_type=jnp.float32)
          + bq_c_ref[...])
    kv = (jnp.dot(src, wkv_c_ref[...], preferred_element_type=jnp.float32)
          + bkv_c_ref[...])
    ctx2 = _mha_core(qc, kv[:, :D], kv[:, D:], keep_s, p_src_ref)
    attn2 = (jnp.dot(ctx2, wo_c_ref[...], preferred_element_type=jnp.float32)
             + bo_c_ref[...])
    x2 = _layer_norm(x1 + attn2, ln2g_ref[...], ln2b_ref[...])

    # ---- feed forward + add & norm ----
    h = jnp.maximum(
        jnp.dot(x2, w1_ref[...], preferred_element_type=jnp.float32)
        + b1_ref[...], 0.0)
    ff = (jnp.dot(h, w2_ref[...], preferred_element_type=jnp.float32)
          + b2_ref[...])
    out = _layer_norm(x2 + ff, ln3g_ref[...], ln3b_ref[...])
    out_ref[0] = out.astype(out_ref.dtype)


# ----------------------------- model wrapper ------------------------------

def trans_decoder(params, src_encoded, x, src_mask=None, tgt_mask=None):
    B, Sq, D = x.shape
    Ss = src_encoded.shape[1]
    if tgt_mask is None:
        tgt_mask = jnp.ones((B, 1, Sq, Sq), jnp.float32)
    else:
        tgt_mask = jnp.broadcast_to(tgt_mask, (B, 1, Sq, Sq)).astype(jnp.float32)
    if src_mask is None:
        src_mask = jnp.ones((B, 1, Sq, Ss), jnp.float32)
    else:
        src_mask = jnp.broadcast_to(src_mask, (B, 1, Sq, Ss)).astype(jnp.float32)

    sa, ca, ff = params["self_attn"], params["src_attn"], params["ff"]
    # Fused projection weights: Q|K|V for self attention, K|V for src attention.
    wqkv_s = jnp.concatenate([sa["wq"], sa["wk"], sa["wv"]], axis=1)   # (D, 3D)
    bqkv_s = jnp.concatenate([sa["bq"], sa["bk"], sa["bv"]])[None, :]  # (1, 3D)
    wkv_c = jnp.concatenate([ca["wk"], ca["wv"]], axis=1)              # (D, 2D)
    bkv_c = jnp.concatenate([ca["bk"], ca["bv"]])[None, :]             # (1, 2D)

    def full(shape):
        return pl.BlockSpec(shape, lambda b, _n=len(shape): (0,) * _n)

    grid_spec = pltpu.PrefetchScalarGridSpec(
        num_scalar_prefetch=0,
        grid=(B,),
        in_specs=[
            pl.BlockSpec((1, Sq, D), lambda b: (b, 0, 0)),          # x
            pl.BlockSpec((1, Ss, D), lambda b: (b, 0, 0)),          # src_encoded
            pl.BlockSpec((1, 1, Sq, Sq), lambda b: (b, 0, 0, 0)),   # tgt_mask
            pl.BlockSpec((1, 1, Sq, Ss), lambda b: (b, 0, 0, 0)),   # src_mask
            # self attention params (resident: same block every step)
            full((D, 3 * D)), full((1, 3 * D)), full((D, D)), full((1, D)),
            # src attention params
            full((D, D)), full((1, D)), full((D, 2 * D)), full((1, 2 * D)),
            full((D, D)), full((1, D)),
            # feed-forward params
            full((D, D_FF)), full((1, D_FF)), full((D_FF, D)), full((1, D)),
            # layer norm params
            full((1, D)), full((1, D)), full((1, D)), full((1, D)),
            full((1, D)), full((1, D)),
        ],
        out_specs=(
            pl.BlockSpec((1, Sq, D), lambda b: (b, 0, 0)),
            pl.BlockSpec((1, NUM_HEADS, Sq, Sq), lambda b: (b, 0, 0, 0)),
            pl.BlockSpec((1, NUM_HEADS, Sq, Ss), lambda b: (b, 0, 0, 0)),
        ),
    )

    out, p_self, p_src = pl.pallas_call(
        _decoder_kernel,
        out_shape=(
            jax.ShapeDtypeStruct((B, Sq, D), x.dtype),
            jax.ShapeDtypeStruct((B, NUM_HEADS, Sq, Sq), jnp.float32),
            jax.ShapeDtypeStruct((B, NUM_HEADS, Sq, Ss), jnp.float32),
        ),
        grid_spec=grid_spec,
        compiler_params=pltpu.CompilerParams(
            dimension_semantics=("parallel",)),
    )(x, src_encoded, tgt_mask, src_mask,
      wqkv_s, bqkv_s, sa["wo"], sa["bo"][None, :],
      ca["wq"], ca["bq"][None, :], wkv_c, bkv_c, ca["wo"], ca["bo"][None, :],
      ff["w1"], ff["b1"][None, :], ff["w2"], ff["b2"][None, :],
      params["ln1_g"][None, :], params["ln1_b"][None, :],
      params["ln2_g"][None, :], params["ln2_b"][None, :],
      params["ln3_g"][None, :], params["ln3_b"][None, :])
    return out, p_self, p_src


# ----------------------------- parameter init -----------------------------

def _dense_init(key, din, dout):
    kw, kb = jax.random.split(key)
    lim = 1.0 / math.sqrt(din)
    w = jax.random.uniform(kw, (din, dout), jnp.float32, -lim, lim)
    b = jax.random.uniform(kb, (dout,), jnp.float32, -lim, lim)
    return w, b


def _mha_init(key, d_model):
    ks = jax.random.split(key, 4)
    wq, bq = _dense_init(ks[0], d_model, d_model)
    wk, bk = _dense_init(ks[1], d_model, d_model)
    wv, bv = _dense_init(ks[2], d_model, d_model)
    wo, bo = _dense_init(ks[3], d_model, d_model)
    return dict(wq=wq, bq=bq, wk=wk, bk=bk, wv=wv, bv=bv, wo=wo, bo=bo)


def init_params(key, d_model=D_MODEL, d_ff=D_FF):
    k1, k2, k3, k4 = jax.random.split(key, 4)
    w1, b1 = _dense_init(k3, d_model, d_ff)
    w2, b2 = _dense_init(k4, d_ff, d_model)
    ones = jnp.ones((d_model,), jnp.float32)
    zeros = jnp.zeros((d_model,), jnp.float32)
    return dict(
        self_attn=_mha_init(k1, d_model),
        src_attn=_mha_init(k2, d_model),
        ff=dict(w1=w1, b1=b1, w2=w2, b2=b2),
        ln1_g=ones, ln1_b=zeros,
        ln2_g=ones, ln2_b=zeros,
        ln3_g=ones, ln3_b=zeros,
    )


# ----------------------------------- main ----------------------------------

if __name__ == "__main__":
    B, S_TGT, S_SRC = 2, 8, 8

    key = jax.random.PRNGKey(0)
    kp, kx, ks = jax.random.split(key, 3)
    params = init_params(kp)

    x = jax.random.normal(kx, (B, S_TGT, D_MODEL), jnp.float32)
    src_encoded = jax.random.normal(ks, (B, S_SRC, D_MODEL), jnp.float32)

    # causal target mask, all-ones source mask
    tgt_mask = jnp.tril(jnp.ones((S_TGT, S_TGT), jnp.float32))[None, None]
    tgt_mask = jnp.broadcast_to(tgt_mask, (B, 1, S_TGT, S_TGT))
    src_mask = jnp.ones((B, 1, S_TGT, S_SRC), jnp.float32)

    out, q_key_dots, q_key_src_dots = jax.jit(trans_decoder)(
        params, src_encoded, x, src_mask=src_mask, tgt_mask=tgt_mask)
    jax.block_until_ready((out, q_key_dots, q_key_src_dots))

    assert out.shape == (B, S_TGT, D_MODEL)
    assert q_key_dots.shape == (B, NUM_HEADS, S_TGT, S_TGT)
    assert q_key_src_dots.shape == (B, NUM_HEADS, S_TGT, S_SRC)
    assert bool(jnp.all(jnp.isfinite(out)))
    assert bool(jnp.all(jnp.isfinite(q_key_dots)))
    assert bool(jnp.all(jnp.isfinite(q_key_src_dots)))
    # softmax rows must sum to 1
    assert bool(jnp.allclose(q_key_dots.sum(-1), 1.0, atol=1e-5))
    assert bool(jnp.allclose(q_key_src_dots.sum(-1), 1.0, atol=1e-5))
    print("KERNEL_OK")
</pallas_src>

<mosaic_0001>
module attributes {stable_mosaic.version = 11 : i64} {
  func.func @_decoder_kernel(%arg0: i32, %arg1: memref<1x8x32xf32, #tpu.memory_space<vmem>>, %arg2: memref<1x8x32xf32, #tpu.memory_space<vmem>>, %arg3: memref<1x1x8x8xf32, #tpu.memory_space<vmem>>, %arg4: memref<1x1x8x8xf32, #tpu.memory_space<vmem>>, %arg5: memref<32x96xf32, #tpu.memory_space<vmem>>, %arg6: memref<1x96xf32, #tpu.memory_space<vmem>>, %arg7: memref<32x32xf32, #tpu.memory_space<vmem>>, %arg8: memref<1x32xf32, #tpu.memory_space<vmem>>, %arg9: memref<32x32xf32, #tpu.memory_space<vmem>>, %arg10: memref<1x32xf32, #tpu.memory_space<vmem>>, %arg11: memref<32x64xf32, #tpu.memory_space<vmem>>, %arg12: memref<1x64xf32, #tpu.memory_space<vmem>>, %arg13: memref<32x32xf32, #tpu.memory_space<vmem>>, %arg14: memref<1x32xf32, #tpu.memory_space<vmem>>, %arg15: memref<32x64xf32, #tpu.memory_space<vmem>>, %arg16: memref<1x64xf32, #tpu.memory_space<vmem>>, %arg17: memref<64x32xf32, #tpu.memory_space<vmem>>, %arg18: memref<1x32xf32, #tpu.memory_space<vmem>>, %arg19: memref<1x32xf32, #tpu.memory_space<vmem>>, %arg20: memref<1x32xf32, #tpu.memory_space<vmem>>, %arg21: memref<1x32xf32, #tpu.memory_space<vmem>>, %arg22: memref<1x32xf32, #tpu.memory_space<vmem>>, %arg23: memref<1x32xf32, #tpu.memory_space<vmem>>, %arg24: memref<1x32xf32, #tpu.memory_space<vmem>>, %arg25: memref<1x8x32xf32, #tpu.memory_space<vmem>>, %arg26: memref<1x8x8x8xf32, #tpu.memory_space<vmem>>, %arg27: memref<1x8x8x8xf32, #tpu.memory_space<vmem>>) attributes {dimension_semantics = [#tpu.dimension_semantics<parallel>], iteration_bounds = array<i64: 2>, scalar_prefetch = 0 : i64, scratch_operands = 0 : i64, tpu.core_type = #tpu.core_type<tc>, window_params = [{transform_indices = @transform_0, window_bounds = array<i64: 1, 8, 32>}, {transform_indices = @transform_1, window_bounds = array<i64: 1, 8, 32>}, {transform_indices = @transform_2, window_bounds = array<i64: 1, 1, 8, 8>}, {transform_indices = @transform_3, window_bounds = array<i64: 1, 1, 8, 8>}, {pipeline_mode = #tpu.pipeline_mode<synchronous>, transform_indices = @transform_4, window_bounds = array<i64: 32, 96>}, {pipeline_mode = #tpu.pipeline_mode<synchronous>, transform_indices = @transform_5, window_bounds = array<i64: 1, 96>}, {pipeline_mode = #tpu.pipeline_mode<synchronous>, transform_indices = @transform_6, window_bounds = array<i64: 32, 32>}, {pipeline_mode = #tpu.pipeline_mode<synchronous>, transform_indices = @transform_7, window_bounds = array<i64: 1, 32>}, {pipeline_mode = #tpu.pipeline_mode<synchronous>, transform_indices = @transform_8, window_bounds = array<i64: 32, 32>}, {pipeline_mode = #tpu.pipeline_mode<synchronous>, transform_indices = @transform_9, window_bounds = array<i64: 1, 32>}, {pipeline_mode = #tpu.pipeline_mode<synchronous>, transform_indices = @transform_10, window_bounds = array<i64: 32, 64>}, {pipeline_mode = #tpu.pipeline_mode<synchronous>, transform_indices = @transform_11, window_bounds = array<i64: 1, 64>}, {pipeline_mode = #tpu.pipeline_mode<synchronous>, transform_indices = @transform_12, window_bounds = array<i64: 32, 32>}, {pipeline_mode = #tpu.pipeline_mode<synchronous>, transform_indices = @transform_13, window_bounds = array<i64: 1, 32>}, {pipeline_mode = #tpu.pipeline_mode<synchronous>, transform_indices = @transform_14, window_bounds = array<i64: 32, 64>}, {pipeline_mode = #tpu.pipeline_mode<synchronous>, transform_indices = @transform_15, window_bounds = array<i64: 1, 64>}, {pipeline_mode = #tpu.pipeline_mode<synchronous>, transform_indices = @transform_16, window_bounds = array<i64: 64, 32>}, {pipeline_mode = #tpu.pipeline_mode<synchronous>, transform_indices = @transform_17, window_bounds = array<i64: 1, 32>}, {pipeline_mode = #tpu.pipeline_mode<synchronous>, transform_indices = @transform_18, window_bounds = array<i64: 1, 32>}, {pipeline_mode = #tpu.pipeline_mode<synchronous>, transform_indices = @transform_19, window_bounds = array<i64: 1, 32>}, {pipeline_mode = #tpu.pipeline_mode<synchronous>, transform_indices = @transform_20, window_bounds = array<i64: 1, 32>}, {pipeline_mode = #tpu.pipeline_mode<synchronous>, transform_indices = @transform_21, window_bounds = array<i64: 1, 32>}, {pipeline_mode = #tpu.pipeline_mode<synchronous>, transform_indices = @transform_22, window_bounds = array<i64: 1, 32>}, {pipeline_mode = #tpu.pipeline_mode<synchronous>, transform_indices = @transform_23, window_bounds = array<i64: 1, 32>}, {transform_indices = @transform_24, window_bounds = array<i64: 1, 8, 32>}, {transform_indices = @transform_25, window_bounds = array<i64: 1, 8, 8, 8>}, {transform_indices = @transform_26, window_bounds = array<i64: 1, 8, 8, 8>}]} {
    %c0 = arith.constant 0 : index
    %c0_0 = arith.constant 0 : index
    %c0_1 = arith.constant 0 : index
    %0 = vector.load %arg1[%c0, %c0_0, %c0_1] : memref<1x8x32xf32, #tpu.memory_space<vmem>>, vector<1x8x32xf32>
    %1 = vector.shape_cast %0 : vector<1x8x32xf32> to vector<8x32xf32>
    %c0_2 = arith.constant 0 : index
    %c0_3 = arith.constant 0 : index
    %c0_4 = arith.constant 0 : index
    %2 = vector.load %arg2[%c0_2, %c0_3, %c0_4] : memref<1x8x32xf32, #tpu.memory_space<vmem>>, vector<1x8x32xf32>
    %3 = vector.shape_cast %2 : vector<1x8x32xf32> to vector<8x32xf32>
    %c0_5 = arith.constant 0 : index
    %c0_6 = arith.constant 0 : index
    %c0_7 = arith.constant 0 : index
    %c0_8 = arith.constant 0 : index
    %4 = vector.load %arg3[%c0_5, %c0_6, %c0_7, %c0_8] : memref<1x1x8x8xf32, #tpu.memory_space<vmem>>, vector<1x1x8x8xf32>
    %5 = vector.shape_cast %4 : vector<1x1x8x8xf32> to vector<8x8xf32>
    %cst = arith.constant 0.000000e+00 : f32
    %6 = vector.broadcast %cst : f32 to vector<8x8xf32>
    %7 = arith.cmpf one, %5, %6 : vector<8x8xf32>
    %c0_9 = arith.constant 0 : index
    %c0_10 = arith.constant 0 : index
    %c0_11 = arith.constant 0 : index
    %c0_12 = arith.constant 0 : index
    %8 = vector.load %arg4[%c0_9, %c0_10, %c0_11, %c0_12] : memref<1x1x8x8xf32, #tpu.memory_space<vmem>>, vector<1x1x8x8xf32>
    %9 = vector.shape_cast %8 : vector<1x1x8x8xf32> to vector<8x8xf32>
    %cst_13 = arith.constant 0.000000e+00 : f32
    %10 = vector.broadcast %cst_13 : f32 to vector<8x8xf32>
    %11 = arith.cmpf one, %9, %10 : vector<8x8xf32>
    %c0_14 = arith.constant 0 : index
    %c0_15 = arith.constant 0 : index
    %12 = vector.load %arg5[%c0_14, %c0_15] : memref<32x96xf32, #tpu.memory_space<vmem>>, vector<32x96xf32>
    %cst_16 = arith.constant dense<0.000000e+00> : vector<8x96xf32>
    %13 = tpu.matmul %1, %12, %cst_16 {dimension_numbers = #tpu.dot_dimension_numbers<[1], [0], [0], [1], [0, 0, 1, 1], [], []>} : vector<8x32xf32>, vector<32x96xf32>, vector<8x96xf32> -> vector<8x96xf32>
    %c0_17 = arith.constant 0 : index
    %c0_18 = arith.constant 0 : index
    %14 = vector.load %arg6[%c0_17, %c0_18] : memref<1x96xf32, #tpu.memory_space<vmem>>, vector<1x96xf32>
    %15 = vector.broadcast %14 : vector<1x96xf32> to vector<8x96xf32>
    %16 = arith.addf %13, %15 : vector<8x96xf32>
    %17 = vector.extract_strided_slice %16 {offsets = [0, 0], sizes = [8, 32], strides = [1, 1]} : vector<8x96xf32> to vector<8x32xf32>
    %18 = vector.extract_strided_slice %16 {offsets = [0, 32], sizes = [8, 32], strides = [1, 1]} : vector<8x96xf32> to vector<8x32xf32>
    %19 = vector.extract_strided_slice %16 {offsets = [0, 64], sizes = [8, 32], strides = [1, 1]} : vector<8x96xf32> to vector<8x32xf32>
    %20 = vector.extract_strided_slice %17 {offsets = [0, 0], sizes = [8, 4], strides = [1, 1]} : vector<8x32xf32> to vector<8x4xf32>
    %21 = vector.extract_strided_slice %18 {offsets = [0, 0], sizes = [8, 4], strides = [1, 1]} : vector<8x32xf32> to vector<8x4xf32>
    %22 = vector.extract_strided_slice %19 {offsets = [0, 0], sizes = [8, 4], strides = [1, 1]} : vector<8x32xf32> to vector<8x4xf32>
    %23 = tpu.transpose %21, [1, 0] : vector<8x4xf32> -> vector<4x8xf32>
    %cst_19 = arith.constant dense<0.000000e+00> : vector<8x8xf32>
    %24 = tpu.matmul %20, %23, %cst_19 {dimension_numbers = #tpu.dot_dimension_numbers<[1], [0], [0], [1], [0, 0, 1, 1], [], []>} : vector<8x4xf32>, vector<4x8xf32>, vector<8x8xf32> -> vector<8x8xf32>
    %cst_20 = arith.constant 5.000000e-01 : f32
    %25 = vector.broadcast %cst_20 : f32 to vector<8x8xf32>
    %26 = arith.mulf %24, %25 : vector<8x8xf32>
    %cst_21 = arith.constant -1.000000e+09 : f32
    %27 = vector.broadcast %cst_21 : f32 to vector<8x8xf32>
    %28 = arith.select %7, %26, %27 : vector<8x8xi1>, vector<8x8xf32>
    %cst_22 = arith.constant dense<0xFF800000> : vector<8xf32>
    %29 = vector.multi_reduction <maximumf>, %28, %cst_22 [1] : vector<8x8xf32> to vector<8xf32>
    %30 = vector.shape_cast %29 : vector<8xf32> to vector<8x1xf32>
    %31 = vector.broadcast %30 : vector<8x1xf32> to vector<8x8xf32>
    %32 = arith.subf %28, %31 : vector<8x8xf32>
    %33 = math.exp %32 : vector<8x8xf32>
    %cst_23 = arith.constant dense<0.000000e+00> : vector<8xf32>
    %34 = vector.multi_reduction <add>, %33, %cst_23 [1] : vector<8x8xf32> to vector<8xf32>
    %35 = vector.shape_cast %34 : vector<8xf32> to vector<8x1xf32>
    %36 = vector.broadcast %35 : vector<8x1xf32> to vector<8x8xf32>
    %37 = arith.divf %33, %36 : vector<8x8xf32>
    %c0_24 = arith.constant 0 : index
    %c0_25 = arith.constant 0 : index
    %c0_26 = arith.constant 0 : index
    %c0_27 = arith.constant 0 : index
    %38 = vector.load %arg26[%c0_24, %c0_25, %c0_26, %c0_27] : memref<1x8x8x8xf32, #tpu.memory_space<vmem>>, vector<1x1x8x8xf32>
    %39 = vector.shape_cast %38 : vector<1x1x8x8xf32> to vector<8x8xf32>
    %40 = vector.shape_cast %37 : vector<8x8xf32> to vector<1x1x8x8xf32>
    tpu.vector_store %arg26[%c0_24, %c0_25, %c0_26, %c0_27], %40 {strides = array<i32>} : memref<1x8x8x8xf32, #tpu.memory_space<vmem>>, vector<1x1x8x8xf32>,
    %cst_28 = arith.constant dense<0.000000e+00> : vector<8x4xf32>
    %41 = tpu.matmul %37, %22, %cst_28 {dimension_numbers = #tpu.dot_dimension_numbers<[1], [0], [0], [1], [0, 0, 1, 1], [], []>} : vector<8x8xf32>, vector<8x4xf32>, vector<8x4xf32> -> vector<8x4xf32>
    %42 = vector.extract_strided_slice %17 {offsets = [0, 4], sizes = [8, 4], strides = [1, 1]} : vector<8x32xf32> to vector<8x4xf32>
    %43 = vector.extract_strided_slice %18 {offsets = [0, 4], sizes = [8, 4], strides = [1, 1]} : vector<8x32xf32> to vector<8x4xf32>
    %44 = vector.extract_strided_slice %19 {offsets = [0, 4], sizes = [8, 4], strides = [1, 1]} : vector<8x32xf32> to vector<8x4xf32>
    %45 = tpu.transpose %43, [1, 0] : vector<8x4xf32> -> vector<4x8xf32>
    %cst_29 = arith.constant dense<0.000000e+00> : vector<8x8xf32>
    %46 = tpu.matmul %42, %45, %cst_29 {dimension_numbers = #tpu.dot_dimension_numbers<[1], [0], [0], [1], [0, 0, 1, 1], [], []>} : vector<8x4xf32>, vector<4x8xf32>, vector<8x8xf32> -> vector<8x8xf32>
    %cst_30 = arith.constant 5.000000e-01 : f32
    %47 = vector.broadcast %cst_30 : f32 to vector<8x8xf32>
    %48 = arith.mulf %46, %47 : vector<8x8xf32>
    %cst_31 = arith.constant -1.000000e+09 : f32
    %49 = vector.broadcast %cst_31 : f32 to vector<8x8xf32>
    %50 = arith.select %7, %48, %49 : vector<8x8xi1>, vector<8x8xf32>
    %cst_32 = arith.constant dense<0xFF800000> : vector<8xf32>
    %51 = vector.multi_reduction <maximumf>, %50, %cst_32 [1] : vector<8x8xf32> to vector<8xf32>
    %52 = vector.shape_cast %51 : vector<8xf32> to vector<8x1xf32>
    %53 = vector.broadcast %52 : vector<8x1xf32> to vector<8x8xf32>
    %54 = arith.subf %50, %53 : vector<8x8xf32>
    %55 = math.exp %54 : vector<8x8xf32>
    %cst_33 = arith.constant dense<0.000000e+00> : vector<8xf32>
    %56 = vector.multi_reduction <add>, %55, %cst_33 [1] : vector<8x8xf32> to vector<8xf32>
    %57 = vector.shape_cast %56 : vector<8xf32> to vector<8x1xf32>
    %58 = vector.broadcast %57 : vector<8x1xf32> to vector<8x8xf32>
    %59 = arith.divf %55, %58 : vector<8x8xf32>
    %c0_34 = arith.constant 0 : index
    %c1 = arith.constant 1 : index
    %c0_35 = arith.constant 0 : index
    %c0_36 = arith.constant 0 : index
    %60 = vector.load %arg26[%c0_34, %c1, %c0_35, %c0_36] : memref<1x8x8x8xf32, #tpu.memory_space<vmem>>, vector<1x1x8x8xf32>
    %61 = vector.shape_cast %60 : vector<1x1x8x8xf32> to vector<8x8xf32>
    %62 = vector.shape_cast %59 : vector<8x8xf32> to vector<1x1x8x8xf32>
    tpu.vector_store %arg26[%c0_34, %c1, %c0_35, %c0_36], %62 {strides = array<i32>} : memref<1x8x8x8xf32, #tpu.memory_space<vmem>>, vector<1x1x8x8xf32>,
    %cst_37 = arith.constant dense<0.000000e+00> : vector<8x4xf32>
    %63 = tpu.matmul %59, %44, %cst_37 {dimension_numbers = #tpu.dot_dimension_numbers<[1], [0], [0], [1], [0, 0, 1, 1], [], []>} : vector<8x8xf32>, vector<8x4xf32>, vector<8x4xf32> -> vector<8x4xf32>
    %64 = vector.extract_strided_slice %17 {offsets = [0, 8], sizes = [8, 4], strides = [1, 1]} : vector<8x32xf32> to vector<8x4xf32>
    %65 = vector.extract_strided_slice %18 {offsets = [0, 8], sizes = [8, 4], strides = [1, 1]} : vector<8x32xf32> to vector<8x4xf32>
    %66 = vector.extract_strided_slice %19 {offsets = [0, 8], sizes = [8, 4], strides = [1, 1]} : vector<8x32xf32> to vector<8x4xf32>
    %67 = tpu.transpose %65, [1, 0] : vector<8x4xf32> -> vector<4x8xf32>
    %cst_38 = arith.constant dense<0.000000e+00> : vector<8x8xf32>
    %68 = tpu.matmul %64, %67, %cst_38 {dimension_numbers = #tpu.dot_dimension_numbers<[1], [0], [0], [1], [0, 0, 1, 1], [], []>} : vector<8x4xf32>, vector<4x8xf32>, vector<8x8xf32> -> vector<8x8xf32>
    %cst_39 = arith.constant 5.000000e-01 : f32
    %69 = vector.broadcast %cst_39 : f32 to vector<8x8xf32>
    %70 = arith.mulf %68, %69 : vector<8x8xf32>
    %cst_40 = arith.constant -1.000000e+09 : f32
    %71 = vector.broadcast %cst_40 : f32 to vector<8x8xf32>
    %72 = arith.select %7, %70, %71 : vector<8x8xi1>, vector<8x8xf32>
    %cst_41 = arith.constant dense<0xFF800000> : vector<8xf32>
    %73 = vector.multi_reduction <maximumf>, %72, %cst_41 [1] : vector<8x8xf32> to vector<8xf32>
    %74 = vector.shape_cast %73 : vector<8xf32> to vector<8x1xf32>
    %75 = vector.broadcast %74 : vector<8x1xf32> to vector<8x8xf32>
    %76 = arith.subf %72, %75 : vector<8x8xf32>
    %77 = math.exp %76 : vector<8x8xf32>
    %cst_42 = arith.constant dense<0.000000e+00> : vector<8xf32>
    %78 = vector.multi_reduction <add>, %77, %cst_42 [1] : vector<8x8xf32> to vector<8xf32>
    %79 = vector.shape_cast %78 : vector<8xf32> to vector<8x1xf32>
    %80 = vector.broadcast %79 : vector<8x1xf32> to vector<8x8xf32>
    %81 = arith.divf %77, %80 : vector<8x8xf32>
    %c0_43 = arith.constant 0 : index
    %c2 = arith.constant 2 : index
    %c0_44 = arith.constant 0 : index
    %c0_45 = arith.constant 0 : index
    %82 = vector.load %arg26[%c0_43, %c2, %c0_44, %c0_45] : memref<1x8x8x8xf32, #tpu.memory_space<vmem>>, vector<1x1x8x8xf32>
    %83 = vector.shape_cast %82 : vector<1x1x8x8xf32> to vector<8x8xf32>
    %84 = vector.shape_cast %81 : vector<8x8xf32> to vector<1x1x8x8xf32>
    tpu.vector_store %arg26[%c0_43, %c2, %c0_44, %c0_45], %84 {strides = array<i32>} : memref<1x8x8x8xf32, #tpu.memory_space<vmem>>, vector<1x1x8x8xf32>,
    %cst_46 = arith.constant dense<0.000000e+00> : vector<8x4xf32>
    %85 = tpu.matmul %81, %66, %cst_46 {dimension_numbers = #tpu.dot_dimension_numbers<[1], [0], [0], [1], [0, 0, 1, 1], [], []>} : vector<8x8xf32>, vector<8x4xf32>, vector<8x4xf32> -> vector<8x4xf32>
    %86 = vector.extract_strided_slice %17 {offsets = [0, 12], sizes = [8, 4], strides = [1, 1]} : vector<8x32xf32> to vector<8x4xf32>
    %87 = vector.extract_strided_slice %18 {offsets = [0, 12], sizes = [8, 4], strides = [1, 1]} : vector<8x32xf32> to vector<8x4xf32>
    %88 = vector.extract_strided_slice %19 {offsets = [0, 12], sizes = [8, 4], strides = [1, 1]} : vector<8x32xf32> to vector<8x4xf32>
    %89 = tpu.transpose %87, [1, 0] : vector<8x4xf32> -> vector<4x8xf32>
    %cst_47 = arith.constant dense<0.000000e+00> : vector<8x8xf32>
    %90 = tpu.matmul %86, %89, %cst_47 {dimension_numbers = #tpu.dot_dimension_numbers<[1], [0], [0], [1], [0, 0, 1, 1], [], []>} : vector<8x4xf32>, vector<4x8xf32>, vector<8x8xf32> -> vector<8x8xf32>
    %cst_48 = arith.constant 5.000000e-01 : f32
    %91 = vector.broadcast %cst_48 : f32 to vector<8x8xf32>
    %92 = arith.mulf %90, %91 : vector<8x8xf32>
    %cst_49 = arith.constant -1.000000e+09 : f32
    %93 = vector.broadcast %cst_49 : f32 to vector<8x8xf32>
    %94 = arith.select %7, %92, %93 : vector<8x8xi1>, vector<8x8xf32>
    %cst_50 = arith.constant dense<0xFF800000> : vector<8xf32>
    %95 = vector.multi_reduction <maximumf>, %94, %cst_50 [1] : vector<8x8xf32> to vector<8xf32>
    %96 = vector.shape_cast %95 : vector<8xf32> to vector<8x1xf32>
    %97 = vector.broadcast %96 : vector<8x1xf32> to vector<8x8xf32>
    %98 = arith.subf %94, %97 : vector<8x8xf32>
    %99 = math.exp %98 : vector<8x8xf32>
    %cst_51 = arith.constant dense<0.000000e+00> : vector<8xf32>
    %100 = vector.multi_reduction <add>, %99, %cst_51 [1] : vector<8x8xf32> to vector<8xf32>
    %101 = vector.shape_cast %100 : vector<8xf32> to vector<8x1xf32>
    %102 = vector.broadcast %101 : vector<8x1xf32> to vector<8x8xf32>
    %103 = arith.divf %99, %102 : vector<8x8xf32>
    %c0_52 = arith.constant 0 : index
    %c3 = arith.constant 3 : index
    %c0_53 = arith.constant 0 : index
    %c0_54 = arith.constant 0 : index
    %104 = vector.load %arg26[%c0_52, %c3, %c0_53, %c0_54] : memref<1x8x8x8xf32, #tpu.memory_space<vmem>>, vector<1x1x8x8xf32>
    %105 = vector.shape_cast %104 : vector<1x1x8x8xf32> to vector<8x8xf32>
    %106 = vector.shape_cast %103 : vector<8x8xf32> to vector<1x1x8x8xf32>
    tpu.vector_store %arg26[%c0_52, %c3, %c0_53, %c0_54], %106 {strides = array<i32>} : memref<1x8x8x8xf32, #tpu.memory_space<vmem>>, vector<1x1x8x8xf32>,
    %cst_55 = arith.constant dense<0.000000e+00> : vector<8x4xf32>
    %107 = tpu.matmul %103, %88, %cst_55 {dimension_numbers = #tpu.dot_dimension_numbers<[1], [0], [0], [1], [0, 0, 1, 1], [], []>} : vector<8x8xf32>, vector<8x4xf32>, vector<8x4xf32> -> vector<8x4xf32>
    %108 = vector.extract_strided_slice %17 {offsets = [0, 16], sizes = [8, 4], strides = [1, 1]} : vector<8x32xf32> to vector<8x4xf32>
    %109 = vector.extract_strided_slice %18 {offsets = [0, 16], sizes = [8, 4], strides = [1, 1]} : vector<8x32xf32> to vector<8x4xf32>
    %110 = vector.extract_strided_slice %19 {offsets = [0, 16], sizes = [8, 4], strides = [1, 1]} : vector<8x32xf32> to vector<8x4xf32>
    %111 = tpu.transpose %109, [1, 0] : vector<8x4xf32> -> vector<4x8xf32>
    %cst_56 = arith.constant dense<0.000000e+00> : vector<8x8xf32>
    %112 = tpu.matmul %108, %111, %cst_56 {dimension_numbers = #tpu.dot_dimension_numbers<[1], [0], [0], [1], [0, 0, 1, 1], [], []>} : vector<8x4xf32>, vector<4x8xf32>, vector<8x8xf32> -> vector<8x8xf32>
    %cst_57 = arith.constant 5.000000e-01 : f32
    %113 = vector.broadcast %cst_57 : f32 to vector<8x8xf32>
    %114 = arith.mulf %112, %113 : vector<8x8xf32>
    %cst_58 = arith.constant -1.000000e+09 : f32
    %115 = vector.broadcast %cst_58 : f32 to vector<8x8xf32>
    %116 = arith.select %7, %114, %115 : vector<8x8xi1>, vector<8x8xf32>
    %cst_59 = arith.constant dense<0xFF800000> : vector<8xf32>
    %117 = vector.multi_reduction <maximumf>, %116, %cst_59 [1] : vector<8x8xf32> to vector<8xf32>
    %118 = vector.shape_cast %117 : vector<8xf32> to vector<8x1xf32>
    %119 = vector.broadcast %118 : vector<8x1xf32> to vector<8x8xf32>
    %120 = arith.subf %116, %119 : vector<8x8xf32>
    %121 = math.exp %120 : vector<8x8xf32>
    %cst_60 = arith.constant dense<0.000000e+00> : vector<8xf32>
    %122 = vector.multi_reduction <add>, %121, %cst_60 [1] : vector<8x8xf32> to vector<8xf32>
    %123 = vector.shape_cast %122 : vector<8xf32> to vector<8x1xf32>
    %124 = vector.broadcast %123 : vector<8x1xf32> to vector<8x8xf32>
    %125 = arith.divf %121, %124 : vector<8x8xf32>
    %c0_61 = arith.constant 0 : index
    %c4 = arith.constant 4 : index
    %c0_62 = arith.constant 0 : index
    %c0_63 = arith.constant 0 : index
    %126 = vector.load %arg26[%c0_61, %c4, %c0_62, %c0_63] : memref<1x8x8x8xf32, #tpu.memory_space<vmem>>, vector<1x1x8x8xf32>
    %127 = vector.shape_cast %126 : vector<1x1x8x8xf32> to vector<8x8xf32>
    %128 = vector.shape_cast %125 : vector<8x8xf32> to vector<1x1x8x8xf32>
    tpu.vector_store %arg26[%c0_61, %c4, %c0_62, %c0_63], %128 {strides = array<i32>} : memref<1x8x8x8xf32, #tpu.memory_space<vmem>>, vector<1x1x8x8xf32>,
    %cst_64 = arith.constant dense<0.000000e+00> : vector<8x4xf32>
    %129 = tpu.matmul %125, %110, %cst_64 {dimension_numbers = #tpu.dot_dimension_numbers<[1], [0], [0], [1], [0, 0, 1, 1], [], []>} : vector<8x8xf32>, vector<8x4xf32>, vector<8x4xf32> -> vector<8x4xf32>
    %130 = vector.extract_strided_slice %17 {offsets = [0, 20], sizes = [8, 4], strides = [1, 1]} : vector<8x32xf32> to vector<8x4xf32>
    %131 = vector.extract_strided_slice %18 {offsets = [0, 20], sizes = [8, 4], strides = [1, 1]} : vector<8x32xf32> to vector<8x4xf32>
    %132 = vector.extract_strided_slice %19 {offsets = [0, 20], sizes = [8, 4], strides = [1, 1]} : vector<8x32xf32> to vector<8x4xf32>
    %133 = tpu.transpose %131, [1, 0] : vector<8x4xf32> -> vector<4x8xf32>
    %cst_65 = arith.constant dense<0.000000e+00> : vector<8x8xf32>
    %134 = tpu.matmul %130, %133, %cst_65 {dimension_numbers = #tpu.dot_dimension_numbers<[1], [0], [0], [1], [0, 0, 1, 1], [], []>} : vector<8x4xf32>, vector<4x8xf32>, vector<8x8xf32> -> vector<8x8xf32>
    %cst_66 = arith.constant 5.000000e-01 : f32
    %135 = vector.broadcast %cst_66 : f32 to vector<8x8xf32>
    %136 = arith.mulf %134, %135 : vector<8x8xf32>
    %cst_67 = arith.constant -1.000000e+09 : f32
    %137 = vector.broadcast %cst_67 : f32 to vector<8x8xf32>
    %138 = arith.select %7, %136, %137 : vector<8x8xi1>, vector<8x8xf32>
    %cst_68 = arith.constant dense<0xFF800000> : vector<8xf32>
    %139 = vector.multi_reduction <maximumf>, %138, %cst_68 [1] : vector<8x8xf32> to vector<8xf32>
    %140 = vector.shape_cast %139 : vector<8xf32> to vector<8x1xf32>
    %141 = vector.broadcast %140 : vector<8x1xf32> to vector<8x8xf32>
    %142 = arith.subf %138, %141 : vector<8x8xf32>
    %143 = math.exp %142 : vector<8x8xf32>
    %cst_69 = arith.constant dense<0.000000e+00> : vector<8xf32>
    %144 = vector.multi_reduction <add>, %143, %cst_69 [1] : vector<8x8xf32> to vector<8xf32>
    %145 = vector.shape_cast %144 : vector<8xf32> to vector<8x1xf32>
    %146 = vector.broadcast %145 : vector<8x1xf32> to vector<8x8xf32>
    %147 = arith.divf %143, %146 : vector<8x8xf32>
    %c0_70 = arith.constant 0 : index
    %c5 = arith.constant 5 : index
    %c0_71 = arith.constant 0 : index
    %c0_72 = arith.constant 0 : index
    %148 = vector.load %arg26[%c0_70, %c5, %c0_71, %c0_72] : memref<1x8x8x8xf32, #tpu.memory_space<vmem>>, vector<1x1x8x8xf32>
    %149 = vector.shape_cast %148 : vector<1x1x8x8xf32> to vector<8x8xf32>
    %150 = vector.shape_cast %147 : vector<8x8xf32> to vector<1x1x8x8xf32>
    tpu.vector_store %arg26[%c0_70, %c5, %c0_71, %c0_72], %150 {strides = array<i32>} : memref<1x8x8x8xf32, #tpu.memory_space<vmem>>, vector<1x1x8x8xf32>,
    %cst_73 = arith.constant dense<0.000000e+00> : vector<8x4xf32>
    %151 = tpu.matmul %147, %132, %cst_73 {dimension_numbers = #tpu.dot_dimension_numbers<[1], [0], [0], [1], [0, 0, 1, 1], [], []>} : vector<8x8xf32>, vector<8x4xf32>, vector<8x4xf32> -> vector<8x4xf32>
    %152 = vector.extract_strided_slice %17 {offsets = [0, 24], sizes = [8, 4], strides = [1, 1]} : vector<8x32xf32> to vector<8x4xf32>
    %153 = vector.extract_strided_slice %18 {offsets = [0, 24], sizes = [8, 4], strides = [1, 1]} : vector<8x32xf32> to vector<8x4xf32>
    %154 = vector.extract_strided_slice %19 {offsets = [0, 24], sizes = [8, 4], strides = [1, 1]} : vector<8x32xf32> to vector<8x4xf32>
    %155 = tpu.transpose %153, [1, 0] : vector<8x4xf32> -> vector<4x8xf32>
    %cst_74 = arith.constant dense<0.000000e+00> : vector<8x8xf32>
    %156 = tpu.matmul %152, %155, %cst_74 {dimension_numbers = #tpu.dot_dimension_numbers<[1], [0], [0], [1], [0, 0, 1, 1], [], []>} : vector<8x4xf32>, vector<4x8xf32>, vector<8x8xf32> -> vector<8x8xf32>
    %cst_75 = arith.constant 5.000000e-01 : f32
    %157 = vector.broadcast %cst_75 : f32 to vector<8x8xf32>
    %158 = arith.mulf %156, %157 : vector<8x8xf32>
    %cst_76 = arith.constant -1.000000e+09 : f32
    %159 = vector.broadcast %cst_76 : f32 to vector<8x8xf32>
    %160 = arith.select %7, %158, %159 : vector<8x8xi1>, vector<8x8xf32>
    %cst_77 = arith.constant dense<0xFF800000> : vector<8xf32>
    %161 = vector.multi_reduction <maximumf>, %160, %cst_77 [1] : vector<8x8xf32> to vector<8xf32>
    %162 = vector.shape_cast %161 : vector<8xf32> to vector<8x1xf32>
    %163 = vector.broadcast %162 : vector<8x1xf32> to vector<8x8xf32>
    %164 = arith.subf %160, %163 : vector<8x8xf32>
    %165 = math.exp %164 : vector<8x8xf32>
    %cst_78 = arith.constant dense<0.000000e+00> : vector<8xf32>
    %166 = vector.multi_reduction <add>, %165, %cst_78 [1] : vector<8x8xf32> to vector<8xf32>
    %167 = vector.shape_cast %166 : vector<8xf32> to vector<8x1xf32>
    %168 = vector.broadcast %167 : vector<8x1xf32> to vector<8x8xf32>
    %169 = arith.divf %165, %168 : vector<8x8xf32>
    %c0_79 = arith.constant 0 : index
    %c6 = arith.constant 6 : index
    %c0_80 = arith.constant 0 : index
    %c0_81 = arith.constant 0 : index
    %170 = vector.load %arg26[%c0_79, %c6, %c0_80, %c0_81] : memref<1x8x8x8xf32, #tpu.memory_space<vmem>>, vector<1x1x8x8xf32>
    %171 = vector.shape_cast %170 : vector<1x1x8x8xf32> to vector<8x8xf32>
    %172 = vector.shape_cast %169 : vector<8x8xf32> to vector<1x1x8x8xf32>
    tpu.vector_store %arg26[%c0_79, %c6, %c0_80, %c0_81], %172 {strides = array<i32>} : memref<1x8x8x8xf32, #tpu.memory_space<vmem>>, vector<1x1x8x8xf32>,
    %cst_82 = arith.constant dense<0.000000e+00> : vector<8x4xf32>
    %173 = tpu.matmul %169, %154, %cst_82 {dimension_numbers = #tpu.dot_dimension_numbers<[1], [0], [0], [1], [0, 0, 1, 1], [], []>} : vector<8x8xf32>, vector<8x4xf32>, vector<8x4xf32> -> vector<8x4xf32>
    %174 = vector.extract_strided_slice %17 {offsets = [0, 28], sizes = [8, 4], strides = [1, 1]} : vector<8x32xf32> to vector<8x4xf32>
    %175 = vector.extract_strided_slice %18 {offsets = [0, 28], sizes = [8, 4], strides = [1, 1]} : vector<8x32xf32> to vector<8x4xf32>
    %176 = vector.extract_strided_slice %19 {offsets = [0, 28], sizes = [8, 4], strides = [1, 1]} : vector<8x32xf32> to vector<8x4xf32>
    %177 = tpu.transpose %175, [1, 0] : vector<8x4xf32> -> vector<4x8xf32>
    %cst_83 = arith.constant dense<0.000000e+00> : vector<8x8xf32>
    %178 = tpu.matmul %174, %177, %cst_83 {dimension_numbers = #tpu.dot_dimension_numbers<[1], [0], [0], [1], [0, 0, 1, 1], [], []>} : vector<8x4xf32>, vector<4x8xf32>, vector<8x8xf32> -> vector<8x8xf32>
    %cst_84 = arith.constant 5.000000e-01 : f32
    %179 = vector.broadcast %cst_84 : f32 to vector<8x8xf32>
    %180 = arith.mulf %178, %179 : vector<8x8xf32>
    %cst_85 = arith.constant -1.000000e+09 : f32
    %181 = vector.broadcast %cst_85 : f32 to vector<8x8xf32>
    %182 = arith.select %7, %180, %181 : vector<8x8xi1>, vector<8x8xf32>
    %cst_86 = arith.constant dense<0xFF800000> : vector<8xf32>
    %183 = vector.multi_reduction <maximumf>, %182, %cst_86 [1] : vector<8x8xf32> to vector<8xf32>
    %184 = vector.shape_cast %183 : vector<8xf32> to vector<8x1xf32>
    %185 = vector.broadcast %184 : vector<8x1xf32> to vector<8x8xf32>
    %186 = arith.subf %182, %185 : vector<8x8xf32>
    %187 = math.exp %186 : vector<8x8xf32>
    %cst_87 = arith.constant dense<0.000000e+00> : vector<8xf32>
    %188 = vector.multi_reduction <add>, %187, %cst_87 [1] : vector<8x8xf32> to vector<8xf32>
    %189 = vector.shape_cast %188 : vector<8xf32> to vector<8x1xf32>
    %190 = vector.broadcast %189 : vector<8x1xf32> to vector<8x8xf32>
    %191 = arith.divf %187, %190 : vector<8x8xf32>
    %c0_88 = arith.constant 0 : index
    %c7 = arith.constant 7 : index
    %c0_89 = arith.constant 0 : index
    %c0_90 = arith.constant 0 : index
    %192 = vector.load %arg26[%c0_88, %c7, %c0_89, %c0_90] : memref<1x8x8x8xf32, #tpu.memory_space<vmem>>, vector<1x1x8x8xf32>
    %193 = vector.shape_cast %192 : vector<1x1x8x8xf32> to vector<8x8xf32>
    %194 = vector.shape_cast %191 : vector<8x8xf32> to vector<1x1x8x8xf32>
    tpu.vector_store %arg26[%c0_88, %c7, %c0_89, %c0_90], %194 {strides = array<i32>} : memref<1x8x8x8xf32, #tpu.memory_space<vmem>>, vector<1x1x8x8xf32>,
    %cst_91 = arith.constant dense<0.000000e+00> : vector<8x4xf32>
    %195 = tpu.matmul %191, %176, %cst_91 {dimension_numbers = #tpu.dot_dimension_numbers<[1], [0], [0], [1], [0, 0, 1, 1], [], []>} : vector<8x8xf32>, vector<8x4xf32>, vector<8x4xf32> -> vector<8x4xf32>
    %196 = tpu.concatenate %41, %63, %85, %107, %129, %151, %173, %195 in 1 : vector<8x4xf32>, vector<8x4xf32>, vector<8x4xf32>, vector<8x4xf32>, vector<8x4xf32>, vector<8x4xf32>, vector<8x4xf32>, vector<8x4xf32> -> vector<8x32xf32>
    %c0_92 = arith.constant 0 : index
    %c0_93 = arith.constant 0 : index
    %197 = vector.load %arg7[%c0_92, %c0_93] : memref<32x32xf32, #tpu.memory_space<vmem>>, vector<32x32xf32>
    %cst_94 = arith.constant dense<0.000000e+00> : vector<8x32xf32>
    %198 = tpu.matmul %196, %197, %cst_94 {dimension_numbers = #tpu.dot_dimension_numbers<[1], [0], [0], [1], [0, 0, 1, 1], [], []>} : vector<8x32xf32>, vector<32x32xf32>, vector<8x32xf32> -> vector<8x32xf32>
    %c0_95 = arith.constant 0 : index
    %c0_96 = arith.constant 0 : index
    %199 = vector.load %arg8[%c0_95, %c0_96] : memref<1x32xf32, #tpu.memory_space<vmem>>, vector<1x32xf32>
    %200 = vector.broadcast %199 : vector<1x32xf32> to vector<8x32xf32>
    %201 = arith.addf %198, %200 : vector<8x32xf32>
    %202 = arith.addf %1, %201 : vector<8x32xf32>
    %c0_97 = arith.constant 0 : index
    %c0_98 = arith.constant 0 : index
    %203 = vector.load %arg19[%c0_97, %c0_98] : memref<1x32xf32, #tpu.memory_space<vmem>>, vector<1x32xf32>
    %c0_99 = arith.constant 0 : index
    %c0_100 = arith.constant 0 : index
    %204 = vector.load %arg20[%c0_99, %c0_100] : memref<1x32xf32, #tpu.memory_space<vmem>>, vector<1x32xf32>
    %cst_101 = arith.constant dense<0.000000e+00> : vector<8xf32>
    %205 = vector.multi_reduction <add>, %202, %cst_101 [1] : vector<8x32xf32> to vector<8xf32>
    %206 = vector.shape_cast %205 : vector<8xf32> to vector<8x1xf32>
    %cst_102 = arith.constant 3.200000e+01 : f32
    %207 = vector.broadcast %cst_102 : f32 to vector<8x1xf32>
    %208 = arith.divf %206, %207 : vector<8x1xf32>
    %209 = vector.broadcast %208 : vector<8x1xf32> to vector<8x32xf32>
    %210 = arith.subf %202, %209 : vector<8x32xf32>
    %211 = arith.mulf %210, %210 : vector<8x32xf32>
    %cst_103 = arith.constant dense<0.000000e+00> : vector<8xf32>
    %212 = vector.multi_reduction <add>, %211, %cst_103 [1] : vector<8x32xf32> to vector<8xf32>
    %213 = vector.shape_cast %212 : vector<8xf32> to vector<8x1xf32>
    %cst_104 = arith.constant 3.200000e+01 : f32
    %214 = vector.broadcast %cst_104 : f32 to vector<8x1xf32>
    %215 = arith.divf %213, %214 : vector<8x1xf32>
    %216 = vector.broadcast %208 : vector<8x1xf32> to vector<8x32xf32>
    %217 = arith.subf %202, %216 : vector<8x32xf32>
    %cst_105 = arith.constant 9.99999997E-7 : f32
    %218 = vector.broadcast %cst_105 : f32 to vector<8x1xf32>
    %219 = arith.addf %215, %218 : vector<8x1xf32>
    %220 = math.rsqrt %219 : vector<8x1xf32>
    %221 = vector.broadcast %220 : vector<8x1xf32> to vector<8x32xf32>
    %222 = arith.mulf %217, %221 : vector<8x32xf32>
    %223 = vector.broadcast %203 : vector<1x32xf32> to vector<8x32xf32>
    %224 = arith.mulf %223, %222 : vector<8x32xf32>
    %225 = vector.broadcast %204 : vector<1x32xf32> to vector<8x32xf32>
    %226 = arith.addf %224, %225 : vector<8x32xf32>
    %c0_106 = arith.constant 0 : index
    %c0_107 = arith.constant 0 : index
    %227 = vector.load %arg9[%c0_106, %c0_107] : memref<32x32xf32, #tpu.memory_space<vmem>>, vector<32x32xf32>
    %cst_108 = arith.constant dense<0.000000e+00> : vector<8x32xf32>
    %228 = tpu.matmul %226, %227, %cst_108 {dimension_numbers = #tpu.dot_dimension_numbers<[1], [0], [0], [1], [0, 0, 1, 1], [], []>} : vector<8x32xf32>, vector<32x32xf32>, vector<8x32xf32> -> vector<8x32xf32>
    %c0_109 = arith.constant 0 : index
    %c0_110 = arith.constant 0 : index
    %229 = vector.load %arg10[%c0_109, %c0_110] : memref<1x32xf32, #tpu.memory_space<vmem>>, vector<1x32xf32>
    %230 = vector.broadcast %229 : vector<1x32xf32> to vector<8x32xf32>
    %231 = arith.addf %228, %230 : vector<8x32xf32>
    %c0_111 = arith.constant 0 : index
    %c0_112 = arith.constant 0 : index
    %232 = vector.load %arg11[%c0_111, %c0_112] : memref<32x64xf32, #tpu.memory_space<vmem>>, vector<32x64xf32>
    %cst_113 = arith.constant dense<0.000000e+00> : vector<8x64xf32>
    %233 = tpu.matmul %3, %232, %cst_113 {dimension_numbers = #tpu.dot_dimension_numbers<[1], [0], [0], [1], [0, 0, 1, 1], [], []>} : vector<8x32xf32>, vector<32x64xf32>, vector<8x64xf32> -> vector<8x64xf32>
    %c0_114 = arith.constant 0 : index
    %c0_115 = arith.constant 0 : index
    %234 = vector.load %arg12[%c0_114, %c0_115] : memref<1x64xf32, #tpu.memory_space<vmem>>, vector<1x64xf32>
    %235 = vector.broadcast %234 : vector<1x64xf32> to vector<8x64xf32>
    %236 = arith.addf %233, %235 : vector<8x64xf32>
    %237 = vector.extract_strided_slice %236 {offsets = [0, 0], sizes = [8, 32], strides = [1, 1]} : vector<8x64xf32> to vector<8x32xf32>
    %238 = vector.extract_strided_slice %236 {offsets = [0, 32], sizes = [8, 32], strides = [1, 1]} : vector<8x64xf32> to vector<8x32xf32>
    %239 = vector.extract_strided_slice %231 {offsets = [0, 0], sizes = [8, 4], strides = [1, 1]} : vector<8x32xf32> to vector<8x4xf32>
    %240 = vector.extract_strided_slice %237 {offsets = [0, 0], sizes = [8, 4], strides = [1, 1]} : vector<8x32xf32> to vector<8x4xf32>
    %241 = vector.extract_strided_slice %238 {offsets = [0, 0], sizes = [8, 4], strides = [1, 1]} : vector<8x32xf32> to vector<8x4xf32>
    %242 = tpu.transpose %240, [1, 0] : vector<8x4xf32> -> vector<4x8xf32>
    %cst_116 = arith.constant dense<0.000000e+00> : vector<8x8xf32>
    %243 = tpu.matmul %239, %242, %cst_116 {dimension_numbers = #tpu.dot_dimension_numbers<[1], [0], [0], [1], [0, 0, 1, 1], [], []>} : vector<8x4xf32>, vector<4x8xf32>, vector<8x8xf32> -> vector<8x8xf32>
    %cst_117 = arith.constant 5.000000e-01 : f32
    %244 = vector.broadcast %cst_117 : f32 to vector<8x8xf32>
    %245 = arith.mulf %243, %244 : vector<8x8xf32>
    %cst_118 = arith.constant -1.000000e+09 : f32
    %246 = vector.broadcast %cst_118 : f32 to vector<8x8xf32>
    %247 = arith.select %11, %245, %246 : vector<8x8xi1>, vector<8x8xf32>
    %cst_119 = arith.constant dense<0xFF800000> : vector<8xf32>
    %248 = vector.multi_reduction <maximumf>, %247, %cst_119 [1] : vector<8x8xf32> to vector<8xf32>
    %249 = vector.shape_cast %248 : vector<8xf32> to vector<8x1xf32>
    %250 = vector.broadcast %249 : vector<8x1xf32> to vector<8x8xf32>
    %251 = arith.subf %247, %250 : vector<8x8xf32>
    %252 = math.exp %251 : vector<8x8xf32>
    %cst_120 = arith.constant dense<0.000000e+00> : vector<8xf32>
    %253 = vector.multi_reduction <add>, %252, %cst_120 [1] : vector<8x8xf32> to vector<8xf32>
    %254 = vector.shape_cast %253 : vector<8xf32> to vector<8x1xf32>
    %255 = vector.broadcast %254 : vector<8x1xf32> to vector<8x8xf32>
    %256 = arith.divf %252, %255 : vector<8x8xf32>
    %c0_121 = arith.constant 0 : index
    %c0_122 = arith.constant 0 : index
    %c0_123 = arith.constant 0 : index
    %c0_124 = arith.constant 0 : index
    %257 = vector.load %arg27[%c0_121, %c0_122, %c0_123, %c0_124] : memref<1x8x8x8xf32, #tpu.memory_space<vmem>>, vector<1x1x8x8xf32>
    %258 = vector.shape_cast %257 : vector<1x1x8x8xf32> to vector<8x8xf32>
    %259 = vector.shape_cast %256 : vector<8x8xf32> to vector<1x1x8x8xf32>
    tpu.vector_store %arg27[%c0_121, %c0_122, %c0_123, %c0_124], %259 {strides = array<i32>} : memref<1x8x8x8xf32, #tpu.memory_space<vmem>>, vector<1x1x8x8xf32>,
    %cst_125 = arith.constant dense<0.000000e+00> : vector<8x4xf32>
    %260 = tpu.matmul %256, %241, %cst_125 {dimension_numbers = #tpu.dot_dimension_numbers<[1], [0], [0], [1], [0, 0, 1, 1], [], []>} : vector<8x8xf32>, vector<8x4xf32>, vector<8x4xf32> -> vector<8x4xf32>
    %261 = vector.extract_strided_slice %231 {offsets = [0, 4], sizes = [8, 4], strides = [1, 1]} : vector<8x32xf32> to vector<8x4xf32>
    %262 = vector.extract_strided_slice %237 {offsets = [0, 4], sizes = [8, 4], strides = [1, 1]} : vector<8x32xf32> to vector<8x4xf32>
    %263 = vector.extract_strided_slice %238 {offsets = [0, 4], sizes = [8, 4], strides = [1, 1]} : vector<8x32xf32> to vector<8x4xf32>
    %264 = tpu.transpose %262, [1, 0] : vector<8x4xf32> -> vector<4x8xf32>
    %cst_126 = arith.constant dense<0.000000e+00> : vector<8x8xf32>
    %265 = tpu.matmul %261, %264, %cst_126 {dimension_numbers = #tpu.dot_dimension_numbers<[1], [0], [0], [1], [0, 0, 1, 1], [], []>} : vector<8x4xf32>, vector<4x8xf32>, vector<8x8xf32> -> vector<8x8xf32>
    %cst_127 = arith.constant 5.000000e-01 : f32
    %266 = vector.broadcast %cst_127 : f32 to vector<8x8xf32>
    %267 = arith.mulf %265, %266 : vector<8x8xf32>
    %cst_128 = arith.constant -1.000000e+09 : f32
    %268 = vector.broadcast %cst_128 : f32 to vector<8x8xf32>
    %269 = arith.select %11, %267, %268 : vector<8x8xi1>, vector<8x8xf32>
    %cst_129 = arith.constant dense<0xFF800000> : vector<8xf32>
    %270 = vector.multi_reduction <maximumf>, %269, %cst_129 [1] : vector<8x8xf32> to vector<8xf32>
    %271 = vector.shape_cast %270 : vector<8xf32> to vector<8x1xf32>
    %272 = vector.broadcast %271 : vector<8x1xf32> to vector<8x8xf32>
    %273 = arith.subf %269, %272 : vector<8x8xf32>
    %274 = math.exp %273 : vector<8x8xf32>
    %cst_130 = arith.constant dense<0.000000e+00> : vector<8xf32>
    %275 = vector.multi_reduction <add>, %274, %cst_130 [1] : vector<8x8xf32> to vector<8xf32>
    %276 = vector.shape_cast %275 : vector<8xf32> to vector<8x1xf32>
    %277 = vector.broadcast %276 : vector<8x1xf32> to vector<8x8xf32>
    %278 = arith.divf %274, %277 : vector<8x8xf32>
    %c0_131 = arith.constant 0 : index
    %c1_132 = arith.constant 1 : index
    %c0_133 = arith.constant 0 : index
    %c0_134 = arith.constant 0 : index
    %279 = vector.load %arg27[%c0_131, %c1_132, %c0_133, %c0_134] : memref<1x8x8x8xf32, #tpu.memory_space<vmem>>, vector<1x1x8x8xf32>
    %280 = vector.shape_cast %279 : vector<1x1x8x8xf32> to vector<8x8xf32>
    %281 = vector.shape_cast %278 : vector<8x8xf32> to vector<1x1x8x8xf32>
    tpu.vector_store %arg27[%c0_131, %c1_132, %c0_133, %c0_134], %281 {strides = array<i32>} : memref<1x8x8x8xf32, #tpu.memory_space<vmem>>, vector<1x1x8x8xf32>,
    %cst_135 = arith.constant dense<0.000000e+00> : vector<8x4xf32>
    %282 = tpu.matmul %278, %263, %cst_135 {dimension_numbers = #tpu.dot_dimension_numbers<[1], [0], [0], [1], [0, 0, 1, 1], [], []>} : vector<8x8xf32>, vector<8x4xf32>, vector<8x4xf32> -> vector<8x4xf32>
    %283 = vector.extract_strided_slice %231 {offsets = [0, 8], sizes = [8, 4], strides = [1, 1]} : vector<8x32xf32> to vector<8x4xf32>
    %284 = vector.extract_strided_slice %237 {offsets = [0, 8], sizes = [8, 4], strides = [1, 1]} : vector<8x32xf32> to vector<8x4xf32>
    %285 = vector.extract_strided_slice %238 {offsets = [0, 8], sizes = [8, 4], strides = [1, 1]} : vector<8x32xf32> to vector<8x4xf32>
    %286 = tpu.transpose %284, [1, 0] : vector<8x4xf32> -> vector<4x8xf32>
    %cst_136 = arith.constant dense<0.000000e+00> : vector<8x8xf32>
    %287 = tpu.matmul %283, %286, %cst_136 {dimension_numbers = #tpu.dot_dimension_numbers<[1], [0], [0], [1], [0, 0, 1, 1], [], []>} : vector<8x4xf32>, vector<4x8xf32>, vector<8x8xf32> -> vector<8x8xf32>
    %cst_137 = arith.constant 5.000000e-01 : f32
    %288 = vector.broadcast %cst_137 : f32 to vector<8x8xf32>
    %289 = arith.mulf %287, %288 : vector<8x8xf32>
    %cst_138 = arith.constant -1.000000e+09 : f32
    %290 = vector.broadcast %cst_138 : f32 to vector<8x8xf32>
    %291 = arith.select %11, %289, %290 : vector<8x8xi1>, vector<8x8xf32>
    %cst_139 = arith.constant dense<0xFF800000> : vector<8xf32>
    %292 = vector.multi_reduction <maximumf>, %291, %cst_139 [1] : vector<8x8xf32> to vector<8xf32>
    %293 = vector.shape_cast %292 : vector<8xf32> to vector<8x1xf32>
    %294 = vector.broadcast %293 : vector<8x1xf32> to vector<8x8xf32>
    %295 = arith.subf %291, %294 : vector<8x8xf32>
    %296 = math.exp %295 : vector<8x8xf32>
    %cst_140 = arith.constant dense<0.000000e+00> : vector<8xf32>
    %297 = vector.multi_reduction <add>, %296, %cst_140 [1] : vector<8x8xf32> to vector<8xf32>
    %298 = vector.shape_cast %297 : vector<8xf32> to vector<8x1xf32>
    %299 = vector.broadcast %298 : vector<8x1xf32> to vector<8x8xf32>
    %300 = arith.divf %296, %299 : vector<8x8xf32>
    %c0_141 = arith.constant 0 : index
    %c2_142 = arith.constant 2 : index
    %c0_143 = arith.constant 0 : index
    %c0_144 = arith.constant 0 : index
    %301 = vector.load %arg27[%c0_141, %c2_142, %c0_143, %c0_144] : memref<1x8x8x8xf32, #tpu.memory_space<vmem>>, vector<1x1x8x8xf32>
    %302 = vector.shape_cast %301 : vector<1x1x8x8xf32> to vector<8x8xf32>
    %303 = vector.shape_cast %300 : vector<8x8xf32> to vector<1x1x8x8xf32>
    tpu.vector_store %arg27[%c0_141, %c2_142, %c0_143, %c0_144], %303 {strides = array<i32>} : memref<1x8x8x8xf32, #tpu.memory_space<vmem>>, vector<1x1x8x8xf32>,
    %cst_145 = arith.constant dense<0.000000e+00> : vector<8x4xf32>
    %304 = tpu.matmul %300, %285, %cst_145 {dimension_numbers = #tpu.dot_dimension_numbers<[1], [0], [0], [1], [0, 0, 1, 1], [], []>} : vector<8x8xf32>, vector<8x4xf32>, vector<8x4xf32> -> vector<8x4xf32>
    %305 = vector.extract_strided_slice %231 {offsets = [0, 12], sizes = [8, 4], strides = [1, 1]} : vector<8x32xf32> to vector<8x4xf32>
    %306 = vector.extract_strided_slice %237 {offsets = [0, 12], sizes = [8, 4], strides = [1, 1]} : vector<8x32xf32> to vector<8x4xf32>
    %307 = vector.extract_strided_slice %238 {offsets = [0, 12], sizes = [8, 4], strides = [1, 1]} : vector<8x32xf32> to vector<8x4xf32>
    %308 = tpu.transpose %306, [1, 0] : vector<8x4xf32> -> vector<4x8xf32>
    %cst_146 = arith.constant dense<0.000000e+00> : vector<8x8xf32>
    %309 = tpu.matmul %305, %308, %cst_146 {dimension_numbers = #tpu.dot_dimension_numbers<[1], [0], [0], [1], [0, 0, 1, 1], [], []>} : vector<8x4xf32>, vector<4x8xf32>, vector<8x8xf32> -> vector<8x8xf32>
    %cst_147 = arith.constant 5.000000e-01 : f32
    %310 = vector.broadcast %cst_147 : f32 to vector<8x8xf32>
    %311 = arith.mulf %309, %310 : vector<8x8xf32>
    %cst_148 = arith.constant -1.000000e+09 : f32
    %312 = vector.broadcast %cst_148 : f32 to vector<8x8xf32>
    %313 = arith.select %11, %311, %312 : vector<8x8xi1>, vector<8x8xf32>
    %cst_149 = arith.constant dense<0xFF800000> : vector<8xf32>
    %314 = vector.multi_reduction <maximumf>, %313, %cst_149 [1] : vector<8x8xf32> to vector<8xf32>
    %315 = vector.shape_cast %314 : vector<8xf32> to vector<8x1xf32>
    %316 = vector.broadcast %315 : vector<8x1xf32> to vector<8x8xf32>
    %317 = arith.subf %313, %316 : vector<8x8xf32>
    %318 = math.exp %317 : vector<8x8xf32>
    %cst_150 = arith.constant dense<0.000000e+00> : vector<8xf32>
    %319 = vector.multi_reduction <add>, %318, %cst_150 [1] : vector<8x8xf32> to vector<8xf32>
    %320 = vector.shape_cast %319 : vector<8xf32> to vector<8x1xf32>
    %321 = vector.broadcast %320 : vector<8x1xf32> to vector<8x8xf32>
    %322 = arith.divf %318, %321 : vector<8x8xf32>
    %c0_151 = arith.constant 0 : index
    %c3_152 = arith.constant 3 : index
    %c0_153 = arith.constant 0 : index
    %c0_154 = arith.constant 0 : index
    %323 = vector.load %arg27[%c0_151, %c3_152, %c0_153, %c0_154] : memref<1x8x8x8xf32, #tpu.memory_space<vmem>>, vector<1x1x8x8xf32>
    %324 = vector.shape_cast %323 : vector<1x1x8x8xf32> to vector<8x8xf32>
    %325 = vector.shape_cast %322 : vector<8x8xf32> to vector<1x1x8x8xf32>
    tpu.vector_store %arg27[%c0_151, %c3_152, %c0_153, %c0_154], %325 {strides = array<i32>} : memref<1x8x8x8xf32, #tpu.memory_space<vmem>>, vector<1x1x8x8xf32>,
    %cst_155 = arith.constant dense<0.000000e+00> : vector<8x4xf32>
    %326 = tpu.matmul %322, %307, %cst_155 {dimension_numbers = #tpu.dot_dimension_numbers<[1], [0], [0], [1], [0, 0, 1, 1], [], []>} : vector<8x8xf32>, vector<8x4xf32>, vector<8x4xf32> -> vector<8x4xf32>
    %327 = vector.extract_strided_slice %231 {offsets = [0, 16], sizes = [8, 4], strides = [1, 1]} : vector<8x32xf32> to vector<8x4xf32>
    %328 = vector.extract_strided_slice %237 {offsets = [0, 16], sizes = [8, 4], strides = [1, 1]} : vector<8x32xf32> to vector<8x4xf32>
    %329 = vector.extract_strided_slice %238 {offsets = [0, 16], sizes = [8, 4], strides = [1, 1]} : vector<8x32xf32> to vector<8x4xf32>
    %330 = tpu.transpose %328, [1, 0] : vector<8x4xf32> -> vector<4x8xf32>
    %cst_156 = arith.constant dense<0.000000e+00> : vector<8x8xf32>
    %331 = tpu.matmul %327, %330, %cst_156 {dimension_numbers = #tpu.dot_dimension_numbers<[1], [0], [0], [1], [0, 0, 1, 1], [], []>} : vector<8x4xf32>, vector<4x8xf32>, vector<8x8xf32> -> vector<8x8xf32>
    %cst_157 = arith.constant 5.000000e-01 : f32
    %332 = vector.broadcast %cst_157 : f32 to vector<8x8xf32>
    %333 = arith.mulf %331, %332 : vector<8x8xf32>
    %cst_158 = arith.constant -1.000000e+09 : f32
    %334 = vector.broadcast %cst_158 : f32 to vector<8x8xf32>
    %335 = arith.select %11, %333, %334 : vector<8x8xi1>, vector<8x8xf32>
    %cst_159 = arith.constant dense<0xFF800000> : vector<8xf32>
    %336 = vector.multi_reduction <maximumf>, %335, %cst_159 [1] : vector<8x8xf32> to vector<8xf32>
    %337 = vector.shape_cast %336 : vector<8xf32> to vector<8x1xf32>
    %338 = vector.broadcast %337 : vector<8x1xf32> to vector<8x8xf32>
    %339 = arith.subf %335, %338 : vector<8x8xf32>
    %340 = math.exp %339 : vector<8x8xf32>
    %cst_160 = arith.constant dense<0.000000e+00> : vector<8xf32>
    %341 = vector.multi_reduction <add>, %340, %cst_160 [1] : vector<8x8xf32> to vector<8xf32>
    %342 = vector.shape_cast %341 : vector<8xf32> to vector<8x1xf32>
    %343 = vector.broadcast %342 : vector<8x1xf32> to vector<8x8xf32>
    %344 = arith.divf %340, %343 : vector<8x8xf32>
    %c0_161 = arith.constant 0 : index
    %c4_162 = arith.constant 4 : index
    %c0_163 = arith.constant 0 : index
    %c0_164 = arith.constant 0 : index
    %345 = vector.load %arg27[%c0_161, %c4_162, %c0_163, %c0_164] : memref<1x8x8x8xf32, #tpu.memory_space<vmem>>, vector<1x1x8x8xf32>
    %346 = vector.shape_cast %345 : vector<1x1x8x8xf32> to vector<8x8xf32>
    %347 = vector.shape_cast %344 : vector<8x8xf32> to vector<1x1x8x8xf32>
    tpu.vector_store %arg27[%c0_161, %c4_162, %c0_163, %c0_164], %347 {strides = array<i32>} : memref<1x8x8x8xf32, #tpu.memory_space<vmem>>, vector<1x1x8x8xf32>,
    %cst_165 = arith.constant dense<0.000000e+00> : vector<8x4xf32>
    %348 = tpu.matmul %344, %329, %cst_165 {dimension_numbers = #tpu.dot_dimension_numbers<[1], [0], [0], [1], [0, 0, 1, 1], [], []>} : vector<8x8xf32>, vector<8x4xf32>, vector<8x4xf32> -> vector<8x4xf32>
    %349 = vector.extract_strided_slice %231 {offsets = [0, 20], sizes = [8, 4], strides = [1, 1]} : vector<8x32xf32> to vector<8x4xf32>
    %350 = vector.extract_strided_slice %237 {offsets = [0, 20], sizes = [8, 4], strides = [1, 1]} : vector<8x32xf32> to vector<8x4xf32>
    %351 = vector.extract_strided_slice %238 {offsets = [0, 20], sizes = [8, 4], strides = [1, 1]} : vector<8x32xf32> to vector<8x4xf32>
    %352 = tpu.transpose %350, [1, 0] : vector<8x4xf32> -> vector<4x8xf32>
    %cst_166 = arith.constant dense<0.000000e+00> : vector<8x8xf32>
    %353 = tpu.matmul %349, %352, %cst_166 {dimension_numbers = #tpu.dot_dimension_numbers<[1], [0], [0], [1], [0, 0, 1, 1], [], []>} : vector<8x4xf32>, vector<4x8xf32>, vector<8x8xf32> -> vector<8x8xf32>
    %cst_167 = arith.constant 5.000000e-01 : f32
    %354 = vector.broadcast %cst_167 : f32 to vector<8x8xf32>
    %355 = arith.mulf %353, %354 : vector<8x8xf32>
    %cst_168 = arith.constant -1.000000e+09 : f32
    %356 = vector.broadcast %cst_168 : f32 to vector<8x8xf32>
    %357 = arith.select %11, %355, %356 : vector<8x8xi1>, vector<8x8xf32>
    %cst_169 = arith.constant dense<0xFF800000> : vector<8xf32>
    %358 = vector.multi_reduction <maximumf>, %357, %cst_169 [1] : vector<8x8xf32> to vector<8xf32>
    %359 = vector.shape_cast %358 : vector<8xf32> to vector<8x1xf32>
    %360 = vector.broadcast %359 : vector<8x1xf32> to vector<8x8xf32>
    %361 = arith.subf %357, %360 : vector<8x8xf32>
    %362 = math.exp %361 : vector<8x8xf32>
    %cst_170 = arith.constant dense<0.000000e+00> : vector<8xf32>
    %363 = vector.multi_reduction <add>, %362, %cst_170 [1] : vector<8x8xf32> to vector<8xf32>
    %364 = vector.shape_cast %363 : vector<8xf32> to vector<8x1xf32>
    %365 = vector.broadcast %364 : vector<8x1xf32> to vector<8x8xf32>
    %366 = arith.divf %362, %365 : vector<8x8xf32>
    %c0_171 = arith.constant 0 : index
    %c5_172 = arith.constant 5 : index
    %c0_173 = arith.constant 0 : index
    %c0_174 = arith.constant 0 : index
    %367 = vector.load %arg27[%c0_171, %c5_172, %c0_173, %c0_174] : memref<1x8x8x8xf32, #tpu.memory_space<vmem>>, vector<1x1x8x8xf32>
    %368 = vector.shape_cast %367 : vector<1x1x8x8xf32> to vector<8x8xf32>
    %369 = vector.shape_cast %366 : vector<8x8xf32> to vector<1x1x8x8xf32>
    tpu.vector_store %arg27[%c0_171, %c5_172, %c0_173, %c0_174], %369 {strides = array<i32>} : memref<1x8x8x8xf32, #tpu.memory_space<vmem>>, vector<1x1x8x8xf32>,
    %cst_175 = arith.constant dense<0.000000e+00> : vector<8x4xf32>
    %370 = tpu.matmul %366, %351, %cst_175 {dimension_numbers = #tpu.dot_dimension_numbers<[1], [0], [0], [1], [0, 0, 1, 1], [], []>} : vector<8x8xf32>, vector<8x4xf32>, vector<8x4xf32> -> vector<8x4xf32>
    %371 = vector.extract_strided_slice %231 {offsets = [0, 24], sizes = [8, 4], strides = [1, 1]} : vector<8x32xf32> to vector<8x4xf32>
    %372 = vector.extract_strided_slice %237 {offsets = [0, 24], sizes = [8, 4], strides = [1, 1]} : vector<8x32xf32> to vector<8x4xf32>
    %373 = vector.extract_strided_slice %238 {offsets = [0, 24], sizes = [8, 4], strides = [1, 1]} : vector<8x32xf32> to vector<8x4xf32>
    %374 = tpu.transpose %372, [1, 0] : vector<8x4xf32> -> vector<4x8xf32>
    %cst_176 = arith.constant dense<0.000000e+00> : vector<8x8xf32>
    %375 = tpu.matmul %371, %374, %cst_176 {dimension_numbers = #tpu.dot_dimension_numbers<[1], [0], [0], [1], [0, 0, 1, 1], [], []>} : vector<8x4xf32>, vector<4x8xf32>, vector<8x8xf32> -> vector<8x8xf32>
    %cst_177 = arith.constant 5.000000e-01 : f32
    %376 = vector.broadcast %cst_177 : f32 to vector<8x8xf32>
    %377 = arith.mulf %375, %376 : vector<8x8xf32>
    %cst_178 = arith.constant -1.000000e+09 : f32
    %378 = vector.broadcast %cst_178 : f32 to vector<8x8xf32>
    %379 = arith.select %11, %377, %378 : vector<8x8xi1>, vector<8x8xf32>
    %cst_179 = arith.constant dense<0xFF800000> : vector<8xf32>
    %380 = vector.multi_reduction <maximumf>, %379, %cst_179 [1] : vector<8x8xf32> to vector<8xf32>
    %381 = vector.shape_cast %380 : vector<8xf32> to vector<8x1xf32>
    %382 = vector.broadcast %381 : vector<8x1xf32> to vector<8x8xf32>
    %383 = arith.subf %379, %382 : vector<8x8xf32>
    %384 = math.exp %383 : vector<8x8xf32>
    %cst_180 = arith.constant dense<0.000000e+00> : vector<8xf32>
    %385 = vector.multi_reduction <add>, %384, %cst_180 [1] : vector<8x8xf32> to vector<8xf32>
    %386 = vector.shape_cast %385 : vector<8xf32> to vector<8x1xf32>
    %387 = vector.broadcast %386 : vector<8x1xf32> to vector<8x8xf32>
    %388 = arith.divf %384, %387 : vector<8x8xf32>
    %c0_181 = arith.constant 0 : index
    %c6_182 = arith.constant 6 : index
    %c0_183 = arith.constant 0 : index
    %c0_184 = arith.constant 0 : index
    %389 = vector.load %arg27[%c0_181, %c6_182, %c0_183, %c0_184] : memref<1x8x8x8xf32, #tpu.memory_space<vmem>>, vector<1x1x8x8xf32>
    %390 = vector.shape_cast %389 : vector<1x1x8x8xf32> to vector<8x8xf32>
    %391 = vector.shape_cast %388 : vector<8x8xf32> to vector<1x1x8x8xf32>
    tpu.vector_store %arg27[%c0_181, %c6_182, %c0_183, %c0_184], %391 {strides = array<i32>} : memref<1x8x8x8xf32, #tpu.memory_space<vmem>>, vector<1x1x8x8xf32>,
    %cst_185 = arith.constant dense<0.000000e+00> : vector<8x4xf32>
    %392 = tpu.matmul %388, %373, %cst_185 {dimension_numbers = #tpu.dot_dimension_numbers<[1], [0], [0], [1], [0, 0, 1, 1], [], []>} : vector<8x8xf32>, vector<8x4xf32>, vector<8x4xf32> -> vector<8x4xf32>
    %393 = vector.extract_strided_slice %231 {offsets = [0, 28], sizes = [8, 4], strides = [1, 1]} : vector<8x32xf32> to vector<8x4xf32>
    %394 = vector.extract_strided_slice %237 {offsets = [0, 28], sizes = [8, 4], strides = [1, 1]} : vector<8x32xf32> to vector<8x4xf32>
    %395 = vector.extract_strided_slice %238 {offsets = [0, 28], sizes = [8, 4], strides = [1, 1]} : vector<8x32xf32> to vector<8x4xf32>
    %396 = tpu.transpose %394, [1, 0] : vector<8x4xf32> -> vector<4x8xf32>
    %cst_186 = arith.constant dense<0.000000e+00> : vector<8x8xf32>
    %397 = tpu.matmul %393, %396, %cst_186 {dimension_numbers = #tpu.dot_dimension_numbers<[1], [0], [0], [1], [0, 0, 1, 1], [], []>} : vector<8x4xf32>, vector<4x8xf32>, vector<8x8xf32> -> vector<8x8xf32>
    %cst_187 = arith.constant 5.000000e-01 : f32
    %398 = vector.broadcast %cst_187 : f32 to vector<8x8xf32>
    %399 = arith.mulf %397, %398 : vector<8x8xf32>
    %cst_188 = arith.constant -1.000000e+09 : f32
    %400 = vector.broadcast %cst_188 : f32 to vector<8x8xf32>
    %401 = arith.select %11, %399, %400 : vector<8x8xi1>, vector<8x8xf32>
    %cst_189 = arith.constant dense<0xFF800000> : vector<8xf32>
    %402 = vector.multi_reduction <maximumf>, %401, %cst_189 [1] : vector<8x8xf32> to vector<8xf32>
    %403 = vector.shape_cast %402 : vector<8xf32> to vector<8x1xf32>
    %404 = vector.broadcast %403 : vector<8x1xf32> to vector<8x8xf32>
    %405 = arith.subf %401, %404 : vector<8x8xf32>
    %406 = math.exp %405 : vector<8x8xf32>
    %cst_190 = arith.constant dense<0.000000e+00> : vector<8xf32>
    %407 = vector.multi_reduction <add>, %406, %cst_190 [1] : vector<8x8xf32> to vector<8xf32>
    %408 = vector.shape_cast %407 : vector<8xf32> to vector<8x1xf32>
    %409 = vector.broadcast %408 : vector<8x1xf32> to vector<8x8xf32>
    %410 = arith.divf %406, %409 : vector<8x8xf32>
    %c0_191 = arith.constant 0 : index
    %c7_192 = arith.constant 7 : index
    %c0_193 = arith.constant 0 : index
    %c0_194 = arith.constant 0 : index
    %411 = vector.load %arg27[%c0_191, %c7_192, %c0_193, %c0_194] : memref<1x8x8x8xf32, #tpu.memory_space<vmem>>, vector<1x1x8x8xf32>
    %412 = vector.shape_cast %411 : vector<1x1x8x8xf32> to vector<8x8xf32>
    %413 = vector.shape_cast %410 : vector<8x8xf32> to vector<1x1x8x8xf32>
    tpu.vector_store %arg27[%c0_191, %c7_192, %c0_193, %c0_194], %413 {strides = array<i32>} : memref<1x8x8x8xf32, #tpu.memory_space<vmem>>, vector<1x1x8x8xf32>,
    %cst_195 = arith.constant dense<0.000000e+00> : vector<8x4xf32>
    %414 = tpu.matmul %410, %395, %cst_195 {dimension_numbers = #tpu.dot_dimension_numbers<[1], [0], [0], [1], [0, 0, 1, 1], [], []>} : vector<8x8xf32>, vector<8x4xf32>, vector<8x4xf32> -> vector<8x4xf32>
    %415 = tpu.concatenate %260, %282, %304, %326, %348, %370, %392, %414 in 1 : vector<8x4xf32>, vector<8x4xf32>, vector<8x4xf32>, vector<8x4xf32>, vector<8x4xf32>, vector<8x4xf32>, vector<8x4xf32>, vector<8x4xf32> -> vector<8x32xf32>
    %c0_196 = arith.constant 0 : index
    %c0_197 = arith.constant 0 : index
    %416 = vector.load %arg13[%c0_196, %c0_197] : memref<32x32xf32, #tpu.memory_space<vmem>>, vector<32x32xf32>
    %cst_198 = arith.constant dense<0.000000e+00> : vector<8x32xf32>
    %417 = tpu.matmul %415, %416, %cst_198 {dimension_numbers = #tpu.dot_dimension_numbers<[1], [0], [0], [1], [0, 0, 1, 1], [], []>} : vector<8x32xf32>, vector<32x32xf32>, vector<8x32xf32> -> vector<8x32xf32>
    %c0_199 = arith.constant 0 : index
    %c0_200 = arith.constant 0 : index
    %418 = vector.load %arg14[%c0_199, %c0_200] : memref<1x32xf32, #tpu.memory_space<vmem>>, vector<1x32xf32>
    %419 = vector.broadcast %418 : vector<1x32xf32> to vector<8x32xf32>
    %420 = arith.addf %417, %419 : vector<8x32xf32>
    %421 = arith.addf %226, %420 : vector<8x32xf32>
    %c0_201 = arith.constant 0 : index
    %c0_202 = arith.constant 0 : index
    %422 = vector.load %arg21[%c0_201, %c0_202] : memref<1x32xf32, #tpu.memory_space<vmem>>, vector<1x32xf32>
    %c0_203 = arith.constant 0 : index
    %c0_204 = arith.constant 0 : index
    %423 = vector.load %arg22[%c0_203, %c0_204] : memref<1x32xf32, #tpu.memory_space<vmem>>, vector<1x32xf32>
    %cst_205 = arith.constant dense<0.000000e+00> : vector<8xf32>
    %424 = vector.multi_reduction <add>, %421, %cst_205 [1] : vector<8x32xf32> to vector<8xf32>
    %425 = vector.shape_cast %424 : vector<8xf32> to vector<8x1xf32>
    %cst_206 = arith.constant 3.200000e+01 : f32
    %426 = vector.broadcast %cst_206 : f32 to vector<8x1xf32>
    %427 = arith.divf %425, %426 : vector<8x1xf32>
    %428 = vector.broadcast %427 : vector<8x1xf32> to vector<8x32xf32>
    %429 = arith.subf %421, %428 : vector<8x32xf32>
    %430 = arith.mulf %429, %429 : vector<8x32xf32>
    %cst_207 = arith.constant dense<0.000000e+00> : vector<8xf32>
    %431 = vector.multi_reduction <add>, %430, %cst_207 [1] : vector<8x32xf32> to vector<8xf32>
    %432 = vector.shape_cast %431 : vector<8xf32> to vector<8x1xf32>
    %cst_208 = arith.constant 3.200000e+01 : f32
    %433 = vector.broadcast %cst_208 : f32 to vector<8x1xf32>
    %434 = arith.divf %432, %433 : vector<8x1xf32>
    %435 = vector.broadcast %427 : vector<8x1xf32> to vector<8x32xf32>
    %436 = arith.subf %421, %435 : vector<8x32xf32>
    %cst_209 = arith.constant 9.99999997E-7 : f32
    %437 = vector.broadcast %cst_209 : f32 to vector<8x1xf32>
    %438 = arith.addf %434, %437 : vector<8x1xf32>
    %439 = math.rsqrt %438 : vector<8x1xf32>
    %440 = vector.broadcast %439 : vector<8x1xf32> to vector<8x32xf32>
    %441 = arith.mulf %436, %440 : vector<8x32xf32>
    %442 = vector.broadcast %422 : vector<1x32xf32> to vector<8x32xf32>
    %443 = arith.mulf %442, %441 : vector<8x32xf32>
    %444 = vector.broadcast %423 : vector<1x32xf32> to vector<8x32xf32>
    %445 = arith.addf %443, %444 : vector<8x32xf32>
    %c0_210 = arith.constant 0 : index
    %c0_211 = arith.constant 0 : index
    %446 = vector.load %arg15[%c0_210, %c0_211] : memref<32x64xf32, #tpu.memory_space<vmem>>, vector<32x64xf32>
    %cst_212 = arith.constant dense<0.000000e+00> : vector<8x64xf32>
    %447 = tpu.matmul %445, %446, %cst_212 {dimension_numbers = #tpu.dot_dimension_numbers<[1], [0], [0], [1], [0, 0, 1, 1], [], []>} : vector<8x32xf32>, vector<32x64xf32>, vector<8x64xf32> -> vector<8x64xf32>
    %c0_213 = arith.constant 0 : index
    %c0_214 = arith.constant 0 : index
    %448 = vector.load %arg16[%c0_213, %c0_214] : memref<1x64xf32, #tpu.memory_space<vmem>>, vector<1x64xf32>
    %449 = vector.broadcast %448 : vector<1x64xf32> to vector<8x64xf32>
    %450 = arith.addf %447, %449 : vector<8x64xf32>
    %cst_215 = arith.constant 0.000000e+00 : f32
    %451 = vector.broadcast %cst_215 : f32 to vector<8x64xf32>
    %452 = arith.maximumf %450, %451 : vector<8x64xf32>
    %c0_216 = arith.constant 0 : index
    %c0_217 = arith.constant 0 : index
    %453 = vector.load %arg17[%c0_216, %c0_217] : memref<64x32xf32, #tpu.memory_space<vmem>>, vector<64x32xf32>
    %cst_218 = arith.constant dense<0.000000e+00> : vector<8x32xf32>
    %454 = tpu.matmul %452, %453, %cst_218 {dimension_numbers = #tpu.dot_dimension_numbers<[1], [0], [0], [1], [0, 0, 1, 1], [], []>} : vector<8x64xf32>, vector<64x32xf32>, vector<8x32xf32> -> vector<8x32xf32>
    %c0_219 = arith.constant 0 : index
    %c0_220 = arith.constant 0 : index
    %455 = vector.load %arg18[%c0_219, %c0_220] : memref<1x32xf32, #tpu.memory_space<vmem>>, vector<1x32xf32>
    %456 = vector.broadcast %455 : vector<1x32xf32> to vector<8x32xf32>
    %457 = arith.addf %454, %456 : vector<8x32xf32>
    %458 = arith.addf %445, %457 : vector<8x32xf32>
    %c0_221 = arith.constant 0 : index
    %c0_222 = arith.constant 0 : index
    %459 = vector.load %arg23[%c0_221, %c0_222] : memref<1x32xf32, #tpu.memory_space<vmem>>, vector<1x32xf32>
    %c0_223 = arith.constant 0 : index
    %c0_224 = arith.constant 0 : index
    %460 = vector.load %arg24[%c0_223, %c0_224] : memref<1x32xf32, #tpu.memory_space<vmem>>, vector<1x32xf32>
    %cst_225 = arith.constant dense<0.000000e+00> : vector<8xf32>
    %461 = vector.multi_reduction <add>, %458, %cst_225 [1] : vector<8x32xf32> to vector<8xf32>
    %462 = vector.shape_cast %461 : vector<8xf32> to vector<8x1xf32>
    %cst_226 = arith.constant 3.200000e+01 : f32
    %463 = vector.broadcast %cst_226 : f32 to vector<8x1xf32>
    %464 = arith.divf %462, %463 : vector<8x1xf32>
    %465 = vector.broadcast %464 : vector<8x1xf32> to vector<8x32xf32>
    %466 = arith.subf %458, %465 : vector<8x32xf32>
    %467 = arith.mulf %466, %466 : vector<8x32xf32>
    %cst_227 = arith.constant dense<0.000000e+00> : vector<8xf32>
    %468 = vector.multi_reduction <add>, %467, %cst_227 [1] : vector<8x32xf32> to vector<8xf32>
    %469 = vector.shape_cast %468 : vector<8xf32> to vector<8x1xf32>
    %cst_228 = arith.constant 3.200000e+01 : f32
    %470 = vector.broadcast %cst_228 : f32 to vector<8x1xf32>
    %471 = arith.divf %469, %470 : vector<8x1xf32>
    %472 = vector.broadcast %464 : vector<8x1xf32> to vector<8x32xf32>
    %473 = arith.subf %458, %472 : vector<8x32xf32>
    %cst_229 = arith.constant 9.99999997E-7 : f32
    %474 = vector.broadcast %cst_229 : f32 to vector<8x1xf32>
    %475 = arith.addf %471, %474 : vector<8x1xf32>
    %476 = math.rsqrt %475 : vector<8x1xf32>
    %477 = vector.broadcast %476 : vector<8x1xf32> to vector<8x32xf32>
    %478 = arith.mulf %473, %477 : vector<8x32xf32>
    %479 = vector.broadcast %459 : vector<1x32xf32> to vector<8x32xf32>
    %480 = arith.mulf %479, %478 : vector<8x32xf32>
    %481 = vector.broadcast %460 : vector<1x32xf32> to vector<8x32xf32>
    %482 = arith.addf %480, %481 : vector<8x32xf32>
    %c0_230 = arith.constant 0 : index
    %c0_231 = arith.constant 0 : index
    %c0_232 = arith.constant 0 : index
    %483 = vector.load %arg25[%c0_230, %c0_231, %c0_232] : memref<1x8x32xf32, #tpu.memory_space<vmem>>, vector<1x8x32xf32>
    %484 = vector.shape_cast %483 : vector<1x8x32xf32> to vector<8x32xf32>
    %485 = vector.shape_cast %482 : vector<8x32xf32> to vector<1x8x32xf32>
    tpu.vector_store %arg25[%c0_230, %c0_231, %c0_232], %485 {strides = array<i32>} : memref<1x8x32xf32, #tpu.memory_space<vmem>>, vector<1x8x32xf32>,
    return
  }
  func.func @transform_0(%arg0: i32) -> (i32, i32, i32) {
    %c0_i32 = arith.constant 0 : i32
    %c0_i32_0 = arith.constant 0 : i32
    %c0_i32_1 = arith.constant 0 : i32
    return %arg0, %c0_i32, %c0_i32_0 : i32, i32, i32
  }
  func.func @transform_1(%arg0: i32) -> (i32, i32, i32) {
    %c0_i32 = arith.constant 0 : i32
    %c0_i32_0 = arith.constant 0 : i32
    %c0_i32_1 = arith.constant 0 : i32
    return %arg0, %c0_i32, %c0_i32_0 : i32, i32, i32
  }
  func.func @transform_2(%arg0: i32) -> (i32, i32, i32, i32) {
    %c0_i32 = arith.constant 0 : i32
    %c0_i32_0 = arith.constant 0 : i32
    %c0_i32_1 = arith.constant 0 : i32
    %c0_i32_2 = arith.constant 0 : i32
    return %arg0, %c0_i32, %c0_i32_0, %c0_i32_1 : i32, i32, i32, i32
  }
  func.func @transform_3(%arg0: i32) -> (i32, i32, i32, i32) {
    %c0_i32 = arith.constant 0 : i32
    %c0_i32_0 = arith.constant 0 : i32
    %c0_i32_1 = arith.constant 0 : i32
    %c0_i32_2 = arith.constant 0 : i32
    return %arg0, %c0_i32, %c0_i32_0, %c0_i32_1 : i32, i32, i32, i32
  }
  func.func @transform_4(%arg0: i32) -> (i32, i32) {
    %c0_i32 = arith.constant 0 : i32
    %c0_i32_0 = arith.constant 0 : i32
    %c0_i32_1 = arith.constant 0 : i32
    return %c0_i32, %c0_i32_0 : i32, i32
  }
  func.func @transform_5(%arg0: i32) -> (i32, i32) {
    %c0_i32 = arith.constant 0 : i32
    %c0_i32_0 = arith.constant 0 : i32
    %c0_i32_1 = arith.constant 0 : i32
    return %c0_i32, %c0_i32_0 : i32, i32
  }
  func.func @transform_6(%arg0: i32) -> (i32, i32) {
    %c0_i32 = arith.constant 0 : i32
    %c0_i32_0 = arith.constant 0 : i32
    %c0_i32_1 = arith.constant 0 : i32
    return %c0_i32, %c0_i32_0 : i32, i32
  }
  func.func @transform_7(%arg0: i32) -> (i32, i32) {
    %c0_i32 = arith.constant 0 : i32
    %c0_i32_0 = arith.constant 0 : i32
    %c0_i32_1 = arith.constant 0 : i32
    return %c0_i32, %c0_i32_0 : i32, i32
  }
  func.func @transform_8(%arg0: i32) -> (i32, i32) {
    %c0_i32 = arith.constant 0 : i32
    %c0_i32_0 = arith.constant 0 : i32
    %c0_i32_1 = arith.constant 0 : i32
    return %c0_i32, %c0_i32_0 : i32, i32
  }
  func.func @transform_9(%arg0: i32) -> (i32, i32) {
    %c0_i32 = arith.constant 0 : i32
    %c0_i32_0 = arith.constant 0 : i32
    %c0_i32_1 = arith.constant 0 : i32
    return %c0_i32, %c0_i32_0 : i32, i32
  }
  func.func @transform_10(%arg0: i32) -> (i32, i32) {
    %c0_i32 = arith.constant 0 : i32
    %c0_i32_0 = arith.constant 0 : i32
    %c0_i32_1 = arith.constant 0 : i32
    return %c0_i32, %c0_i32_0 : i32, i32
  }
  func.func @transform_11(%arg0: i32) -> (i32, i32) {
    %c0_i32 = arith.constant 0 : i32
    %c0_i32_0 = arith.constant 0 : i32
    %c0_i32_1 = arith.constant 0 : i32
    return %c0_i32, %c0_i32_0 : i32, i32
  }
  func.func @transform_12(%arg0: i32) -> (i32, i32) {
    %c0_i32 = arith.constant 0 : i32
    %c0_i32_0 = arith.constant 0 : i32
    %c0_i32_1 = arith.constant 0 : i32
    return %c0_i32, %c0_i32_0 : i32, i32
  }
  func.func @transform_13(%arg0: i32) -> (i32, i32) {
    %c0_i32 = arith.constant 0 : i32
    %c0_i32_0 = arith.constant 0 : i32
    %c0_i32_1 = arith.constant 0 : i32
    return %c0_i32, %c0_i32_0 : i32, i32
  }
  func.func @transform_14(%arg0: i32) -> (i32, i32) {
    %c0_i32 = arith.constant 0 : i32
    %c0_i32_0 = arith.constant 0 : i32
    %c0_i32_1 = arith.constant 0 : i32
    return %c0_i32, %c0_i32_0 : i32, i32
  }
  func.func @transform_15(%arg0: i32) -> (i32, i32) {
    %c0_i32 = arith.constant 0 : i32
    %c0_i32_0 = arith.constant 0 : i32
    %c0_i32_1 = arith.constant 0 : i32
    return %c0_i32, %c0_i32_0 : i32, i32
  }
  func.func @transform_16(%arg0: i32) -> (i32, i32) {
    %c0_i32 = arith.constant 0 : i32
    %c0_i32_0 = arith.constant 0 : i32
    %c0_i32_1 = arith.constant 0 : i32
    return %c0_i32, %c0_i32_0 : i32, i32
  }
  func.func @transform_17(%arg0: i32) -> (i32, i32) {
    %c0_i32 = arith.constant 0 : i32
    %c0_i32_0 = arith.constant 0 : i32
    %c0_i32_1 = arith.constant 0 : i32
    return %c0_i32, %c0_i32_0 : i32, i32
  }
  func.func @transform_18(%arg0: i32) -> (i32, i32) {
    %c0_i32 = arith.constant 0 : i32
    %c0_i32_0 = arith.constant 0 : i32
    %c0_i32_1 = arith.constant 0 : i32
    return %c0_i32, %c0_i32_0 : i32, i32
  }
  func.func @transform_19(%arg0: i32) -> (i32, i32) {
    %c0_i32 = arith.constant 0 : i32
    %c0_i32_0 = arith.constant 0 : i32
    %c0_i32_1 = arith.constant 0 : i32
    return %c0_i32, %c0_i32_0 : i32, i32
  }
  func.func @transform_20(%arg0: i32) -> (i32, i32) {
    %c0_i32 = arith.constant 0 : i32
    %c0_i32_0 = arith.constant 0 : i32
    %c0_i32_1 = arith.constant 0 : i32
    return %c0_i32, %c0_i32_0 : i32, i32
  }
  func.func @transform_21(%arg0: i32) -> (i32, i32) {
    %c0_i32 = arith.constant 0 : i32
    %c0_i32_0 = arith.constant 0 : i32
    %c0_i32_1 = arith.constant 0 : i32
    return %c0_i32, %c0_i32_0 : i32, i32
  }
  func.func @transform_22(%arg0: i32) -> (i32, i32) {
    %c0_i32 = arith.constant 0 : i32
    %c0_i32_0 = arith.constant 0 : i32
    %c0_i32_1 = arith.constant 0 : i32
    return %c0_i32, %c0_i32_0 : i32, i32
  }
  func.func @transform_23(%arg0: i32) -> (i32, i32) {
    %c0_i32 = arith.constant 0 : i32
    %c0_i32_0 = arith.constant 0 : i32
    %c0_i32_1 = arith.constant 0 : i32
    return %c0_i32, %c0_i32_0 : i32, i32
  }
  func.func @transform_24(%arg0: i32) -> (i32, i32, i32) {
    %c0_i32 = arith.constant 0 : i32
    %c0_i32_0 = arith.constant 0 : i32
    %c0_i32_1 = arith.constant 0 : i32
    return %arg0, %c0_i32, %c0_i32_0 : i32, i32, i32
  }
  func.func @transform_25(%arg0: i32) -> (i32, i32, i32, i32) {
    %c0_i32 = arith.constant 0 : i32
    %c0_i32_0 = arith.constant 0 : i32
    %c0_i32_1 = arith.constant 0 : i32
    %c0_i32_2 = arith.constant 0 : i32
    return %arg0, %c0_i32, %c0_i32_0, %c0_i32_1 : i32, i32, i32, i32
  }
  func.func @transform_26(%arg0: i32) -> (i32, i32, i32, i32) {
    %c0_i32 = arith.constant 0 : i32
    %c0_i32_0 = arith.constant 0 : i32
    %c0_i32_1 = arith.constant 0 : i32
    %c0_i32_2 = arith.constant 0 : i32
    return %arg0, %c0_i32, %c0_i32_0, %c0_i32_1 : i32, i32, i32, i32
  }
}

</mosaic_0001>

<llo_original>
// kernel: trans_decoder.1
$region0: #{trans_decoder.1}
  #allocation0 [shape = 'u32[]', space=smem, size = 0x4, offset = 0x4, fixed_abs, tag = 'smem constant byte address 0x4 - core index']
  #allocation1 [shape = 'u32[144,128]{1,0:T(1,128)}', space=vmem, size = 0x12000, scoped, tag = 'internal scratch']
  %s0 = inlined_call_operand.vmem [shape: f32[2,8,32], index: 0, kind: input, shape index: {}]
  %s1 = inlined_call_operand.vmem [shape: f32[2,8,32], index: 1, kind: input, shape index: {}]
  %s2 = inlined_call_operand.vmem [shape: f32[2,1,8,8], index: 2, kind: input, shape index: {}]
  %s3 = inlined_call_operand.vmem [shape: f32[2,1,8,8], index: 3, kind: input, shape index: {}]
  %s4 = inlined_call_operand.vmem [shape: f32[32,96], index: 4, kind: input, shape index: {}]
  %s5 = inlined_call_operand.vmem [shape: f32[1,96], index: 5, kind: input, shape index: {}]
  %s6 = inlined_call_operand.vmem [shape: f32[32,32], index: 6, kind: input, shape index: {}]
  %s7 = inlined_call_operand.vmem [shape: f32[1,32], index: 7, kind: input, shape index: {}]
  %s8 = inlined_call_operand.vmem [shape: f32[32,32], index: 8, kind: input, shape index: {}]
  %s9 = inlined_call_operand.vmem [shape: f32[1,32], index: 9, kind: input, shape index: {}]
  %s10 = inlined_call_operand.vmem [shape: f32[32,64], index: 10, kind: input, shape index: {}]
  %s11 = inlined_call_operand.vmem [shape: f32[1,64], index: 11, kind: input, shape index: {}]
  %s12 = inlined_call_operand.vmem [shape: f32[32,32], index: 12, kind: input, shape index: {}]
  %s13 = inlined_call_operand.vmem [shape: f32[1,32], index: 13, kind: input, shape index: {}]
  %s14 = inlined_call_operand.vmem [shape: f32[32,64], index: 14, kind: input, shape index: {}]
  %s15 = inlined_call_operand.vmem [shape: f32[1,64], index: 15, kind: input, shape index: {}]
  %s16 = inlined_call_operand.vmem [shape: f32[64,32], index: 16, kind: input, shape index: {}]
  %s17 = inlined_call_operand.vmem [shape: f32[1,32], index: 17, kind: input, shape index: {}]
  %s18 = inlined_call_operand.vmem [shape: f32[1,32], index: 18, kind: input, shape index: {}]
  %s19 = inlined_call_operand.vmem [shape: f32[1,32], index: 19, kind: input, shape index: {}]
  %s20 = inlined_call_operand.vmem [shape: f32[1,32], index: 20, kind: input, shape index: {}]
  %s21 = inlined_call_operand.vmem [shape: f32[1,32], index: 21, kind: input, shape index: {}]
  %s22 = inlined_call_operand.vmem [shape: f32[1,32], index: 22, kind: input, shape index: {}]
  %s23 = inlined_call_operand.vmem [shape: f32[1,32], index: 23, kind: input, shape index: {}]
  %s24 = inlined_call_operand.hbm [shape: f32[2,8,32], index: 24, kind: output, shape index: {0}]
  %s25 = inlined_call_operand.hbm [shape: f32[2,8,8,8], index: 25, kind: output, shape index: {1}]
  %s26 = inlined_call_operand.hbm [shape: f32[2,8,8,8], index: 26, kind: output, shape index: {2}]
  %27 = xla_tuple %s24, %s25, %s26
  %s28 = sld [smem:[#allocation0]]
  $region145: #{trans_decoder.1} parent=0
    _
  %s30 = ssub.s32 1, %s28
  %s31 = scalar_select 0, %s30, %s28
  $region1: #{trans_decoder.1} parent=0
    #allocation2 [shape = 'u8[8192]{0}', space=vmem, size = 0x2000, scoped, tag = 'output window, operand 0']
    #allocation3 [shape = 's32[2]{0}', space=sflag, size = 0x8, scoped, tag = 'scoped memory for trans_decoder.1']
    #allocation4 [shape = 'u8[65536]{0}', space=vmem, size = 0x10000, scoped, tag = 'output window, operand 1']
    #allocation5 [shape = 's32[2]{0}', space=sflag, size = 0x8, scoped, tag = 'scoped memory for trans_decoder.1']
    #allocation6 [shape = 'u8[65536]{0}', space=vmem, size = 0x10000, scoped, tag = 'output window, operand 2']
    %32 = vsyncpa [#allocation3], 0
    %s33 = scalar_lea.sflag [#allocation3], 1
    %34 = vsyncpa %s33, 0
    %35 = vsyncpa [#allocation5], 0
    %s36 = scalar_lea.sflag [#allocation5], 1
    %37 = vsyncpa %s36, 0
    loop: start=0, step=1, limit=4
    $region2: #{trans_decoder.1} parent=1 // loop_pre_header
      _
    $region3: #{trans_decoder.1} parent=1 // loop_header
      %s39 = sphi 0, %s43
      %p40 = scmp.ge.s32.totalorder %s39, 4
      %s49 = sphi 0, %s51
      %s52 = sphi 0, %s49
      %s53 = sphi 0, %s52
      %s69 = sphi 0, %s53
      %s75 = sphi 0, %s77
      %s78 = sphi 0, %s75
      %s79 = sphi 0, %s78
      %s95 = sphi 0, %s79
      %s101 = sphi 0, %s103
      %s104 = sphi 0, %s101
      %s105 = sphi 0, %s104
      %s121 = sphi 0, %s105
      %s127 = sphi 0, %s129
      %s130 = sphi 0, %s127
      %s131 = sphi 0, %s130
      %s147 = sphi 0, %s131
      %s151 = sphi 0, %s151
      %s153 = sphi 0, %s151
      %s154 = sphi 0, %s153
      %s168 = sphi 0, %s154
      %s172 = sphi 0, %s172
      %s174 = sphi 0, %s172
      %s175 = sphi 0, %s174
      %s189 = sphi 0, %s175
      %s193 = sphi 0, %s193
      %s195 = sphi 0, %s193
      %s196 = sphi 0, %s195
      %s210 = sphi 0, %s196
      %s214 = sphi 0, %s214
      %s216 = sphi 0, %s214
      %s217 = sphi 0, %s216
      %s231 = sphi 0, %s217
      %s235 = sphi 0, %s235
      %s237 = sphi 0, %s235
      %s238 = sphi 0, %s237
      %s252 = sphi 0, %s238
      %s256 = sphi 0, %s256
      %s258 = sphi 0, %s256
      %s259 = sphi 0, %s258
      %s273 = sphi 0, %s259
      %s277 = sphi 0, %s277
      %s279 = sphi 0, %s277
      %s280 = sphi 0, %s279
      %s294 = sphi 0, %s280
      %s298 = sphi 0, %s298
      %s300 = sphi 0, %s298
      %s301 = sphi 0, %s300
      %s315 = sphi 0, %s301
      %s319 = sphi 0, %s319
      %s321 = sphi 0, %s319
      %s322 = sphi 0, %s321
      %s336 = sphi 0, %s322
      %s340 = sphi 0, %s340
      %s342 = sphi 0, %s340
      %s343 = sphi 0, %s342
      %s357 = sphi 0, %s343
      %s361 = sphi 0, %s361
      %s363 = sphi 0, %s361
      %s364 = sphi 0, %s363
      %s378 = sphi 0, %s364
      %s382 = sphi 0, %s382
      %s384 = sphi 0, %s382
      %s385 = sphi 0, %s384
      %s399 = sphi 0, %s385
      %s403 = sphi 0, %s403
      %s405 = sphi 0, %s403
      %s406 = sphi 0, %s405
      %s420 = sphi 0, %s406
      %s424 = sphi 0, %s424
      %s426 = sphi 0, %s424
      %s427 = sphi 0, %s426
      %s441 = sphi 0, %s427
      %s445 = sphi 0, %s445
      %s447 = sphi 0, %s445
      %s448 = sphi 0, %s447
      %s462 = sphi 0, %s448
      %s466 = sphi 0, %s466
      %s468 = sphi 0, %s466
      %s469 = sphi 0, %s468
      %s483 = sphi 0, %s469
      %s487 = sphi 0, %s487
      %s489 = sphi 0, %s487
      %s490 = sphi 0, %s489
      %s504 = sphi 0, %s490
      %s508 = sphi 0, %s508
      %s510 = sphi 0, %s508
      %s511 = sphi 0, %s510
      %s525 = sphi 0, %s511
      %s529 = sphi 0, %s529
      %s531 = sphi 0, %s529
      %s532 = sphi 0, %s531
      %s546 = sphi 0, %s532
      %s550 = sphi 0, %s550
      %s552 = sphi 0, %s550
      %s553 = sphi 0, %s552
      %s567 = sphi 0, %s553
      %s573 = sphi 0, %s575
      %s576 = sphi 0, %s573
      %s577 = sphi 0, %s576
      %s593 = sphi 0, %s577
      %s599 = sphi 0, %s601
      %s602 = sphi 0, %s599
      %s603 = sphi 0, %s602
      %s619 = sphi 0, %s603
      %s625 = sphi 0, %s627
      %s628 = sphi 0, %s625
      %s629 = sphi 0, %s628
      %s645 = sphi 0, %s629
    $region4: #{trans_decoder.1} parent=1 // loop_header_branch
      %42 = sbr.rel (%p40) target = $region8
    $region5: #{trans_decoder.1} parent=1 // loop_body
      %s44 = ssub.s32 %s39, 1
      %s45 = ssub.s32 %s39, 2
      %s46 = sadd.s32 %s39, 1
      %s47 = ssub.s32 %s39, %s46
      %p48 = scmp.eq.s32.totalorder %s47, 0
      %s50 = sadd.s32 %s49, 1
      %s51 = scalar_select %p48, %s49, %s50
      %p54 = pneg %p48
      %p55 = scmp.eq.s32.totalorder %s39, 1
      %p56 = por %p54, %p55
      %p57 = scmp.ne.s32.totalorder %s49, %s52
      %p58 = scmp.eq.s32.totalorder %s39, 0
      %p59 = por %p57, %p58
      %p60 = scmp.ne.s32.totalorder %s49, %s52
      %p61 = scmp.eq.s32.totalorder %s44, 1
      %p62 = por %p60, %p61
      %p63 = scmp.ne.s32.totalorder %s52, %s53
      %p64 = scmp.eq.s32.totalorder %s44, 0
      %p65 = por %p63, %p64
      %p66 = scmp.ne.s32.totalorder %s52, %s53
      %p67 = scmp.eq.s32.totalorder %s45, 1
      %p68 = por %p66, %p67
      %p70 = scmp.ne.s32.totalorder %s53, %s69
      %p71 = scmp.eq.s32.totalorder %s45, 0
      %p72 = por %p70, %p71
      %s73 = ssub.s32 %s39, %s46
      %p74 = scmp.eq.s32.totalorder %s73, 0
      %s76 = sadd.s32 %s75, 1
      %s77 = scalar_select %p74, %s75, %s76
      %p80 = pneg %p74
      %p81 = scmp.eq.s32.totalorder %s39, 1
      %p82 = por %p80, %p81
      %p83 = scmp.ne.s32.totalorder %s75, %s78
      %p84 = scmp.eq.s32.totalorder %s39, 0
      %p85 = por %p83, %p84
      %p86 = scmp.ne.s32.totalorder %s75, %s78
      %p87 = scmp.eq.s32.totalorder %s44, 1
      %p88 = por %p86, %p87
      %p89 = scmp.ne.s32.totalorder %s78, %s79
      %p90 = scmp.eq.s32.totalorder %s44, 0
      %p91 = por %p89, %p90
      %p92 = scmp.ne.s32.totalorder %s78, %s79
      %p93 = scmp.eq.s32.totalorder %s45, 1
      %p94 = por %p92, %p93
      %p96 = scmp.ne.s32.totalorder %s79, %s95
      %p97 = scmp.eq.s32.totalorder %s45, 0
      %p98 = por %p96, %p97
      %s99 = ssub.s32 %s39, %s46
      %p100 = scmp.eq.s32.totalorder %s99, 0
      %s102 = sadd.s32 %s101, 1
      %s103 = scalar_select %p100, %s101, %s102
      %p106 = pneg %p100
      %p107 = scmp.eq.s32.totalorder %s39, 1
      %p108 = por %p106, %p107
      %p109 = scmp.ne.s32.totalorder %s101, %s104
      %p110 = scmp.eq.s32.totalorder %s39, 0
      %p111 = por %p109, %p110
      %p112 = scmp.ne.s32.totalorder %s101, %s104
      %p113 = scmp.eq.s32.totalorder %s44, 1
      %p114 = por %p112, %p113
      %p115 = scmp.ne.s32.totalorder %s104, %s105
      %p116 = scmp.eq.s32.totalorder %s44, 0
      %p117 = por %p115, %p116
      %p118 = scmp.ne.s32.totalorder %s104, %s105
      %p119 = scmp.eq.s32.totalorder %s45, 1
      %p120 = por %p118, %p119
      %p122 = scmp.ne.s32.totalorder %s105, %s121
      %p123 = scmp.eq.s32.totalorder %s45, 0
      %p124 = por %p122, %p123
      %s125 = ssub.s32 %s39, %s46
      %p126 = scmp.eq.s32.totalorder %s125, 0
      %s128 = sadd.s32 %s127, 1
      %s129 = scalar_select %p126, %s127, %s128
      %p132 = pneg %p126
      %p133 = scmp.eq.s32.totalorder %s39, 1
      %p134 = por %p132, %p133
      %p135 = scmp.ne.s32.totalorder %s127, %s130
      %p136 = scmp.eq.s32.totalorder %s39, 0
      %p137 = por %p135, %p136
      %p138 = scmp.ne.s32.totalorder %s127, %s130
      %p139 = scmp.eq.s32.totalorder %s44, 1
      %p140 = por %p138, %p139
      %p141 = scmp.ne.s32.totalorder %s130, %s131
      %p142 = scmp.eq.s32.totalorder %s44, 0
      %p143 = por %p141, %p142
      %p144 = scmp.ne.s32.totalorder %s130, %s131
      %p145 = scmp.eq.s32.totalorder %s45, 1
      %p146 = por %p144, %p145
      %p148 = scmp.ne.s32.totalorder %s131, %s147
      %p149 = scmp.eq.s32.totalorder %s45, 0
      %p150 = por %p148, %p149
      %s152 = sadd.s32 %s151, 1
      %p155 = scmp.eq.s32.totalorder %s39, 1
      %p156 = scmp.ne.s32.totalorder %s151, %s153
      %p157 = scmp.eq.s32.totalorder %s39, 0
      %p158 = por %p156, %p157
      %p159 = scmp.ne.s32.totalorder %s151, %s153
      %p160 = scmp.eq.s32.totalorder %s44, 1
      %p161 = por %p159, %p160
      %p162 = scmp.ne.s32.totalorder %s153, %s154
      %p163 = scmp.eq.s32.totalorder %s44, 0
      %p164 = por %p162, %p163
      %p165 = scmp.ne.s32.totalorder %s153, %s154
      %p166 = scmp.eq.s32.totalorder %s45, 1
      %p167 = por %p165, %p166
      %p169 = scmp.ne.s32.totalorder %s154, %s168
      %p170 = scmp.eq.s32.totalorder %s45, 0
      %p171 = por %p169, %p170
      %s173 = sadd.s32 %s172, 1
      %p176 = scmp.eq.s32.totalorder %s39, 1
      %p177 = scmp.ne.s32.totalorder %s172, %s174
      %p178 = scmp.eq.s32.totalorder %s39, 0
      %p179 = por %p177, %p178
      %p180 = scmp.ne.s32.totalorder %s172, %s174
      %p181 = scmp.eq.s32.totalorder %s44, 1
      %p182 = por %p180, %p181
      %p183 = scmp.ne.s32.totalorder %s174, %s175
      %p184 = scmp.eq.s32.totalorder %s44, 0
      %p185 = por %p183, %p184
      %p186 = scmp.ne.s32.totalorder %s174, %s175
      %p187 = scmp.eq.s32.totalorder %s45, 1
      %p188 = por %p186, %p187
      %p190 = scmp.ne.s32.totalorder %s175, %s189
      %p191 = scmp.eq.s32.totalorder %s45, 0
      %p192 = por %p190, %p191
      %s194 = sadd.s32 %s193, 1
      %p197 = scmp.eq.s32.totalorder %s39, 1
      %p198 = scmp.ne.s32.totalorder %s193, %s195
      %p199 = scmp.eq.s32.totalorder %s39, 0
      %p200 = por %p198, %p199
      %p201 = scmp.ne.s32.totalorder %s193, %s195
      %p202 = scmp.eq.s32.totalorder %s44, 1
      %p203 = por %p201, %p202
      %p204 = scmp.ne.s32.totalorder %s195, %s196
      %p205 = scmp.eq.s32.totalorder %s44, 0
      %p206 = por %p204, %p205
      %p207 = scmp.ne.s32.totalorder %s195, %s196
      %p208 = scmp.eq.s32.totalorder %s45, 1
      %p209 = por %p207, %p208
      %p211 = scmp.ne.s32.totalorder %s196, %s210
      %p212 = scmp.eq.s32.totalorder %s45, 0
      %p213 = por %p211, %p212
      %s215 = sadd.s32 %s214, 1
      %p218 = scmp.eq.s32.totalorder %s39, 1
      %p219 = scmp.ne.s32.totalorder %s214, %s216
      %p220 = scmp.eq.s32.totalorder %s39, 0
      %p221 = por %p219, %p220
      %p222 = scmp.ne.s32.totalorder %s214, %s216
      %p223 = scmp.eq.s32.totalorder %s44, 1
      %p224 = por %p222, %p223
      %p225 = scmp.ne.s32.totalorder %s216, %s217
      %p226 = scmp.eq.s32.totalorder %s44, 0
      %p227 = por %p225, %p226
      %p228 = scmp.ne.s32.totalorder %s216, %s217
      %p229 = scmp.eq.s32.totalorder %s45, 1
      %p230 = por %p228, %p229
      %p232 = scmp.ne.s32.totalorder %s217, %s231
      %p233 = scmp.eq.s32.totalorder %s45, 0
      %p234 = por %p232, %p233
      %s236 = sadd.s32 %s235, 1
      %p239 = scmp.eq.s32.totalorder %s39, 1
      %p240 = scmp.ne.s32.totalorder %s235, %s237
      %p241 = scmp.eq.s32.totalorder %s39, 0
      %p242 = por %p240, %p241
      %p243 = scmp.ne.s32.totalorder %s235, %s237
      %p244 = scmp.eq.s32.totalorder %s44, 1
      %p245 = por %p243, %p244
      %p246 = scmp.ne.s32.totalorder %s237, %s238
      %p247 = scmp.eq.s32.totalorder %s44, 0
      %p248 = por %p246, %p247
      %p249 = scmp.ne.s32.totalorder %s237, %s238
      %p250 = scmp.eq.s32.totalorder %s45, 1
      %p251 = por %p249, %p250
      %p253 = scmp.ne.s32.totalorder %s238, %s252
      %p254 = scmp.eq.s32.totalorder %s45, 0
      %p255 = por %p253, %p254
      %s257 = sadd.s32 %s256, 1
      %p260 = scmp.eq.s32.totalorder %s39, 1
      %p261 = scmp.ne.s32.totalorder %s256, %s258
      %p262 = scmp.eq.s32.totalorder %s39, 0
      %p263 = por %p261, %p262
      %p264 = scmp.ne.s32.totalorder %s256, %s258
      %p265 = scmp.eq.s32.totalorder %s44, 1
      %p266 = por %p264, %p265
      %p267 = scmp.ne.s32.totalorder %s258, %s259
      %p268 = scmp.eq.s32.totalorder %s44, 0
      %p269 = por %p267, %p268
      %p270 = scmp.ne.s32.totalorder %s258, %s259
      %p271 = scmp.eq.s32.totalorder %s45, 1
      %p272 = por %p270, %p271
      %p274 = scmp.ne.s32.totalorder %s259, %s273
      %p275 = scmp.eq.s32.totalorder %s45, 0
      %p276 = por %p274, %p275
      %s278 = sadd.s32 %s277, 1
      %p281 = scmp.eq.s32.totalorder %s39, 1
      %p282 = scmp.ne.s32.totalorder %s277, %s279
      %p283 = scmp.eq.s32.totalorder %s39, 0
      %p284 = por %p282, %p283
      %p285 = scmp.ne.s32.totalorder %s277, %s279
      %p286 = scmp.eq.s32.totalorder %s44, 1
      %p287 = por %p285, %p286
      %p288 = scmp.ne.s32.totalorder %s279, %s280
      %p289 = scmp.eq.s32.totalorder %s44, 0
      %p290 = por %p288, %p289
      %p291 = scmp.ne.s32.totalorder %s279, %s280
      %p292 = scmp.eq.s32.totalorder %s45, 1
      %p293 = por %p291, %p292
      %p295 = scmp.ne.s32.totalorder %s280, %s294
      %p296 = scmp.eq.s32.totalorder %s45, 0
      %p297 = por %p295, %p296
      %s299 = sadd.s32 %s298, 1
      %p302 = scmp.eq.s32.totalorder %s39, 1
      %p303 = scmp.ne.s32.totalorder %s298, %s300
      %p304 = scmp.eq.s32.totalorder %s39, 0
      %p305 = por %p303, %p304
      %p306 = scmp.ne.s32.totalorder %s298, %s300
      %p307 = scmp.eq.s32.totalorder %s44, 1
      %p308 = por %p306, %p307
      %p309 = scmp.ne.s32.totalorder %s300, %s301
      %p310 = scmp.eq.s32.totalorder %s44, 0
      %p311 = por %p309, %p310
      %p312 = scmp.ne.s32.totalorder %s300, %s301
      %p313 = scmp.eq.s32.totalorder %s45, 1
      %p314 = por %p312, %p313
      %p316 = scmp.ne.s32.totalorder %s301, %s315
      %p317 = scmp.eq.s32.totalorder %s45, 0
      %p318 = por %p316, %p317
      %s320 = sadd.s32 %s319, 1
      %p323 = scmp.eq.s32.totalorder %s39, 1
      %p324 = scmp.ne.s32.totalorder %s319, %s321
      %p325 = scmp.eq.s32.totalorder %s39, 0
      %p326 = por %p324, %p325
      %p327 = scmp.ne.s32.totalorder %s319, %s321
      %p328 = scmp.eq.s32.totalorder %s44, 1
      %p329 = por %p327, %p328
      %p330 = scmp.ne.s32.totalorder %s321, %s322
      %p331 = scmp.eq.s32.totalorder %s44, 0
      %p332 = por %p330, %p331
      %p333 = scmp.ne.s32.totalorder %s321, %s322
      %p334 = scmp.eq.s32.totalorder %s45, 1
      %p335 = por %p333, %p334
      %p337 = scmp.ne.s32.totalorder %s322, %s336
      %p338 = scmp.eq.s32.totalorder %s45, 0
      %p339 = por %p337, %p338
      %s341 = sadd.s32 %s340, 1
      %p344 = scmp.eq.s32.totalorder %s39, 1
      %p345 = scmp.ne.s32.totalorder %s340, %s342
      %p346 = scmp.eq.s32.totalorder %s39, 0
      %p347 = por %p345, %p346
      %p348 = scmp.ne.s32.totalorder %s340, %s342
      %p349 = scmp.eq.s32.totalorder %s44, 1
      %p350 = por %p348, %p349
      %p351 = scmp.ne.s32.totalorder %s342, %s343
      %p352 = scmp.eq.s32.totalorder %s44, 0
      %p353 = por %p351, %p352
      %p354 = scmp.ne.s32.totalorder %s342, %s343
      %p355 = scmp.eq.s32.totalorder %s45, 1
      %p356 = por %p354, %p355
      %p358 = scmp.ne.s32.totalorder %s343, %s357
      %p359 = scmp.eq.s32.totalorder %s45, 0
      %p360 = por %p358, %p359
      %s362 = sadd.s32 %s361, 1
      %p365 = scmp.eq.s32.totalorder %s39, 1
      %p366 = scmp.ne.s32.totalorder %s361, %s363
      %p367 = scmp.eq.s32.totalorder %s39, 0
      %p368 = por %p366, %p367
      %p369 = scmp.ne.s32.totalorder %s361, %s363
      %p370 = scmp.eq.s32.totalorder %s44, 1
      %p371 = por %p369, %p370
      %p372 = scmp.ne.s32.totalorder %s363, %s364
      %p373 = scmp.eq.s32.totalorder %s44, 0
      %p374 = por %p372, %p373
      %p375 = scmp.ne.s32.totalorder %s363, %s364
      %p376 = scmp.eq.s32.totalorder %s45, 1
      %p377 = por %p375, %p376
      %p379 = scmp.ne.s32.totalorder %s364, %s378
      %p380 = scmp.eq.s32.totalorder %s45, 0
      %p381 = por %p379, %p380
      %s383 = sadd.s32 %s382, 1
      %p386 = scmp.eq.s32.totalorder %s39, 1
      %p387 = scmp.ne.s32.totalorder %s382, %s384
      %p388 = scmp.eq.s32.totalorder %s39, 0
      %p389 = por %p387, %p388
      %p390 = scmp.ne.s32.totalorder %s382, %s384
      %p391 = scmp.eq.s32.totalorder %s44, 1
      %p392 = por %p390, %p391
      %p393 = scmp.ne.s32.totalorder %s384, %s385
      %p394 = scmp.eq.s32.totalorder %s44, 0
      %p395 = por %p393, %p394
      %p396 = scmp.ne.s32.totalorder %s384, %s385
      %p397 = scmp.eq.s32.totalorder %s45, 1
      %p398 = por %p396, %p397
      %p400 = scmp.ne.s32.totalorder %s385, %s399
      %p401 = scmp.eq.s32.totalorder %s45, 0
      %p402 = por %p400, %p401
      %s404 = sadd.s32 %s403, 1
      %p407 = scmp.eq.s32.totalorder %s39, 1
      %p408 = scmp.ne.s32.totalorder %s403, %s405
      %p409 = scmp.eq.s32.totalorder %s39, 0
      %p410 = por %p408, %p409
      %p411 = scmp.ne.s32.totalorder %s403, %s405
      %p412 = scmp.eq.s32.totalorder %s44, 1
      %p413 = por %p411, %p412
      %p414 = scmp.ne.s32.totalorder %s405, %s406
      %p415 = scmp.eq.s32.totalorder %s44, 0
      %p416 = por %p414, %p415
      %p417 = scmp.ne.s32.totalorder %s405, %s406
      %p418 = scmp.eq.s32.totalorder %s45, 1
      %p419 = por %p417, %p418
      %p421 = scmp.ne.s32.totalorder %s406, %s420
      %p422 = scmp.eq.s32.totalorder %s45, 0
      %p423 = por %p421, %p422
      %s425 = sadd.s32 %s424, 1
      %p428 = scmp.eq.s32.totalorder %s39, 1
      %p429 = scmp.ne.s32.totalorder %s424, %s426
      %p430 = scmp.eq.s32.totalorder %s39, 0
      %p431 = por %p429, %p430
      %p432 = scmp.ne.s32.totalorder %s424, %s426
      %p433 = scmp.eq.s32.totalorder %s44, 1
      %p434 = por %p432, %p433
      %p435 = scmp.ne.s32.totalorder %s426, %s427
      %p436 = scmp.eq.s32.totalorder %s44, 0
      %p437 = por %p435, %p436
      %p438 = scmp.ne.s32.totalorder %s426, %s427
      %p439 = scmp.eq.s32.totalorder %s45, 1
      %p440 = por %p438, %p439
      %p442 = scmp.ne.s32.totalorder %s427, %s441
      %p443 = scmp.eq.s32.totalorder %s45, 0
      %p444 = por %p442, %p443
      %s446 = sadd.s32 %s445, 1
      %p449 = scmp.eq.s32.totalorder %s39, 1
      %p450 = scmp.ne.s32.totalorder %s445, %s447
      %p451 = scmp.eq.s32.totalorder %s39, 0
      %p452 = por %p450, %p451
      %p453 = scmp.ne.s32.totalorder %s445, %s447
      %p454 = scmp.eq.s32.totalorder %s44, 1
      %p455 = por %p453, %p454
      %p456 = scmp.ne.s32.totalorder %s447, %s448
      %p457 = scmp.eq.s32.totalorder %s44, 0
      %p458 = por %p456, %p457
      %p459 = scmp.ne.s32.totalorder %s447, %s448
      %p460 = scmp.eq.s32.totalorder %s45, 1
      %p461 = por %p459, %p460
      %p463 = scmp.ne.s32.totalorder %s448, %s462
      %p464 = scmp.eq.s32.totalorder %s45, 0
      %p465 = por %p463, %p464
      %s467 = sadd.s32 %s466, 1
      %p470 = scmp.eq.s32.totalorder %s39, 1
      %p471 = scmp.ne.s32.totalorder %s466, %s468
      %p472 = scmp.eq.s32.totalorder %s39, 0
      %p473 = por %p471, %p472
      %p474 = scmp.ne.s32.totalorder %s466, %s468
      %p475 = scmp.eq.s32.totalorder %s44, 1
      %p476 = por %p474, %p475
      %p477 = scmp.ne.s32.totalorder %s468, %s469
      %p478 = scmp.eq.s32.totalorder %s44, 0
      %p479 = por %p477, %p478
      %p480 = scmp.ne.s32.totalorder %s468, %s469
      %p481 = scmp.eq.s32.totalorder %s45, 1
      %p482 = por %p480, %p481
      %p484 = scmp.ne.s32.totalorder %s469, %s483
      %p485 = scmp.eq.s32.totalorder %s45, 0
      %p486 = por %p484, %p485
      %s488 = sadd.s32 %s487, 1
      %p491 = scmp.eq.s32.totalorder %s39, 1
      %p492 = scmp.ne.s32.totalorder %s487, %s489
      %p493 = scmp.eq.s32.totalorder %s39, 0
      %p494 = por %p492, %p493
      %p495 = scmp.ne.s32.totalorder %s487, %s489
      %p496 = scmp.eq.s32.totalorder %s44, 1
      %p497 = por %p495, %p496
      %p498 = scmp.ne.s32.totalorder %s489, %s490
      %p499 = scmp.eq.s32.totalorder %s44, 0
      %p500 = por %p498, %p499
      %p501 = scmp.ne.s32.totalorder %s489, %s490
      %p502 = scmp.eq.s32.totalorder %s45, 1
      %p503 = por %p501, %p502
      %p505 = scmp.ne.s32.totalorder %s490, %s504
      %p506 = scmp.eq.s32.totalorder %s45, 0
      %p507 = por %p505, %p506
      %s509 = sadd.s32 %s508, 1
      %p512 = scmp.eq.s32.totalorder %s39, 1
      %p513 = scmp.ne.s32.totalorder %s508, %s510
      %p514 = scmp.eq.s32.totalorder %s39, 0
      %p515 = por %p513, %p514
      %p516 = scmp.ne.s32.totalorder %s508, %s510
      %p517 = scmp.eq.s32.totalorder %s44, 1
      %p518 = por %p516, %p517
      %p519 = scmp.ne.s32.totalorder %s510, %s511
      %p520 = scmp.eq.s32.totalorder %s44, 0
      %p521 = por %p519, %p520
      %p522 = scmp.ne.s32.totalorder %s510, %s511
      %p523 = scmp.eq.s32.totalorder %s45, 1
      %p524 = por %p522, %p523
      %p526 = scmp.ne.s32.totalorder %s511, %s525
      %p527 = scmp.eq.s32.totalorder %s45, 0
      %p528 = por %p526, %p527
      %s530 = sadd.s32 %s529, 1
      %p533 = scmp.eq.s32.totalorder %s39, 1
      %p534 = scmp.ne.s32.totalorder %s529, %s531
      %p535 = scmp.eq.s32.totalorder %s39, 0
      %p536 = por %p534, %p535
      %p537 = scmp.ne.s32.totalorder %s529, %s531
      %p538 = scmp.eq.s32.totalorder %s44, 1
      %p539 = por %p537, %p538
      %p540 = scmp.ne.s32.totalorder %s531, %s532
      %p541 = scmp.eq.s32.totalorder %s44, 0
      %p542 = por %p540, %p541
      %p543 = scmp.ne.s32.totalorder %s531, %s532
      %p544 = scmp.eq.s32.totalorder %s45, 1
      %p545 = por %p543, %p544
      %p547 = scmp.ne.s32.totalorder %s532, %s546
      %p548 = scmp.eq.s32.totalorder %s45, 0
      %p549 = por %p547, %p548
      %s551 = sadd.s32 %s550, 1
      %p554 = scmp.eq.s32.totalorder %s39, 1
      %p555 = scmp.ne.s32.totalorder %s550, %s552
      %p556 = scmp.eq.s32.totalorder %s39, 0
      %p557 = por %p555, %p556
      %p558 = scmp.ne.s32.totalorder %s550, %s552
      %p559 = scmp.eq.s32.totalorder %s44, 1
      %p560 = por %p558, %p559
      %p561 = scmp.ne.s32.totalorder %s552, %s553
      %p562 = scmp.eq.s32.totalorder %s44, 0
      %p563 = por %p561, %p562
      %p564 = scmp.ne.s32.totalorder %s552, %s553
      %p565 = scmp.eq.s32.totalorder %s45, 1
      %p566 = por %p564, %p565
      %p568 = scmp.ne.s32.totalorder %s553, %s567
      %p569 = scmp.eq.s32.totalorder %s45, 0
      %p570 = por %p568, %p569
      %s571 = ssub.s32 %s39, %s46
      %p572 = scmp.eq.s32.totalorder %s571, 0
      %s574 = sadd.s32 %s573, 1
      %s575 = scalar_select %p572, %s573, %s574
      %p578 = pneg %p572
      %p579 = scmp.eq.s32.totalorder %s39, 1
      %p580 = por %p578, %p579
      %p581 = scmp.ne.s32.totalorder %s573, %s576
      %p582 = scmp.eq.s32.totalorder %s39, 0
      %p583 = por %p581, %p582
      %p584 = scmp.ne.s32.totalorder %s573, %s576
      %p585 = scmp.eq.s32.totalorder %s44, 1
      %p586 = por %p584, %p585
      %p587 = scmp.ne.s32.totalorder %s576, %s577
      %p588 = scmp.eq.s32.totalorder %s44, 0
      %p589 = por %p587, %p588
      %p590 = scmp.ne.s32.totalorder %s576, %s577
      %p591 = scmp.eq.s32.totalorder %s45, 1
      %p592 = por %p590, %p591
      %p594 = scmp.ne.s32.totalorder %s577, %s593
      %p595 = scmp.eq.s32.totalorder %s45, 0
      %p596 = por %p594, %p595
      %s597 = ssub.s32 %s39, %s46
      %p598 = scmp.eq.s32.totalorder %s597, 0
      %s600 = sadd.s32 %s599, 1
      %s601 = scalar_select %p598, %s599, %s600
      %p604 = pneg %p598
      %p605 = scmp.eq.s32.totalorder %s39, 1
      %p606 = por %p604, %p605
      %p607 = scmp.ne.s32.totalorder %s599, %s602
      %p608 = scmp.eq.s32.totalorder %s39, 0
      %p609 = por %p607, %p608
      %p610 = scmp.ne.s32.totalorder %s599, %s602
      %p611 = scmp.eq.s32.totalorder %s44, 1
      %p612 = por %p610, %p611
      %p613 = scmp.ne.s32.totalorder %s602, %s603
      %p614 = scmp.eq.s32.totalorder %s44, 0
      %p615 = por %p613, %p614
      %p616 = scmp.ne.s32.totalorder %s602, %s603
      %p617 = scmp.eq.s32.totalorder %s45, 1
      %p618 = por %p616, %p617
      %p620 = scmp.ne.s32.totalorder %s603, %s619
      %p621 = scmp.eq.s32.totalorder %s45, 0
      %p622 = por %p620, %p621
      %s623 = ssub.s32 %s39, %s46
      %p624 = scmp.eq.s32.totalorder %s623, 0
      %s626 = sadd.s32 %s625, 1
      %s627 = scalar_select %p624, %s625, %s626
      %p630 = pneg %p624
      %p631 = scmp.eq.s32.totalorder %s39, 1
      %p632 = por %p630, %p631
      %p633 = scmp.ne.s32.totalorder %s625, %s628
      %p634 = scmp.eq.s32.totalorder %s39, 0
      %p635 = por %p633, %p634
      %p636 = scmp.ne.s32.totalorder %s625, %s628
      %p637 = scmp.eq.s32.totalorder %s44, 1
      %p638 = por %p636, %p637
      %p639 = scmp.ne.s32.totalorder %s628, %s629
      %p640 = scmp.eq.s32.totalorder %s44, 0
      %p641 = por %p639, %p640
      %p642 = scmp.ne.s32.totalorder %s628, %s629
      %p643 = scmp.eq.s32.totalorder %s45, 1
      %p644 = por %p642, %p643
      %p646 = scmp.ne.s32.totalorder %s629, %s645
      %p647 = scmp.eq.s32.totalorder %s45, 0
      %p648 = por %p646, %p647
      %p649 = scmp.le.s32.totalorder 1, %s39
      %p650 = scmp.lt.s32.totalorder %s39, 3
      %p651 = pnand %p649, %p650
      %p652 = pneg %p651
      // Predicated region
      $region9: #{trans_decoder.1} parent=5 // pred_check
        _
      $region10: #{trans_decoder.1} parent=5 // pred_check_branch
        %654 = sbr.rel (%p651) target = $region12
      $region11: #{trans_decoder.1} parent=5 // pred_region
        %s655 = ssub.s32 %s39, 1
        // Predicated region
        $region13: #{trans_decoder.1} parent=11 // pred_check
          %p656 = pneg %p164
        $region14: #{trans_decoder.1} parent=11 // pred_check_branch
          %658 = sbr.rel (%p656) target = $region16
        $region15: #{trans_decoder.1} parent=11 // pred_region
          _
        $region16: #{trans_decoder.1} parent=11 // pred_fallthru
          _
        // Predicated region
        $region17: #{trans_decoder.1} parent=11 // pred_check
          %p659 = pneg %p185
        $region18: #{trans_decoder.1} parent=11 // pred_check_branch
          %661 = sbr.rel (%p659) target = $region20
        $region19: #{trans_decoder.1} parent=11 // pred_region
          _
        $region20: #{trans_decoder.1} parent=11 // pred_fallthru
          _
        // Predicated region
        $region21: #{trans_decoder.1} parent=11 // pred_check
          %p662 = pneg %p206
        $region22: #{trans_decoder.1} parent=11 // pred_check_branch
          %664 = sbr.rel (%p662) target = $region24
        $region23: #{trans_decoder.1} parent=11 // pred_region
          _
        $region24: #{trans_decoder.1} parent=11 // pred_fallthru
          _
        // Predicated region
        $region25: #{trans_decoder.1} parent=11 // pred_check
          %p665 = pneg %p227
        $region26: #{trans_decoder.1} parent=11 // pred_check_branch
          %667 = sbr.rel (%p665) target = $region28
        $region27: #{trans_decoder.1} parent=11 // pred_region
          _
        $region28: #{trans_decoder.1} parent=11 // pred_fallthru
          _
        // Predicated region
        $region29: #{trans_decoder.1} parent=11 // pred_check
          %p668 = pneg %p248
        $region30: #{trans_decoder.1} parent=11 // pred_check_branch
          %670 = sbr.rel (%p668) target = $region32
        $region31: #{trans_decoder.1} parent=11 // pred_region
          _
        $region32: #{trans_decoder.1} parent=11 // pred_fallthru
          _
        // Predicated region
        $region33: #{trans_decoder.1} parent=11 // pred_check
          %p671 = pneg %p269
        $region34: #{trans_decoder.1} parent=11 // pred_check_branch
          %673 = sbr.rel (%p671) target = $region36
        $region35: #{trans_decoder.1} parent=11 // pred_region
          _
        $region36: #{trans_decoder.1} parent=11 // pred_fallthru
          _
        // Predicated region
        $region37: #{trans_decoder.1} parent=11 // pred_check
          %p674 = pneg %p290
        $region38: #{trans_decoder.1} parent=11 // pred_check_branch
          %676 = sbr.rel (%p674) target = $region40
        $region39: #{trans_decoder.1} parent=11 // pred_region
          _
        $region40: #{trans_decoder.1} parent=11 // pred_fallthru
          _
        // Predicated region
        $region41: #{trans_decoder.1} parent=11 // pred_check
          %p677 = pneg %p311
        $region42: #{trans_decoder.1} parent=11 // pred_check_branch
          %679 = sbr.rel (%p677) target = $region44
        $region43: #{trans_decoder.1} parent=11 // pred_region
          _
        $region44: #{trans_decoder.1} parent=11 // pred_fallthru
          _
        // Predicated region
        $region45: #{trans_decoder.1} parent=11 // pred_check
          %p680 = pneg %p332
        $region46: #{trans_decoder.1} parent=11 // pred_check_branch
          %682 = sbr.rel (%p680) target = $region48
        $region47: #{trans_decoder.1} parent=11 // pred_region
          _
        $region48: #{trans_decoder.1} parent=11 // pred_fallthru
          _
        // Predicated region
        $region49: #{trans_decoder.1} parent=11 // pred_check
          %p683 = pneg %p353
        $region50: #{trans_decoder.1} parent=11 // pred_check_branch
          %685 = sbr.rel (%p683) target = $region52
        $region51: #{trans_decoder.1} parent=11 // pred_region
          _
        $region52: #{trans_decoder.1} parent=11 // pred_fallthru
          _
        // Predicated region
        $region53: #{trans_decoder.1} parent=11 // pred_check
          %p686 = pneg %p374
        $region54: #{trans_decoder.1} parent=11 // pred_check_branch
          %688 = sbr.rel (%p686) target = $region56
        $region55: #{trans_decoder.1} parent=11 // pred_region
          _
        $region56: #{trans_decoder.1} parent=11 // pred_fallthru
          _
        // Predicated region
        $region57: #{trans_decoder.1} parent=11 // pred_check
          %p689 = pneg %p395
        $region58: #{trans_decoder.1} parent=11 // pred_check_branch
          %691 = sbr.rel (%p689) target = $region60
        $region59: #{trans_decoder.1} parent=11 // pred_region
          _
        $region60: #{trans_decoder.1} parent=11 // pred_fallthru
          _
        // Predicated region
        $region61: #{trans_decoder.1} parent=11 // pred_check
          %p692 = pneg %p416
        $region62: #{trans_decoder.1} parent=11 // pred_check_branch
          %694 = sbr.rel (%p692) target = $region64
        $region63: #{trans_decoder.1} parent=11 // pred_region
          _
        $region64: #{trans_decoder.1} parent=11 // pred_fallthru
          _
        // Predicated region
        $region65: #{trans_decoder.1} parent=11 // pred_check
          %p695 = pneg %p437
        $region66: #{trans_decoder.1} parent=11 // pred_check_branch
          %697 = sbr.rel (%p695) target = $region68
        $region67: #{trans_decoder.1} parent=11 // pred_region
          _
        $region68: #{trans_decoder.1} parent=11 // pred_fallthru
          _
        // Predicated region
        $region69: #{trans_decoder.1} parent=11 // pred_check
          %p698 = pneg %p458
        $region70: #{trans_decoder.1} parent=11 // pred_check_branch
          %700 = sbr.rel (%p698) target = $region72
        $region71: #{trans_decoder.1} parent=11 // pred_region
          _
        $region72: #{trans_decoder.1} parent=11 // pred_fallthru
          _
        // Predicated region
        $region73: #{trans_decoder.1} parent=11 // pred_check
          %p701 = pneg %p479
        $region74: #{trans_decoder.1} parent=11 // pred_check_branch
          %703 = sbr.rel (%p701) target = $region76
        $region75: #{trans_decoder.1} parent=11 // pred_region
          _
        $region76: #{trans_decoder.1} parent=11 // pred_fallthru
          _
        // Predicated region
        $region77: #{trans_decoder.1} parent=11 // pred_check
          %p704 = pneg %p500
        $region78: #{trans_decoder.1} parent=11 // pred_check_branch
          %706 = sbr.rel (%p704) target = $region80
        $region79: #{trans_decoder.1} parent=11 // pred_region
          _
        $region80: #{trans_decoder.1} parent=11 // pred_fallthru
          _
        // Predicated region
        $region81: #{trans_decoder.1} parent=11 // pred_check
          %p707 = pneg %p521
        $region82: #{trans_decoder.1} parent=11 // pred_check_branch
          %709 = sbr.rel (%p707) target = $region84
        $region83: #{trans_decoder.1} parent=11 // pred_region
          _
        $region84: #{trans_decoder.1} parent=11 // pred_fallthru
          _
        // Predicated region
        $region85: #{trans_decoder.1} parent=11 // pred_check
          %p710 = pneg %p542
        $region86: #{trans_decoder.1} parent=11 // pred_check_branch
          %712 = sbr.rel (%p710) target = $region88
        $region87: #{trans_decoder.1} parent=11 // pred_region
          _
        $region88: #{trans_decoder.1} parent=11 // pred_fallthru
          _
        // Predicated region
        $region89: #{trans_decoder.1} parent=11 // pred_check
          %p713 = pneg %p563
        $region90: #{trans_decoder.1} parent=11 // pred_check_branch
          %715 = sbr.rel (%p713) target = $region92
        $region91: #{trans_decoder.1} parent=11 // pred_region
          _
        $region92: #{trans_decoder.1} parent=11 // pred_fallthru
          _
      $region12: #{trans_decoder.1} parent=5 // pred_fallthru
        _
      %p716 = scmp.lt.s32.totalorder %s39, 2
      // Predicated region
      $region93: #{trans_decoder.1} parent=5 // pred_check
        %p717 = pneg %p716
      $region94: #{trans_decoder.1} parent=5 // pred_check_branch
        %719 = sbr.rel (%p717) target = $region96
      $region95: #{trans_decoder.1} parent=5 // pred_region
        // Predicated region
        $region97: #{trans_decoder.1} parent=95 // pred_check
          %p720 = pneg %p59
        $region98: #{trans_decoder.1} parent=95 // pred_check_branch
          %722 = sbr.rel (%p720) target = $region100
        $region99: #{trans_decoder.1} parent=95 // pred_region
          %p723 = scmp.lt.s32.totalorder %s39, 1
          %s724 = scalar_select %p723, %s39, 1
          %s725 = smul.addr %s724, 8
          %s726 = scalar_lea.vmem %s0, %s725
        $region100: #{trans_decoder.1} parent=95 // pred_fallthru
          _
        // Predicated region
        $region101: #{trans_decoder.1} parent=95 // pred_check
          %p727 = pneg %p85
        $region102: #{trans_decoder.1} parent=95 // pred_check_branch
          %729 = sbr.rel (%p727) target = $region104
        $region103: #{trans_decoder.1} parent=95 // pred_region
          %p730 = scmp.lt.s32.totalorder %s39, 1
          %s731 = scalar_select %p730, %s39, 1
          %s732 = smul.addr %s731, 8
          %s733 = scalar_lea.vmem %s1, %s732
        $region104: #{trans_decoder.1} parent=95 // pred_fallthru
          _
        // Predicated region
        $region105: #{trans_decoder.1} parent=95 // pred_check
          %p734 = pneg %p111
        $region106: #{trans_decoder.1} parent=95 // pred_check_branch
          %736 = sbr.rel (%p734) target = $region108
        $region107: #{trans_decoder.1} parent=95 // pred_region
          %p737 = scmp.lt.s32.totalorder %s39, 1
          %s738 = scalar_select %p737, %s39, 1
          %s739 = smul.addr %s738, 8
          %s740 = scalar_lea.vmem %s2, %s739
        $region108: #{trans_decoder.1} parent=95 // pred_fallthru
          _
        // Predicated region
        $region109: #{trans_decoder.1} parent=95 // pred_check
          %p741 = pneg %p137
        $region110: #{trans_decoder.1} parent=95 // pred_check_branch
          %743 = sbr.rel (%p741) target = $region112
        $region111: #{trans_decoder.1} parent=95 // pred_region
          %p744 = scmp.lt.s32.totalorder %s39, 1
          %s745 = scalar_select %p744, %s39, 1
          %s746 = smul.addr %s745, 8
          %s747 = scalar_lea.vmem %s3, %s746
        $region112: #{trans_decoder.1} parent=95 // pred_fallthru
          _
      $region96: #{trans_decoder.1} parent=5 // pred_fallthru
        _
      %p748 = scmp.le.s32.totalorder 1, %s39
      %p749 = scmp.lt.s32.totalorder %s39, 3
      %p750 = pnand %p748, %p749
      %p751 = pneg %p750
      // Predicated region
      $region113: #{trans_decoder.1} parent=5 // pred_check
        _
      $region114: #{trans_decoder.1} parent=5 // pred_check_branch
        %753 = sbr.rel (%p750) target = $region116
      $region115: #{trans_decoder.1} parent=5 // pred_region
        %s754 = ssub.s32 %s39, 1
        %p755 = scmp.lt.s32.totalorder %s44, 1
        %s756 = scalar_select %p755, %s44, 1
        %s757 = smul.addr %s756, 8
        %s758 = scalar_lea.vmem %s0, %s757
        %p759 = pneg %p65
        %p760 = pneg %p62
        %p761 = scmp.lt.s32.totalorder %s44, 1
        %s762 = scalar_select %p761, %s44, 1
        %s763 = smul.addr %s762, 8
        %s764 = scalar_lea.vmem %s1, %s763
        %p765 = pneg %p91
        %p766 = pneg %p88
        %p767 = scmp.lt.s32.totalorder %s44, 1
        %s768 = scalar_select %p767, %s44, 1
        %s769 = smul.addr %s768, 8
        %s770 = scalar_lea.vmem %s2, %s769
        %p771 = pneg %p117
        %p772 = pneg %p114
        %p773 = scmp.lt.s32.totalorder %s44, 1
        %s774 = scalar_select %p773, %s44, 1
        %s775 = smul.addr %s774, 8
        %s776 = scalar_lea.vmem %s3, %s775
        %p777 = pneg %p143
        %p778 = pneg %p140
        %p779 = pneg %p164
        %p780 = pneg %p161
        %p781 = pneg %p185
        %p782 = pneg %p182
        %p783 = pneg %p206
        %p784 = pneg %p203
        %p785 = pneg %p227
        %p786 = pneg %p224
        %p787 = pneg %p248
        %p788 = pneg %p245
        %p789 = pneg %p269
        %p790 = pneg %p266
        %p791 = pneg %p290
        %p792 = pneg %p287
        %p793 = pneg %p311
        %p794 = pneg %p308
        %p795 = pneg %p332
        %p796 = pneg %p329
        %p797 = pneg %p353
        %p798 = pneg %p350
        %p799 = pneg %p374
        %p800 = pneg %p371
        %p801 = pneg %p395
        %p802 = pneg %p392
        %p803 = pneg %p416
        %p804 = pneg %p413
        %p805 = pneg %p437
        %p806 = pneg %p434
        %p807 = pneg %p458
        %p808 = pneg %p455
        %p809 = pneg %p479
        %p810 = pneg %p476
        %p811 = pneg %p500
        %p812 = pneg %p497
        %p813 = pneg %p521
        %p814 = pneg %p518
        %p815 = pneg %p542
        %p816 = pneg %p539
        %p817 = pneg %p563
        %p818 = pneg %p560
        %p819 = pneg %p589
        %p820 = pneg %p586
        %s821 = sand.u32 %s576, 1
        %s822 = scalar_lea.sflag [#allocation3], %s821
        %s823 = sand.u32 %s576, 1
        %s824 = smul.addr %s823, 8
        %s825 = scalar_lea.vmem [#allocation2], %s824
        %p826 = pneg %p615
        %p827 = pneg %p612
        %s828 = sand.u32 %s44, 1
        %s829 = scalar_lea.sflag [#allocation5], %s828
        %s830 = sand.u32 %s602, 1
        %s831 = smul.addr %s830, 64
        %s832 = scalar_lea.vmem [#allocation4], %s831
        %p833 = pneg %p641
        %p834 = pneg %p638
        %s835 = sand.u32 %s44, 1
        %s836 = scalar_lea.sflag [#allocation5], %s835
        %s837 = sand.u32 %s628, 1
        %s838 = smul.addr %s837, 64
        %s839 = scalar_lea.vmem [#allocation6], %s838
        %p840 = scmp.lt.s32.totalorder %s44, 1
        %s841 = scalar_select %p840, %s44, 1
        %s842 = smul.addr %s841, 8
        %s843 = scalar_lea.vmem %s0, %s842
        %p844 = scmp.lt.s32.totalorder %s44, 1
        %s845 = scalar_select %p844, %s44, 1
        %s846 = smul.addr %s845, 8
        %s847 = scalar_lea.vmem %s1, %s846
        %p848 = scmp.lt.s32.totalorder %s44, 1
        %s849 = scalar_select %p848, %s44, 1
        %s850 = smul.addr %s849, 8
        %s851 = scalar_lea.vmem %s2, %s850
        %p852 = scmp.lt.s32.totalorder %s44, 1
        %s853 = scalar_select %p852, %s44, 1
        %s854 = smul.addr %s853, 8
        %s855 = scalar_lea.vmem %s3, %s854
        %v856 = vld [vmem:[%s843] sm:$0xff]
        %v857 = vld [vmem:[%s847] sm:$0xff]
        %v858 = vld [vmem:[%s851] sm:$0xff]
        %vm859 = vcmp.ne.f32.partialorder %v858, 0.0
        %v860 = vld [vmem:[%s855] sm:$0xff]
        %vm861 = vcmp.ne.f32.partialorder %v860, 0.0
        %v862 = vld [vmem:[%s4] sm:$0xff]
        %v863 = vld [vmem:[%s4 + $0x8] sm:$0xff]
        %v864 = vld [vmem:[%s4 + $0x10] sm:$0xff]
        %v865 = vld [vmem:[%s4 + $0x18] sm:$0xff]
        %v866 = vld [vmem:[%s5] sm:$0x1]
        %v868 = vlaneseq
        %v869 = vshrl.u32 %v868, 7
        %v870 = vsub.s32 0, %v869
        %v871 = vrot.slane %v866, %v870
        %vm873 = vcmask 261120
        %v875 = vsel %vm873, %v856, 0
        %877 = vmatprep.subr.mxu0 0.0
        %878 = vmatpush1.msra.mxu0 %v862
        %879 = vmatprep.subr.mxu0 0.0
        %880 = vmatpush1.msra.mxu0 %v863
        %881 = vmatprep.subr.mxu0 0.0
        %882 = vmatpush1.msra.mxu0 %v864
        %883 = vmatprep.subr.mxu0 0.0
        %884 = vmatpush1.msra.mxu0 %v865
        %885 = vmatprep.subr.mxu0 0.0
        %886 = vmatpush1.msra.mxu0 0.0
        %887 = vmatprep.subr.mxu0 0.0
        %888 = vmatpush1.msra.mxu0 0.0
        %889 = vmatprep.subr.mxu0 0.0
        %890 = vmatpush1.msra.mxu0 0.0
        %891 = vmatprep.subr.mxu0 0.0
        %892 = vmatpush1.msra.mxu0 0.0
        %893 = vmatprep.subr.mxu0 0.0
        %894 = vmatpush1.msra.mxu0 0.0
        %895 = vmatprep.subr.mxu0 0.0
        %896 = vmatpush1.msra.mxu0 0.0
        %897 = vmatprep.subr.mxu0 0.0
        %898 = vmatpush1.msra.mxu0 0.0
        %899 = vmatprep.subr.mxu0 0.0
        %900 = vmatpush1.msra.mxu0 0.0
        %901 = vmatprep.subr.mxu0 0.0
        %902 = vmatpush1.msra.mxu0 0.0
        %903 = vmatprep.subr.mxu0 0.0
        %904 = vmatpush1.msra.mxu0 0.0
        %905 = vmatprep.subr.mxu0 0.0
        %906 = vmatpush1.msra.mxu0 0.0
        %907 = vmatprep.subr.mxu0 0.0
        %908 = vmatpush1.msra.mxu0 0.0
        %909 = vmatprep.subr.mxu0 0.0
        %910 = vmatpush1.msra.mxu0 0.0
        %911 = vmatprep.subr.mxu0 0.0
        %912 = vmatpush1.msra.mxu0 0.0
        %913 = vmatprep.subr.mxu0 0.0
        %914 = vmatpush1.msra.mxu0 0.0
        %915 = vmatprep.subr.mxu0 0.0
        %916 = vmatpush1.msra.mxu0 0.0
        %917 = vmatprep.subr.mxu0 0.0
        %918 = vmatpush1.msra.mxu0 0.0
        %919 = vmatprep.subr.mxu0 0.0
        %920 = vmatpush1.msra.mxu0 0.0
        %921 = vmatprep.subr.mxu0 0.0
        %922 = vmatpush1.msra.mxu0 0.0
        %923 = vmatprep.subr.mxu0 0.0
        %924 = vmatpush1.msra.mxu0 0.0
        %925 = vmatprep.subr.mxu0 0.0
        %926 = vmatpush1.msra.mxu0 0.0
        %927 = vmatprep.subr.mxu0 0.0
        %928 = vmatpush1.msra.mxu0 0.0
        %929 = vmatprep.subr.mxu0 0.0
        %930 = vmatpush1.msra.mxu0 0.0
        %931 = vmatprep.subr.mxu0 0.0
        %932 = vmatpush1.msra.mxu0 0.0
        %933 = vmatprep.subr.mxu0 0.0
        %934 = vmatpush1.msra.mxu0 0.0
        %935 = vmatprep.subr.mxu0 0.0
        %936 = vmatpush1.msra.mxu0 0.0
        %937 = vmatprep.subr.mxu0 0.0
        %938 = vmatpush1.msra.mxu0 0.0
        %939 = vmatprep.subr.mxu0 0.0
        %940 = vmatpush1.msra.mxu0 0.0
        %941 = vmatprep.mubr.f32.mxu0 0.0
        %942 = vmatmul.mubr.f32.gmra.mrb[0].mxu0 %v875
        %v943 = vpop.f32.mrb[0].mxu0
        %v944 = vadd.f32 %v871, %v943
        %v945 = vpop.f32.mrb[0].mxu0
        %946 = vdwg.mxu0
        %948 = vrot.lane.b32.xlu0 %v944, 96
        %v949 = vpop.permute.xlu0 %948
        %vm950 = vcmask 31744
        %v951 = vsel %vm950, %v944, 0
        %v953 = vsel %vm950, %v949, 0
        %955 = vmatprep.subr.mxu0 0.0
        %956 = vmatpush1.xpose.msra.mxu0 %v953
        %957 = vmatprep.subr.mxu0 0.0
        %958 = vmatpush1.xpose.msra.mxu0 0.0
        %959 = vmatprep.subr.mxu0 0.0
        %960 = vmatpush1.xpose.msra.mxu0 0.0
        %961 = vmatprep.subr.mxu0 0.0
        %962 = vmatpush1.xpose.msra.mxu0 0.0
        %963 = vmatprep.subr.mxu0 0.0
        %964 = vmatpush1.xpose.msra.mxu0 0.0
        %965 = vmatprep.subr.mxu0 0.0
        %966 = vmatpush1.xpose.msra.mxu0 0.0
        %967 = vmatprep.subr.mxu0 0.0
        %968 = vmatpush1.xpose.msra.mxu0 0.0
        %969 = vmatprep.subr.mxu0 0.0
        %970 = vmatpush1.xpose.msra.mxu0 0.0
        %971 = vmatprep.subr.mxu0 0.0
        %972 = vmatpush1.xpose.msra.mxu0 0.0
        %973 = vmatprep.subr.mxu0 0.0
        %974 = vmatpush1.xpose.msra.mxu0 0.0
        %975 = vmatprep.subr.mxu0 0.0
        %976 = vmatpush1.xpose.msra.mxu0 0.0
        %977 = vmatprep.subr.mxu0 0.0
        %978 = vmatpush1.xpose.msra.mxu0 0.0
        %979 = vmatprep.subr.mxu0 0.0
        %980 = vmatpush1.xpose.msra.mxu0 0.0
        %981 = vmatprep.subr.mxu0 0.0
        %982 = vmatpush1.xpose.msra.mxu0 0.0
        %983 = vmatprep.subr.mxu0 0.0
        %984 = vmatpush1.xpose.msra.mxu0 0.0
        %985 = vmatprep.subr.mxu0 0.0
        %986 = vmatpush1.xpose.msra.mxu0 0.0
        %987 = vmatprep.subr.mxu0 0.0
        %988 = vmatpush1.xpose.msra.mxu0 0.0
        %989 = vmatprep.subr.mxu0 0.0
        %990 = vmatpush1.xpose.msra.mxu0 0.0
        %991 = vmatprep.subr.mxu0 0.0
        %992 = vmatpush1.xpose.msra.mxu0 0.0
        %993 = vmatprep.subr.mxu0 0.0
        %994 = vmatpush1.xpose.msra.mxu0 0.0
        %995 = vmatprep.subr.mxu0 0.0
        %996 = vmatpush1.xpose.msra.mxu0 0.0
        %997 = vmatprep.subr.mxu0 0.0
        %998 = vmatpush1.xpose.msra.mxu0 0.0
        %999 = vmatprep.subr.mxu0 0.0
        %1000 = vmatpush1.xpose.msra.mxu0 0.0
        %1001 = vmatprep.subr.mxu0 0.0
        %1002 = vmatpush1.xpose.msra.mxu0 0.0
        %1003 = vmatprep.subr.mxu0 0.0
        %1004 = vmatpush1.xpose.msra.mxu0 0.0
        %1005 = vmatprep.subr.mxu0 0.0
        %1006 = vmatpush1.xpose.msra.mxu0 0.0
        %1007 = vmatprep.subr.mxu0 0.0
        %1008 = vmatpush1.xpose.msra.mxu0 0.0
        %1009 = vmatprep.subr.mxu0 0.0
        %1010 = vmatpush1.xpose.msra.mxu0 0.0
        %1011 = vmatprep.subr.mxu0 0.0
        %1012 = vmatpush1.xpose.msra.mxu0 0.0
        %1013 = vmatprep.subr.mxu0 0.0
        %1014 = vmatpush1.xpose.msra.mxu0 0.0
        %1015 = vmatprep.subr.mxu0 0.0
        %1016 = vmatpush1.xpose.msra.mxu0 0.0
        %1017 = vmatprep.subr.mxu0 0.0
        %1018 = vmatpush1.xpose.msra.mxu0 0.0
        %1019 = vmatprep.mubr.f32.mxu0 0.0
        %1020 = vmatmul.mubr.f32.gmra.mrb[0].mxu0 %v951
        %v1021 = vpop.f32.mrb[0].mxu0
        %v1022 = vadd.f32 0.0, %v1021
        %v1023 = vpop.f32.mrb[0].mxu0
        %1024 = vdwg.mxu0
        %v1025 = vmul.f32 %v1022, 0.5
        %v1026 = vsel %vm859, %v1025, -1e+09
        %vm1027 = vcmask 64512
        %v1028 = vsel %vm1027, %v1026, -inf
        %1029 = vmax.xlane.f32.xlu0 %v1028
        %v1030 = vpop.xlane.xlu0 %1029
        %v1031 = vsub.f32 %v1026, %v1030
        %v1032 = vmul.f32 %v1031, 1.442695
        %v1033 = vpow.pop %v1032
        %v1034 = vsel %vm1027, %v1033, 0.0
        %1035 = vadd.xlane.f32.xlu0 %v1034
        %v1036 = vpop.xlane.xlu0 %1035
        %v1037 = vrcp.pop %v1036
        %v1038 = vmul.f32 %v1033, %v1037
        %1039 = vst.msk [vmem:[%s832] sm:$0xff] %vm1027, %v1038
        %1040 = vrot.lane.b32.xlu0 %v944, 64
        %v1041 = vpop.permute.xlu0 %1040
        %v1044 = vsel %vm1027, %v1038, 0
        %1046 = vmatprep.subr.mxu0 0.0
        %1047 = vmatpush1.msra.mxu0 %v1041
        %1048 = vmatprep.subr.mxu0 0.0
        %1049 = vmatpush1.msra.mxu0 0.0
        %1050 = vmatprep.subr.mxu0 0.0
        %1051 = vmatpush1.msra.mxu0 0.0
        %1052 = vmatprep.subr.mxu0 0.0
        %1053 = vmatpush1.msra.mxu0 0.0
        %1054 = vmatprep.subr.mxu0 0.0
        %1055 = vmatpush1.msra.mxu0 0.0
        %1056 = vmatprep.subr.mxu0 0.0
        %1057 = vmatpush1.msra.mxu0 0.0
        %1058 = vmatprep.subr.mxu0 0.0
        %1059 = vmatpush1.msra.mxu0 0.0
        %1060 = vmatprep.subr.mxu0 0.0
        %1061 = vmatpush1.msra.mxu0 0.0
        %1062 = vmatprep.subr.mxu0 0.0
        %1063 = vmatpush1.msra.mxu0 0.0
        %1064 = vmatprep.subr.mxu0 0.0
        %1065 = vmatpush1.msra.mxu0 0.0
        %1066 = vmatprep.subr.mxu0 0.0
        %1067 = vmatpush1.msra.mxu0 0.0
        %1068 = vmatprep.subr.mxu0 0.0
        %1069 = vmatpush1.msra.mxu0 0.0
        %1070 = vmatprep.subr.mxu0 0.0
        %1071 = vmatpush1.msra.mxu0 0.0
        %1072 = vmatprep.subr.mxu0 0.0
        %1073 = vmatpush1.msra.mxu0 0.0
        %1074 = vmatprep.subr.mxu0 0.0
        %1075 = vmatpush1.msra.mxu0 0.0
        %1076 = vmatprep.subr.mxu0 0.0
        %1077 = vmatpush1.msra.mxu0 0.0
        %1078 = vmatprep.subr.mxu0 0.0
        %1079 = vmatpush1.msra.mxu0 0.0
        %1080 = vmatprep.subr.mxu0 0.0
        %1081 = vmatpush1.msra.mxu0 0.0
        %1082 = vmatprep.subr.mxu0 0.0
        %1083 = vmatpush1.msra.mxu0 0.0
        %1084 = vmatprep.subr.mxu0 0.0
        %1085 = vmatpush1.msra.mxu0 0.0
        %1086 = vmatprep.subr.mxu0 0.0
        %1087 = vmatpush1.msra.mxu0 0.0
        %1088 = vmatprep.subr.mxu0 0.0
        %1089 = vmatpush1.msra.mxu0 0.0
        %1090 = vmatprep.subr.mxu0 0.0
        %1091 = vmatpush1.msra.mxu0 0.0
        %1092 = vmatprep.subr.mxu0 0.0
        %1093 = vmatpush1.msra.mxu0 0.0
        %1094 = vmatprep.subr.mxu0 0.0
        %1095 = vmatpush1.msra.mxu0 0.0
        %1096 = vmatprep.subr.mxu0 0.0
        %1097 = vmatpush1.msra.mxu0 0.0
        %1098 = vmatprep.subr.mxu0 0.0
        %1099 = vmatpush1.msra.mxu0 0.0
        %1100 = vmatprep.subr.mxu0 0.0
        %1101 = vmatpush1.msra.mxu0 0.0
        %1102 = vmatprep.subr.mxu0 0.0
        %1103 = vmatpush1.msra.mxu0 0.0
        %1104 = vmatprep.subr.mxu0 0.0
        %1105 = vmatpush1.msra.mxu0 0.0
        %1106 = vmatprep.subr.mxu0 0.0
        %1107 = vmatpush1.msra.mxu0 0.0
        %1108 = vmatprep.subr.mxu0 0.0
        %1109 = vmatpush1.msra.mxu0 0.0
        %1110 = vmatprep.mubr.f32.mxu0 0.0
        %1111 = vmatmul.mubr.f32.gmra.mrb[0].mxu0 %v1044
        %v1112 = vpop.f32.mrb[0].mxu0
        %v1113 = vadd.f32 0.0, %v1112
        %v1114 = vpop.f32.mrb[0].mxu0
        %1115 = vdwg.mxu0
        %1116 = vrot.lane.b32.xlu0 %v944, 124
        %v1117 = vpop.permute.xlu0 %1116
        %1118 = vrot.lane.b32.xlu0 %v944, 92
        %v1119 = vpop.permute.xlu0 %1118
        %v1120 = vsel %vm950, %v1117, 0
        %v1122 = vsel %vm950, %v1119, 0
        %1124 = vmatprep.subr.mxu0 0.0
        %1125 = vmatpush1.xpose.msra.mxu0 %v1122
        %1126 = vmatprep.subr.mxu0 0.0
        %1127 = vmatpush1.xpose.msra.mxu0 0.0
        %1128 = vmatprep.subr.mxu0 0.0
        %1129 = vmatpush1.xpose.msra.mxu0 0.0
        %1130 = vmatprep.subr.mxu0 0.0
        %1131 = vmatpush1.xpose.msra.mxu0 0.0
        %1132 = vmatprep.subr.mxu0 0.0
        %1133 = vmatpush1.xpose.msra.mxu0 0.0
        %1134 = vmatprep.subr.mxu0 0.0
        %1135 = vmatpush1.xpose.msra.mxu0 0.0
        %1136 = vmatprep.subr.mxu0 0.0
        %1137 = vmatpush1.xpose.msra.mxu0 0.0
        %1138 = vmatprep.subr.mxu0 0.0
        %1139 = vmatpush1.xpose.msra.mxu0 0.0
        %1140 = vmatprep.subr.mxu0 0.0
        %1141 = vmatpush1.xpose.msra.mxu0 0.0
        %1142 = vmatprep.subr.mxu0 0.0
        %1143 = vmatpush1.xpose.msra.mxu0 0.0
        %1144 = vmatprep.subr.mxu0 0.0
        %1145 = vmatpush1.xpose.msra.mxu0 0.0
        %1146 = vmatprep.subr.mxu0 0.0
        %1147 = vmatpush1.xpose.msra.mxu0 0.0
        %1148 = vmatprep.subr.mxu0 0.0
        %1149 = vmatpush1.xpose.msra.mxu0 0.0
        %1150 = vmatprep.subr.mxu0 0.0
        %1151 = vmatpush1.xpose.msra.mxu0 0.0
        %1152 = vmatprep.subr.mxu0 0.0
        %1153 = vmatpush1.xpose.msra.mxu0 0.0
        %1154 = vmatprep.subr.mxu0 0.0
        %1155 = vmatpush1.xpose.msra.mxu0 0.0
        %1156 = vmatprep.subr.mxu0 0.0
        %1157 = vmatpush1.xpose.msra.mxu0 0.0
        %1158 = vmatprep.subr.mxu0 0.0
        %1159 = vmatpush1.xpose.msra.mxu0 0.0
        %1160 = vmatprep.subr.mxu0 0.0
        %1161 = vmatpush1.xpose.msra.mxu0 0.0
        %1162 = vmatprep.subr.mxu0 0.0
        %1163 = vmatpush1.xpose.msra.mxu0 0.0
        %1164 = vmatprep.subr.mxu0 0.0
        %1165 = vmatpush1.xpose.msra.mxu0 0.0
        %1166 = vmatprep.subr.mxu0 0.0
        %1167 = vmatpush1.xpose.msra.mxu0 0.0
        %1168 = vmatprep.subr.mxu0 0.0
        %1169 = vmatpush1.xpose.msra.mxu0 0.0
        %1170 = vmatprep.subr.mxu0 0.0
        %1171 = vmatpush1.xpose.msra.mxu0 0.0
        %1172 = vmatprep.subr.mxu0 0.0
        %1173 = vmatpush1.xpose.msra.mxu0 0.0
        %1174 = vmatprep.subr.mxu0 0.0
        %1175 = vmatpush1.xpose.msra.mxu0 0.0
        %1176 = vmatprep.subr.mxu0 0.0
        %1177 = vmatpush1.xpose.msra.mxu0 0.0
        %1178 = vmatprep.subr.mxu0 0.0
        %1179 = vmatpush1.xpose.msra.mxu0 0.0
        %1180 = vmatprep.subr.mxu0 0.0
        %1181 = vmatpush1.xpose.msra.mxu0 0.0
        %1182 = vmatprep.subr.mxu0 0.0
        %1183 = vmatpush1.xpose.msra.mxu0 0.0
        %1184 = vmatprep.subr.mxu0 0.0
        %1185 = vmatpush1.xpose.msra.mxu0 0.0
        %1186 = vmatprep.subr.mxu0 0.0
        %1187 = vmatpush1.xpose.msra.mxu0 0.0
        %1188 = vmatprep.mubr.f32.mxu0 0.0
        %1189 = vmatmul.mubr.f32.gmra.mrb[0].mxu0 %v1120
        %v1190 = vpop.f32.mrb[0].mxu0
        %v1191 = vadd.f32 0.0, %v1190
        %v1192 = vpop.f32.mrb[0].mxu0
        %1193 = vdwg.mxu0
        %v1194 = vmul.f32 %v1191, 0.5
        %v1195 = vsel %vm859, %v1194, -1e+09
        %v1196 = vsel %vm1027, %v1195, -inf
        %1197 = vmax.xlane.f32.xlu0 %v1196
        %v1198 = vpop.xlane.xlu0 %1197
        %v1199 = vsub.f32 %v1195, %v1198
        %v1200 = vmul.f32 %v1199, 1.442695
        %v1201 = vpow.pop %v1200
        %v1202 = vsel %vm1027, %v1201, 0.0
        %1203 = vadd.xlane.f32.xlu0 %v1202
        %v1204 = vpop.xlane.xlu0 %1203
        %v1205 = vrcp.pop %v1204
        %v1206 = vmul.f32 %v1201, %v1205
        %s1207 = scalar_lea.vmem %s832, 8 [#allocation4]
        %1208 = vst.msk [vmem:[%s1207] sm:$0xff] %vm1027, %v1206
        %1209 = vrot.lane.b32.xlu0 %v944, 60
        %v1210 = vpop.permute.xlu0 %1209
        %v1213 = vsel %vm1027, %v1206, 0
        %1215 = vmatprep.subr.mxu0 0.0
        %1216 = vmatpush1.msra.mxu0 %v1210
        %1217 = vmatprep.subr.mxu0 0.0
        %1218 = vmatpush1.msra.mxu0 0.0
        %1219 = vmatprep.subr.mxu0 0.0
        %1220 = vmatpush1.msra.mxu0 0.0
        %1221 = vmatprep.subr.mxu0 0.0
        %1222 = vmatpush1.msra.mxu0 0.0
        %1223 = vmatprep.subr.mxu0 0.0
        %1224 = vmatpush1.msra.mxu0 0.0
        %1225 = vmatprep.subr.mxu0 0.0
        %1226 = vmatpush1.msra.mxu0 0.0
        %1227 = vmatprep.subr.mxu0 0.0
        %1228 = vmatpush1.msra.mxu0 0.0
        %1229 = vmatprep.subr.mxu0 0.0
        %1230 = vmatpush1.msra.mxu0 0.0
        %1231 = vmatprep.subr.mxu0 0.0
        %1232 = vmatpush1.msra.mxu0 0.0
        %1233 = vmatprep.subr.mxu0 0.0
        %1234 = vmatpush1.msra.mxu0 0.0
        %1235 = vmatprep.subr.mxu0 0.0
        %1236 = vmatpush1.msra.mxu0 0.0
        %1237 = vmatprep.subr.mxu0 0.0
        %1238 = vmatpush1.msra.mxu0 0.0
        %1239 = vmatprep.subr.mxu0 0.0
        %1240 = vmatpush1.msra.mxu0 0.0
        %1241 = vmatprep.subr.mxu0 0.0
        %1242 = vmatpush1.msra.mxu0 0.0
        %1243 = vmatprep.subr.mxu0 0.0
        %1244 = vmatpush1.msra.mxu0 0.0
        %1245 = vmatprep.subr.mxu0 0.0
        %1246 = vmatpush1.msra.mxu0 0.0
        %1247 = vmatprep.subr.mxu0 0.0
        %1248 = vmatpush1.msra.mxu0 0.0
        %1249 = vmatprep.subr.mxu0 0.0
        %1250 = vmatpush1.msra.mxu0 0.0
        %1251 = vmatprep.subr.mxu0 0.0
        %1252 = vmatpush1.msra.mxu0 0.0
        %1253 = vmatprep.subr.mxu0 0.0
        %1254 = vmatpush1.msra.mxu0 0.0
        %1255 = vmatprep.subr.mxu0 0.0
        %1256 = vmatpush1.msra.mxu0 0.0
        %1257 = vmatprep.subr.mxu0 0.0
        %1258 = vmatpush1.msra.mxu0 0.0
        %1259 = vmatprep.subr.mxu0 0.0
        %1260 = vmatpush1.msra.mxu0 0.0
        %1261 = vmatprep.subr.mxu0 0.0
        %1262 = vmatpush1.msra.mxu0 0.0
        %1263 = vmatprep.subr.mxu0 0.0
        %1264 = vmatpush1.msra.mxu0 0.0
        %1265 = vmatprep.subr.mxu0 0.0
        %1266 = vmatpush1.msra.mxu0 0.0
        %1267 = vmatprep.subr.mxu0 0.0
        %1268 = vmatpush1.msra.mxu0 0.0
        %1269 = vmatprep.subr.mxu0 0.0
        %1270 = vmatpush1.msra.mxu0 0.0
        %1271 = vmatprep.subr.mxu0 0.0
        %1272 = vmatpush1.msra.mxu0 0.0
        %1273 = vmatprep.subr.mxu0 0.0
        %1274 = vmatpush1.msra.mxu0 0.0
        %1275 = vmatprep.subr.mxu0 0.0
        %1276 = vmatpush1.msra.mxu0 0.0
        %1277 = vmatprep.subr.mxu0 0.0
        %1278 = vmatpush1.msra.mxu0 0.0
        %1279 = vmatprep.mubr.f32.mxu0 0.0
        %1280 = vmatmul.mubr.f32.gmra.mrb[0].mxu0 %v1213
        %v1281 = vpop.f32.mrb[0].mxu0
        %v1282 = vadd.f32 0.0, %v1281
        %v1283 = vpop.f32.mrb[0].mxu0
        %1284 = vdwg.mxu0
        %1285 = vrot.lane.b32.xlu0 %v944, 120
        %v1286 = vpop.permute.xlu0 %1285
        %1287 = vrot.lane.b32.xlu0 %v944, 88
        %v1288 = vpop.permute.xlu0 %1287
        %v1289 = vsel %vm950, %v1286, 0
        %v1291 = vsel %vm950, %v1288, 0
        %1293 = vmatprep.subr.mxu0 0.0
        %1294 = vmatpush1.xpose.msra.mxu0 %v1291
        %1295 = vmatprep.subr.mxu0 0.0
        %1296 = vmatpush1.xpose.msra.mxu0 0.0
        %1297 = vmatprep.subr.mxu0 0.0
        %1298 = vmatpush1.xpose.msra.mxu0 0.0
        %1299 = vmatprep.subr.mxu0 0.0
        %1300 = vmatpush1.xpose.msra.mxu0 0.0
        %1301 = vmatprep.subr.mxu0 0.0
        %1302 = vmatpush1.xpose.msra.mxu0 0.0
        %1303 = vmatprep.subr.mxu0 0.0
        %1304 = vmatpush1.xpose.msra.mxu0 0.0
        %1305 = vmatprep.subr.mxu0 0.0
        %1306 = vmatpush1.xpose.msra.mxu0 0.0
        %1307 = vmatprep.subr.mxu0 0.0
        %1308 = vmatpush1.xpose.msra.mxu0 0.0
        %1309 = vmatprep.subr.mxu0 0.0
        %1310 = vmatpush1.xpose.msra.mxu0 0.0
        %1311 = vmatprep.subr.mxu0 0.0
        %1312 = vmatpush1.xpose.msra.mxu0 0.0
        %1313 = vmatprep.subr.mxu0 0.0
        %1314 = vmatpush1.xpose.msra.mxu0 0.0
        %1315 = vmatprep.subr.mxu0 0.0
        %1316 = vmatpush1.xpose.msra.mxu0 0.0
        %1317 = vmatprep.subr.mxu0 0.0
        %1318 = vmatpush1.xpose.msra.mxu0 0.0
        %1319 = vmatprep.subr.mxu0 0.0
        %1320 = vmatpush1.xpose.msra.mxu0 0.0
        %1321 = vmatprep.subr.mxu0 0.0
        %1322 = vmatpush1.xpose.msra.mxu0 0.0
        %1323 = vmatprep.subr.mxu0 0.0
        %1324 = vmatpush1.xpose.msra.mxu0 0.0
        %1325 = vmatprep.subr.mxu0 0.0
        %1326 = vmatpush1.xpose.msra.mxu0 0.0
        %1327 = vmatprep.subr.mxu0 0.0
        %1328 = vmatpush1.xpose.msra.mxu0 0.0
        %1329 = vmatprep.subr.mxu0 0.0
        %1330 = vmatpush1.xpose.msra.mxu0 0.0
        %1331 = vmatprep.subr.mxu0 0.0
        %1332 = vmatpush1.xpose.msra.mxu0 0.0
        %1333 = vmatprep.subr.mxu0 0.0
        %1334 = vmatpush1.xpose.msra.mxu0 0.0
        %1335 = vmatprep.subr.mxu0 0.0
        %1336 = vmatpush1.xpose.msra.mxu0 0.0
        %1337 = vmatprep.subr.mxu0 0.0
        %1338 = vmatpush1.xpose.msra.mxu0 0.0
        %1339 = vmatprep.subr.mxu0 0.0
        %1340 = vmatpush1.xpose.msra.mxu0 0.0
        %1341 = vmatprep.subr.mxu0 0.0
        %1342 = vmatpush1.xpose.msra.mxu0 0.0
        %1343 = vmatprep.subr.mxu0 0.0
        %1344 = vmatpush1.xpose.msra.mxu0 0.0
        %1345 = vmatprep.subr.mxu0 0.0
        %1346 = vmatpush1.xpose.msra.mxu0 0.0
        %1347 = vmatprep.subr.mxu0 0.0
        %1348 = vmatpush1.xpose.msra.mxu0 0.0
        %1349 = vmatprep.subr.mxu0 0.0
        %1350 = vmatpush1.xpose.msra.mxu0 0.0
        %1351 = vmatprep.subr.mxu0 0.0
        %1352 = vmatpush1.xpose.msra.mxu0 0.0
        %1353 = vmatprep.subr.mxu0 0.0
        %1354 = vmatpush1.xpose.msra.mxu0 0.0
        %1355 = vmatprep.subr.mxu0 0.0
        %1356 = vmatpush1.xpose.msra.mxu0 0.0
        %1357 = vmatprep.mubr.f32.mxu0 0.0
        %1358 = vmatmul.mubr.f32.gmra.mrb[0].mxu0 %v1289
        %v1359 = vpop.f32.mrb[0].mxu0
        %v1360 = vadd.f32 0.0, %v1359
        %v1361 = vpop.f32.mrb[0].mxu0
        %1362 = vdwg.mxu0
        %v1363 = vmul.f32 %v1360, 0.5
        %v1364 = vsel %vm859, %v1363, -1e+09
        %v1365 = vsel %vm1027, %v1364, -inf
        %1366 = vmax.xlane.f32.xlu0 %v1365
        %v1367 = vpop.xlane.xlu0 %1366
        %v1368 = vsub.f32 %v1364, %v1367
        %v1369 = vmul.f32 %v1368, 1.442695
        %v1370 = vpow.pop %v1369
        %v1371 = vsel %vm1027, %v1370, 0.0
        %1372 = vadd.xlane.f32.xlu0 %v1371
        %v1373 = vpop.xlane.xlu0 %1372
        %v1374 = vrcp.pop %v1373
        %v1375 = vmul.f32 %v1370, %v1374
        %s1376 = scalar_lea.vmem %s832, 16 [#allocation4]
        %1377 = vst.msk [vmem:[%s1376] sm:$0xff] %vm1027, %v1375
        %1378 = vrot.lane.b32.xlu0 %v944, 56
        %v1379 = vpop.permute.xlu0 %1378
        %v1382 = vsel %vm1027, %v1375, 0
        %1384 = vmatprep.subr.mxu0 0.0
        %1385 = vmatpush1.msra.mxu0 %v1379
        %1386 = vmatprep.subr.mxu0 0.0
        %1387 = vmatpush1.msra.mxu0 0.0
        %1388 = vmatprep.subr.mxu0 0.0
        %1389 = vmatpush1.msra.mxu0 0.0
        %1390 = vmatprep.subr.mxu0 0.0
        %1391 = vmatpush1.msra.mxu0 0.0
        %1392 = vmatprep.subr.mxu0 0.0
        %1393 = vmatpush1.msra.mxu0 0.0
        %1394 = vmatprep.subr.mxu0 0.0
        %1395 = vmatpush1.msra.mxu0 0.0
        %1396 = vmatprep.subr.mxu0 0.0
        %1397 = vmatpush1.msra.mxu0 0.0
        %1398 = vmatprep.subr.mxu0 0.0
        %1399 = vmatpush1.msra.mxu0 0.0
        %1400 = vmatprep.subr.mxu0 0.0
        %1401 = vmatpush1.msra.mxu0 0.0
        %1402 = vmatprep.subr.mxu0 0.0
        %1403 = vmatpush1.msra.mxu0 0.0
        %1404 = vmatprep.subr.mxu0 0.0
        %1405 = vmatpush1.msra.mxu0 0.0
        %1406 = vmatprep.subr.mxu0 0.0
        %1407 = vmatpush1.msra.mxu0 0.0
        %1408 = vmatprep.subr.mxu0 0.0
        %1409 = vmatpush1.msra.mxu0 0.0
        %1410 = vmatprep.subr.mxu0 0.0
        %1411 = vmatpush1.msra.mxu0 0.0
        %1412 = vmatprep.subr.mxu0 0.0
        %1413 = vmatpush1.msra.mxu0 0.0
        %1414 = vmatprep.subr.mxu0 0.0
        %1415 = vmatpush1.msra.mxu0 0.0
        %1416 = vmatprep.subr.mxu0 0.0
        %1417 = vmatpush1.msra.mxu0 0.0
        %1418 = vmatprep.subr.mxu0 0.0
        %1419 = vmatpush1.msra.mxu0 0.0
        %1420 = vmatprep.subr.mxu0 0.0
        %1421 = vmatpush1.msra.mxu0 0.0
        %1422 = vmatprep.subr.mxu0 0.0
        %1423 = vmatpush1.msra.mxu0 0.0
        %1424 = vmatprep.subr.mxu0 0.0
        %1425 = vmatpush1.msra.mxu0 0.0
        %1426 = vmatprep.subr.mxu0 0.0
        %1427 = vmatpush1.msra.mxu0 0.0
        %1428 = vmatprep.subr.mxu0 0.0
        %1429 = vmatpush1.msra.mxu0 0.0
        %1430 = vmatprep.subr.mxu0 0.0
        %1431 = vmatpush1.msra.mxu0 0.0
        %1432 = vmatprep.subr.mxu0 0.0
        %1433 = vmatpush1.msra.mxu0 0.0
        %1434 = vmatprep.subr.mxu0 0.0
        %1435 = vmatpush1.msra.mxu0 0.0
        %1436 = vmatprep.subr.mxu0 0.0
        %1437 = vmatpush1.msra.mxu0 0.0
        %1438 = vmatprep.subr.mxu0 0.0
        %1439 = vmatpush1.msra.mxu0 0.0
        %1440 = vmatprep.subr.mxu0 0.0
        %1441 = vmatpush1.msra.mxu0 0.0
        %1442 = vmatprep.subr.mxu0 0.0
        %1443 = vmatpush1.msra.mxu0 0.0
        %1444 = vmatprep.subr.mxu0 0.0
        %1445 = vmatpush1.msra.mxu0 0.0
        %1446 = vmatprep.subr.mxu0 0.0
        %1447 = vmatpush1.msra.mxu0 0.0
        %1448 = vmatprep.mubr.f32.mxu0 0.0
        %1449 = vmatmul.mubr.f32.gmra.mrb[0].mxu0 %v1382
        %v1450 = vpop.f32.mrb[0].mxu0
        %v1451 = vadd.f32 0.0, %v1450
        %v1452 = vpop.f32.mrb[0].mxu0
        %1453 = vdwg.mxu0
        %1454 = vrot.lane.b32.xlu0 %v944, 116
        %v1455 = vpop.permute.xlu0 %1454
        %1456 = vrot.lane.b32.xlu0 %v944, 84
        %v1457 = vpop.permute.xlu0 %1456
        %v1458 = vsel %vm950, %v1455, 0
        %v1460 = vsel %vm950, %v1457, 0
        %1462 = vmatprep.subr.mxu0 0.0
        %1463 = vmatpush1.xpose.msra.mxu0 %v1460
        %1464 = vmatprep.subr.mxu0 0.0
        %1465 = vmatpush1.xpose.msra.mxu0 0.0
        %1466 = vmatprep.subr.mxu0 0.0
        %1467 = vmatpush1.xpose.msra.mxu0 0.0
        %1468 = vmatprep.subr.mxu0 0.0
        %1469 = vmatpush1.xpose.msra.mxu0 0.0
        %1470 = vmatprep.subr.mxu0 0.0
        %1471 = vmatpush1.xpose.msra.mxu0 0.0
        %1472 = vmatprep.subr.mxu0 0.0
        %1473 = vmatpush1.xpose.msra.mxu0 0.0
        %1474 = vmatprep.subr.mxu0 0.0
        %1475 = vmatpush1.xpose.msra.mxu0 0.0
        %1476 = vmatprep.subr.mxu0 0.0
        %1477 = vmatpush1.xpose.msra.mxu0 0.0
        %1478 = vmatprep.subr.mxu0 0.0
        %1479 = vmatpush1.xpose.msra.mxu0 0.0
        %1480 = vmatprep.subr.mxu0 0.0
        %1481 = vmatpush1.xpose.msra.mxu0 0.0
        %1482 = vmatprep.subr.mxu0 0.0
        %1483 = vmatpush1.xpose.msra.mxu0 0.0
        %1484 = vmatprep.subr.mxu0 0.0
        %1485 = vmatpush1.xpose.msra.mxu0 0.0
        %1486 = vmatprep.subr.mxu0 0.0
        %1487 = vmatpush1.xpose.msra.mxu0 0.0
        %1488 = vmatprep.subr.mxu0 0.0
        %1489 = vmatpush1.xpose.msra.mxu0 0.0
        %1490 = vmatprep.subr.mxu0 0.0
        %1491 = vmatpush1.xpose.msra.mxu0 0.0
        %1492 = vmatprep.subr.mxu0 0.0
        %1493 = vmatpush1.xpose.msra.mxu0 0.0
        %1494 = vmatprep.subr.mxu0 0.0
        %1495 = vmatpush1.xpose.msra.mxu0 0.0
        %1496 = vmatprep.subr.mxu0 0.0
        %1497 = vmatpush1.xpose.msra.mxu0 0.0
        %1498 = vmatprep.subr.mxu0 0.0
        %1499 = vmatpush1.xpose.msra.mxu0 0.0
        %1500 = vmatprep.subr.mxu0 0.0
        %1501 = vmatpush1.xpose.msra.mxu0 0.0
        %1502 = vmatprep.subr.mxu0 0.0
        %1503 = vmatpush1.xpose.msra.mxu0 0.0
        %1504 = vmatprep.subr.mxu0 0.0
        %1505 = vmatpush1.xpose.msra.mxu0 0.0
        %1506 = vmatprep.subr.mxu0 0.0
        %1507 = vmatpush1.xpose.msra.mxu0 0.0
        %1508 = vmatprep.subr.mxu0 0.0
        %1509 = vmatpush1.xpose.msra.mxu0 0.0
        %1510 = vmatprep.subr.mxu0 0.0
        %1511 = vmatpush1.xpose.msra.mxu0 0.0
        %1512 = vmatprep.subr.mxu0 0.0
        %1513 = vmatpush1.xpose.msra.mxu0 0.0
        %1514 = vmatprep.subr.mxu0 0.0
        %1515 = vmatpush1.xpose.msra.mxu0 0.0
        %1516 = vmatprep.subr.mxu0 0.0
        %1517 = vmatpush1.xpose.msra.mxu0 0.0
        %1518 = vmatprep.subr.mxu0 0.0
        %1519 = vmatpush1.xpose.msra.mxu0 0.0
        %1520 = vmatprep.subr.mxu0 0.0
        %1521 = vmatpush1.xpose.msra.mxu0 0.0
        %1522 = vmatprep.subr.mxu0 0.0
        %1523 = vmatpush1.xpose.msra.mxu0 0.0
        %1524 = vmatprep.subr.mxu0 0.0
        %1525 = vmatpush1.xpose.msra.mxu0 0.0
        %1526 = vmatprep.mubr.f32.mxu0 0.0
        %1527 = vmatmul.mubr.f32.gmra.mrb[0].mxu0 %v1458
        %v1528 = vpop.f32.mrb[0].mxu0
        %v1529 = vadd.f32 0.0, %v1528
        %v1530 = vpop.f32.mrb[0].mxu0
        %1531 = vdwg.mxu0
        %v1532 = vmul.f32 %v1529, 0.5
        %v1533 = vsel %vm859, %v1532, -1e+09
        %v1534 = vsel %vm1027, %v1533, -inf
        %1535 = vmax.xlane.f32.xlu0 %v1534
        %v1536 = vpop.xlane.xlu0 %1535
        %v1537 = vsub.f32 %v1533, %v1536
        %v1538 = vmul.f32 %v1537, 1.442695
        %v1539 = vpow.pop %v1538
        %v1540 = vsel %vm1027, %v1539, 0.0
        %1541 = vadd.xlane.f32.xlu0 %v1540
        %v1542 = vpop.xlane.xlu0 %1541
        %v1543 = vrcp.pop %v1542
        %v1544 = vmul.f32 %v1539, %v1543
        %s1545 = scalar_lea.vmem %s832, 24 [#allocation4]
        %1546 = vst.msk [vmem:[%s1545] sm:$0xff] %vm1027, %v1544
        %1547 = vrot.lane.b32.xlu0 %v944, 52
        %v1548 = vpop.permute.xlu0 %1547
        %v1551 = vsel %vm1027, %v1544, 0
        %1553 = vmatprep.subr.mxu0 0.0
        %1554 = vmatpush1.msra.mxu0 %v1548
        %1555 = vmatprep.subr.mxu0 0.0
        %1556 = vmatpush1.msra.mxu0 0.0
        %1557 = vmatprep.subr.mxu0 0.0
        %1558 = vmatpush1.msra.mxu0 0.0
        %1559 = vmatprep.subr.mxu0 0.0
        %1560 = vmatpush1.msra.mxu0 0.0
        %1561 = vmatprep.subr.mxu0 0.0
        %1562 = vmatpush1.msra.mxu0 0.0
        %1563 = vmatprep.subr.mxu0 0.0
        %1564 = vmatpush1.msra.mxu0 0.0
        %1565 = vmatprep.subr.mxu0 0.0
        %1566 = vmatpush1.msra.mxu0 0.0
        %1567 = vmatprep.subr.mxu0 0.0
        %1568 = vmatpush1.msra.mxu0 0.0
        %1569 = vmatprep.subr.mxu0 0.0
        %1570 = vmatpush1.msra.mxu0 0.0
        %1571 = vmatprep.subr.mxu0 0.0
        %1572 = vmatpush1.msra.mxu0 0.0
        %1573 = vmatprep.subr.mxu0 0.0
        %1574 = vmatpush1.msra.mxu0 0.0
        %1575 = vmatprep.subr.mxu0 0.0
        %1576 = vmatpush1.msra.mxu0 0.0
        %1577 = vmatprep.subr.mxu0 0.0
        %1578 = vmatpush1.msra.mxu0 0.0
        %1579 = vmatprep.subr.mxu0 0.0
        %1580 = vmatpush1.msra.mxu0 0.0
        %1581 = vmatprep.subr.mxu0 0.0
        %1582 = vmatpush1.msra.mxu0 0.0
        %1583 = vmatprep.subr.mxu0 0.0
        %1584 = vmatpush1.msra.mxu0 0.0
        %1585 = vmatprep.subr.mxu0 0.0
        %1586 = vmatpush1.msra.mxu0 0.0
        %1587 = vmatprep.subr.mxu0 0.0
        %1588 = vmatpush1.msra.mxu0 0.0
        %1589 = vmatprep.subr.mxu0 0.0
        %1590 = vmatpush1.msra.mxu0 0.0
        %1591 = vmatprep.subr.mxu0 0.0
        %1592 = vmatpush1.msra.mxu0 0.0
        %1593 = vmatprep.subr.mxu0 0.0
        %1594 = vmatpush1.msra.mxu0 0.0
        %1595 = vmatprep.subr.mxu0 0.0
        %1596 = vmatpush1.msra.mxu0 0.0
        %1597 = vmatprep.subr.mxu0 0.0
        %1598 = vmatpush1.msra.mxu0 0.0
        %1599 = vmatprep.subr.mxu0 0.0
        %1600 = vmatpush1.msra.mxu0 0.0
        %1601 = vmatprep.subr.mxu0 0.0
        %1602 = vmatpush1.msra.mxu0 0.0
        %1603 = vmatprep.subr.mxu0 0.0
        %1604 = vmatpush1.msra.mxu0 0.0
        %1605 = vmatprep.subr.mxu0 0.0
        %1606 = vmatpush1.msra.mxu0 0.0
        %1607 = vmatprep.subr.mxu0 0.0
        %1608 = vmatpush1.msra.mxu0 0.0
        %1609 = vmatprep.subr.mxu0 0.0
        %1610 = vmatpush1.msra.mxu0 0.0
        %1611 = vmatprep.subr.mxu0 0.0
        %1612 = vmatpush1.msra.mxu0 0.0
        %1613 = vmatprep.subr.mxu0 0.0
        %1614 = vmatpush1.msra.mxu0 0.0
        %1615 = vmatprep.subr.mxu0 0.0
        %1616 = vmatpush1.msra.mxu0 0.0
        %1617 = vmatprep.mubr.f32.mxu0 0.0
        %1618 = vmatmul.mubr.f32.gmra.mrb[0].mxu0 %v1551
        %v1619 = vpop.f32.mrb[0].mxu0
        %v1620 = vadd.f32 0.0, %v1619
        %v1621 = vpop.f32.mrb[0].mxu0
        %1622 = vdwg.mxu0
        %1623 = vrot.lane.b32.xlu0 %v944, 112
        %v1624 = vpop.permute.xlu0 %1623
        %1625 = vrot.lane.b32.xlu0 %v944, 80
        %v1626 = vpop.permute.xlu0 %1625
        %v1627 = vsel %vm950, %v1624, 0
        %v1629 = vsel %vm950, %v1626, 0
        %1631 = vmatprep.subr.mxu0 0.0
        %1632 = vmatpush1.xpose.msra.mxu0 %v1629
        %1633 = vmatprep.subr.mxu0 0.0
        %1634 = vmatpush1.xpose.msra.mxu0 0.0
        %1635 = vmatprep.subr.mxu0 0.0
        %1636 = vmatpush1.xpose.msra.mxu0 0.0
        %1637 = vmatprep.subr.mxu0 0.0
        %1638 = vmatpush1.xpose.msra.mxu0 0.0
        %1639 = vmatprep.subr.mxu0 0.0
        %1640 = vmatpush1.xpose.msra.mxu0 0.0
        %1641 = vmatprep.subr.mxu0 0.0
        %1642 = vmatpush1.xpose.msra.mxu0 0.0
        %1643 = vmatprep.subr.mxu0 0.0
        %1644 = vmatpush1.xpose.msra.mxu0 0.0
        %1645 = vmatprep.subr.mxu0 0.0
        %1646 = vmatpush1.xpose.msra.mxu0 0.0
        %1647 = vmatprep.subr.mxu0 0.0
        %1648 = vmatpush1.xpose.msra.mxu0 0.0
        %1649 = vmatprep.subr.mxu0 0.0
        %1650 = vmatpush1.xpose.msra.mxu0 0.0
        %1651 = vmatprep.subr.mxu0 0.0
        %1652 = vmatpush1.xpose.msra.mxu0 0.0
        %1653 = vmatprep.subr.mxu0 0.0
        %1654 = vmatpush1.xpose.msra.mxu0 0.0
        %1655 = vmatprep.subr.mxu0 0.0
        %1656 = vmatpush1.xpose.msra.mxu0 0.0
        %1657 = vmatprep.subr.mxu0 0.0
        %1658 = vmatpush1.xpose.msra.mxu0 0.0
        %1659 = vmatprep.subr.mxu0 0.0
        %1660 = vmatpush1.xpose.msra.mxu0 0.0
        %1661 = vmatprep.subr.mxu0 0.0
        %1662 = vmatpush1.xpose.msra.mxu0 0.0
        %1663 = vmatprep.subr.mxu0 0.0
        %1664 = vmatpush1.xpose.msra.mxu0 0.0
        %1665 = vmatprep.subr.mxu0 0.0
        %1666 = vmatpush1.xpose.msra.mxu0 0.0
        %1667 = vmatprep.subr.mxu0 0.0
        %1668 = vmatpush1.xpose.msra.mxu0 0.0
        %1669 = vmatprep.subr.mxu0 0.0
        %1670 = vmatpush1.xpose.msra.mxu0 0.0
        %1671 = vmatprep.subr.mxu0 0.0
        %1672 = vmatpush1.xpose.msra.mxu0 0.0
        %1673 = vmatprep.subr.mxu0 0.0
        %1674 = vmatpush1.xpose.msra.mxu0 0.0
        %1675 = vmatprep.subr.mxu0 0.0
        %1676 = vmatpush1.xpose.msra.mxu0 0.0
        %1677 = vmatprep.subr.mxu0 0.0
        %1678 = vmatpush1.xpose.msra.mxu0 0.0
        %1679 = vmatprep.subr.mxu0 0.0
        %1680 = vmatpush1.xpose.msra.mxu0 0.0
        %1681 = vmatprep.subr.mxu0 0.0
        %1682 = vmatpush1.xpose.msra.mxu0 0.0
        %1683 = vmatprep.subr.mxu0 0.0
        %1684 = vmatpush1.xpose.msra.mxu0 0.0
        %1685 = vmatprep.subr.mxu0 0.0
        %1686 = vmatpush1.xpose.msra.mxu0 0.0
        %1687 = vmatprep.subr.mxu0 0.0
        %1688 = vmatpush1.xpose.msra.mxu0 0.0
        %1689 = vmatprep.subr.mxu0 0.0
        %1690 = vmatpush1.xpose.msra.mxu0 0.0
        %1691 = vmatprep.subr.mxu0 0.0
        %1692 = vmatpush1.xpose.msra.mxu0 0.0
        %1693 = vmatprep.subr.mxu0 0.0
        %1694 = vmatpush1.xpose.msra.mxu0 0.0
        %1695 = vmatprep.mubr.f32.mxu0 0.0
        %1696 = vmatmul.mubr.f32.gmra.mrb[0].mxu0 %v1627
        %v1697 = vpop.f32.mrb[0].mxu0
        %v1698 = vadd.f32 0.0, %v1697
        %v1699 = vpop.f32.mrb[0].mxu0
        %1700 = vdwg.mxu0
        %v1701 = vmul.f32 %v1698, 0.5
        %v1702 = vsel %vm859, %v1701, -1e+09
        %v1703 = vsel %vm1027, %v1702, -inf
        %1704 = vmax.xlane.f32.xlu0 %v1703
        %v1705 = vpop.xlane.xlu0 %1704
        %v1706 = vsub.f32 %v1702, %v1705
        %v1707 = vmul.f32 %v1706, 1.442695
        %v1708 = vpow.pop %v1707
        %v1709 = vsel %vm1027, %v1708, 0.0
        %1710 = vadd.xlane.f32.xlu0 %v1709
        %v1711 = vpop.xlane.xlu0 %1710
        %v1712 = vrcp.pop %v1711
        %v1713 = vmul.f32 %v1708, %v1712
        %s1714 = scalar_lea.vmem %s832, 32 [#allocation4]
        %1715 = vst.msk [vmem:[%s1714] sm:$0xff] %vm1027, %v1713
        %1716 = vrot.lane.b32.xlu0 %v944, 48
        %v1717 = vpop.permute.xlu0 %1716
        %v1720 = vsel %vm1027, %v1713, 0
        %1722 = vmatprep.subr.mxu0 0.0
        %1723 = vmatpush1.msra.mxu0 %v1717
        %1724 = vmatprep.subr.mxu0 0.0
        %1725 = vmatpush1.msra.mxu0 0.0
        %1726 = vmatprep.subr.mxu0 0.0
        %1727 = vmatpush1.msra.mxu0 0.0
        %1728 = vmatprep.subr.mxu0 0.0
        %1729 = vmatpush1.msra.mxu0 0.0
        %1730 = vmatprep.subr.mxu0 0.0
        %1731 = vmatpush1.msra.mxu0 0.0
        %1732 = vmatprep.subr.mxu0 0.0
        %1733 = vmatpush1.msra.mxu0 0.0
        %1734 = vmatprep.subr.mxu0 0.0
        %1735 = vmatpush1.msra.mxu0 0.0
        %1736 = vmatprep.subr.mxu0 0.0
        %1737 = vmatpush1.msra.mxu0 0.0
        %1738 = vmatprep.subr.mxu0 0.0
        %1739 = vmatpush1.msra.mxu0 0.0
        %1740 = vmatprep.subr.mxu0 0.0
        %1741 = vmatpush1.msra.mxu0 0.0
        %1742 = vmatprep.subr.mxu0 0.0
        %1743 = vmatpush1.msra.mxu0 0.0
        %1744 = vmatprep.subr.mxu0 0.0
        %1745 = vmatpush1.msra.mxu0 0.0
        %1746 = vmatprep.subr.mxu0 0.0
        %1747 = vmatpush1.msra.mxu0 0.0
        %1748 = vmatprep.subr.mxu0 0.0
        %1749 = vmatpush1.msra.mxu0 0.0
        %1750 = vmatprep.subr.mxu0 0.0
        %1751 = vmatpush1.msra.mxu0 0.0
        %1752 = vmatprep.subr.mxu0 0.0
        %1753 = vmatpush1.msra.mxu0 0.0
        %1754 = vmatprep.subr.mxu0 0.0
        %1755 = vmatpush1.msra.mxu0 0.0
        %1756 = vmatprep.subr.mxu0 0.0
        %1757 = vmatpush1.msra.mxu0 0.0
        %1758 = vmatprep.subr.mxu0 0.0
        %1759 = vmatpush1.msra.mxu0 0.0
        %1760 = vmatprep.subr.mxu0 0.0
        %1761 = vmatpush1.msra.mxu0 0.0
        %1762 = vmatprep.subr.mxu0 0.0
        %1763 = vmatpush1.msra.mxu0 0.0
        %1764 = vmatprep.subr.mxu0 0.0
        %1765 = vmatpush1.msra.mxu0 0.0
        %1766 = vmatprep.subr.mxu0 0.0
        %1767 = vmatpush1.msra.mxu0 0.0
        %1768 = vmatprep.subr.mxu0 0.0
        %1769 = vmatpush1.msra.mxu0 0.0
        %1770 = vmatprep.subr.mxu0 0.0
        %1771 = vmatpush1.msra.mxu0 0.0
        %1772 = vmatprep.subr.mxu0 0.0
        %1773 = vmatpush1.msra.mxu0 0.0
        %1774 = vmatprep.subr.mxu0 0.0
        %1775 = vmatpush1.msra.mxu0 0.0
        %1776 = vmatprep.subr.mxu0 0.0
        %1777 = vmatpush1.msra.mxu0 0.0
        %1778 = vmatprep.subr.mxu0 0.0
        %1779 = vmatpush1.msra.mxu0 0.0
        %1780 = vmatprep.subr.mxu0 0.0
        %1781 = vmatpush1.msra.mxu0 0.0
        %1782 = vmatprep.subr.mxu0 0.0
        %1783 = vmatpush1.msra.mxu0 0.0
        %1784 = vmatprep.subr.mxu0 0.0
        %1785 = vmatpush1.msra.mxu0 0.0
        %1786 = vmatprep.mubr.f32.mxu0 0.0
        %1787 = vmatmul.mubr.f32.gmra.mrb[0].mxu0 %v1720
        %v1788 = vpop.f32.mrb[0].mxu0
        %v1789 = vadd.f32 0.0, %v1788
        %v1790 = vpop.f32.mrb[0].mxu0
        %1791 = vdwg.mxu0
        %1792 = vrot.lane.b32.xlu0 %v944, 108
        %v1793 = vpop.permute.xlu0 %1792
        %1794 = vrot.lane.b32.xlu0 %v944, 76
        %v1795 = vpop.permute.xlu0 %1794
        %v1796 = vsel %vm950, %v1793, 0
        %v1798 = vsel %vm950, %v1795, 0
        %1800 = vmatprep.subr.mxu0 0.0
        %1801 = vmatpush1.xpose.msra.mxu0 %v1798
        %1802 = vmatprep.subr.mxu0 0.0
        %1803 = vmatpush1.xpose.msra.mxu0 0.0
        %1804 = vmatprep.subr.mxu0 0.0
        %1805 = vmatpush1.xpose.msra.mxu0 0.0
        %1806 = vmatprep.subr.mxu0 0.0
        %1807 = vmatpush1.xpose.msra.mxu0 0.0
        %1808 = vmatprep.subr.mxu0 0.0
        %1809 = vmatpush1.xpose.msra.mxu0 0.0
        %1810 = vmatprep.subr.mxu0 0.0
        %1811 = vmatpush1.xpose.msra.mxu0 0.0
        %1812 = vmatprep.subr.mxu0 0.0
        %1813 = vmatpush1.xpose.msra.mxu0 0.0
        %1814 = vmatprep.subr.mxu0 0.0
        %1815 = vmatpush1.xpose.msra.mxu0 0.0
        %1816 = vmatprep.subr.mxu0 0.0
        %1817 = vmatpush1.xpose.msra.mxu0 0.0
        %1818 = vmatprep.subr.mxu0 0.0
        %1819 = vmatpush1.xpose.msra.mxu0 0.0
        %1820 = vmatprep.subr.mxu0 0.0
        %1821 = vmatpush1.xpose.msra.mxu0 0.0
        %1822 = vmatprep.subr.mxu0 0.0
        %1823 = vmatpush1.xpose.msra.mxu0 0.0
        %1824 = vmatprep.subr.mxu0 0.0
        %1825 = vmatpush1.xpose.msra.mxu0 0.0
        %1826 = vmatprep.subr.mxu0 0.0
        %1827 = vmatpush1.xpose.msra.mxu0 0.0
        %1828 = vmatprep.subr.mxu0 0.0
        %1829 = vmatpush1.xpose.msra.mxu0 0.0
        %1830 = vmatprep.subr.mxu0 0.0
        %1831 = vmatpush1.xpose.msra.mxu0 0.0
        %1832 = vmatprep.subr.mxu0 0.0
        %1833 = vmatpush1.xpose.msra.mxu0 0.0
        %1834 = vmatprep.subr.mxu0 0.0
        %1835 = vmatpush1.xpose.msra.mxu0 0.0
        %1836 = vmatprep.subr.mxu0 0.0
        %1837 = vmatpush1.xpose.msra.mxu0 0.0
        %1838 = vmatprep.subr.mxu0 0.0
        %1839 = vmatpush1.xpose.msra.mxu0 0.0
        %1840 = vmatprep.subr.mxu0 0.0
        %1841 = vmatpush1.xpose.msra.mxu0 0.0
        %1842 = vmatprep.subr.mxu0 0.0
        %1843 = vmatpush1.xpose.msra.mxu0 0.0
        %1844 = vmatprep.subr.mxu0 0.0
        %1845 = vmatpush1.xpose.msra.mxu0 0.0
        %1846 = vmatprep.subr.mxu0 0.0
        %1847 = vmatpush1.xpose.msra.mxu0 0.0
        %1848 = vmatprep.subr.mxu0 0.0
        %1849 = vmatpush1.xpose.msra.mxu0 0.0
        %1850 = vmatprep.subr.mxu0 0.0
        %1851 = vmatpush1.xpose.msra.mxu0 0.0
        %1852 = vmatprep.subr.mxu0 0.0
        %1853 = vmatpush1.xpose.msra.mxu0 0.0
        %1854 = vmatprep.subr.mxu0 0.0
        %1855 = vmatpush1.xpose.msra.mxu0 0.0
        %1856 = vmatprep.subr.mxu0 0.0
        %1857 = vmatpush1.xpose.msra.mxu0 0.0
        %1858 = vmatprep.subr.mxu0 0.0
        %1859 = vmatpush1.xpose.msra.mxu0 0.0
        %1860 = vmatprep.subr.mxu0 0.0
        %1861 = vmatpush1.xpose.msra.mxu0 0.0
        %1862 = vmatprep.subr.mxu0 0.0
        %1863 = vmatpush1.xpose.msra.mxu0 0.0
        %1864 = vmatprep.mubr.f32.mxu0 0.0
        %1865 = vmatmul.mubr.f32.gmra.mrb[0].mxu0 %v1796
        %v1866 = vpop.f32.mrb[0].mxu0
        %v1867 = vadd.f32 0.0, %v1866
        %v1868 = vpop.f32.mrb[0].mxu0
        %1869 = vdwg.mxu0
        %v1870 = vmul.f32 %v1867, 0.5
        %v1871 = vsel %vm859, %v1870, -1e+09
        %v1872 = vsel %vm1027, %v1871, -inf
        %1873 = vmax.xlane.f32.xlu0 %v1872
        %v1874 = vpop.xlane.xlu0 %1873
        %v1875 = vsub.f32 %v1871, %v1874
        %v1876 = vmul.f32 %v1875, 1.442695
        %v1877 = vpow.pop %v1876
        %v1878 = vsel %vm1027, %v1877, 0.0
        %1879 = vadd.xlane.f32.xlu0 %v1878
        %v1880 = vpop.xlane.xlu0 %1879
        %v1881 = vrcp.pop %v1880
        %v1882 = vmul.f32 %v1877, %v1881
        %s1883 = scalar_lea.vmem %s832, 40 [#allocation4]
        %1884 = vst.msk [vmem:[%s1883] sm:$0xff] %vm1027, %v1882
        %1885 = vrot.lane.b32.xlu0 %v944, 44
        %v1886 = vpop.permute.xlu0 %1885
        %v1889 = vsel %vm1027, %v1882, 0
        %1891 = vmatprep.subr.mxu0 0.0
        %1892 = vmatpush1.msra.mxu0 %v1886
        %1893 = vmatprep.subr.mxu0 0.0
        %1894 = vmatpush1.msra.mxu0 0.0
        %1895 = vmatprep.subr.mxu0 0.0
        %1896 = vmatpush1.msra.mxu0 0.0
        %1897 = vmatprep.subr.mxu0 0.0
        %1898 = vmatpush1.msra.mxu0 0.0
        %1899 = vmatprep.subr.mxu0 0.0
        %1900 = vmatpush1.msra.mxu0 0.0
        %1901 = vmatprep.subr.mxu0 0.0
        %1902 = vmatpush1.msra.mxu0 0.0
        %1903 = vmatprep.subr.mxu0 0.0
        %1904 = vmatpush1.msra.mxu0 0.0
        %1905 = vmatprep.subr.mxu0 0.0
        %1906 = vmatpush1.msra.mxu0 0.0
        %1907 = vmatprep.subr.mxu0 0.0
        %1908 = vmatpush1.msra.mxu0 0.0
        %1909 = vmatprep.subr.mxu0 0.0
        %1910 = vmatpush1.msra.mxu0 0.0
        %1911 = vmatprep.subr.mxu0 0.0
        %1912 = vmatpush1.msra.mxu0 0.0
        %1913 = vmatprep.subr.mxu0 0.0
        %1914 = vmatpush1.msra.mxu0 0.0
        %1915 = vmatprep.subr.mxu0 0.0
        %1916 = vmatpush1.msra.mxu0 0.0
        %1917 = vmatprep.subr.mxu0 0.0
        %1918 = vmatpush1.msra.mxu0 0.0
        %1919 = vmatprep.subr.mxu0 0.0
        %1920 = vmatpush1.msra.mxu0 0.0
        %1921 = vmatprep.subr.mxu0 0.0
        %1922 = vmatpush1.msra.mxu0 0.0
        %1923 = vmatprep.subr.mxu0 0.0
        %1924 = vmatpush1.msra.mxu0 0.0
        %1925 = vmatprep.subr.mxu0 0.0
        %1926 = vmatpush1.msra.mxu0 0.0
        %1927 = vmatprep.subr.mxu0 0.0
        %1928 = vmatpush1.msra.mxu0 0.0
        %1929 = vmatprep.subr.mxu0 0.0
        %1930 = vmatpush1.msra.mxu0 0.0
        %1931 = vmatprep.subr.mxu0 0.0
        %1932 = vmatpush1.msra.mxu0 0.0
        %1933 = vmatprep.subr.mxu0 0.0
        %1934 = vmatpush1.msra.mxu0 0.0
        %1935 = vmatprep.subr.mxu0 0.0
        %1936 = vmatpush1.msra.mxu0 0.0
        %1937 = vmatprep.subr.mxu0 0.0
        %1938 = vmatpush1.msra.mxu0 0.0
        %1939 = vmatprep.subr.mxu0 0.0
        %1940 = vmatpush1.msra.mxu0 0.0
        %1941 = vmatprep.subr.mxu0 0.0
        %1942 = vmatpush1.msra.mxu0 0.0
        %1943 = vmatprep.subr.mxu0 0.0
        %1944 = vmatpush1.msra.mxu0 0.0
        %1945 = vmatprep.subr.mxu0 0.0
        %1946 = vmatpush1.msra.mxu0 0.0
        %1947 = vmatprep.subr.mxu0 0.0
        %1948 = vmatpush1.msra.mxu0 0.0
        %1949 = vmatprep.subr.mxu0 0.0
        %1950 = vmatpush1.msra.mxu0 0.0
        %1951 = vmatprep.subr.mxu0 0.0
        %1952 = vmatpush1.msra.mxu0 0.0
        %1953 = vmatprep.subr.mxu0 0.0
        %1954 = vmatpush1.msra.mxu0 0.0
        %1955 = vmatprep.mubr.f32.mxu0 0.0
        %1956 = vmatmul.mubr.f32.gmra.mrb[0].mxu0 %v1889
        %v1957 = vpop.f32.mrb[0].mxu0
        %v1958 = vadd.f32 0.0, %v1957
        %v1959 = vpop.f32.mrb[0].mxu0
        %1960 = vdwg.mxu0
        %1961 = vrot.lane.b32.xlu0 %v944, 104
        %v1962 = vpop.permute.xlu0 %1961
        %1963 = vrot.lane.b32.xlu0 %v944, 72
        %v1964 = vpop.permute.xlu0 %1963
        %v1965 = vsel %vm950, %v1962, 0
        %v1967 = vsel %vm950, %v1964, 0
        %1969 = vmatprep.subr.mxu0 0.0
        %1970 = vmatpush1.xpose.msra.mxu0 %v1967
        %1971 = vmatprep.subr.mxu0 0.0
        %1972 = vmatpush1.xpose.msra.mxu0 0.0
        %1973 = vmatprep.subr.mxu0 0.0
        %1974 = vmatpush1.xpose.msra.mxu0 0.0
        %1975 = vmatprep.subr.mxu0 0.0
        %1976 = vmatpush1.xpose.msra.mxu0 0.0
        %1977 = vmatprep.subr.mxu0 0.0
        %1978 = vmatpush1.xpose.msra.mxu0 0.0
        %1979 = vmatprep.subr.mxu0 0.0
        %1980 = vmatpush1.xpose.msra.mxu0 0.0
        %1981 = vmatprep.subr.mxu0 0.0
        %1982 = vmatpush1.xpose.msra.mxu0 0.0
        %1983 = vmatprep.subr.mxu0 0.0
        %1984 = vmatpush1.xpose.msra.mxu0 0.0
        %1985 = vmatprep.subr.mxu0 0.0
        %1986 = vmatpush1.xpose.msra.mxu0 0.0
        %1987 = vmatprep.subr.mxu0 0.0
        %1988 = vmatpush1.xpose.msra.mxu0 0.0
        %1989 = vmatprep.subr.mxu0 0.0
        %1990 = vmatpush1.xpose.msra.mxu0 0.0
        %1991 = vmatprep.subr.mxu0 0.0
        %1992 = vmatpush1.xpose.msra.mxu0 0.0
        %1993 = vmatprep.subr.mxu0 0.0
        %1994 = vmatpush1.xpose.msra.mxu0 0.0
        %1995 = vmatprep.subr.mxu0 0.0
        %1996 = vmatpush1.xpose.msra.mxu0 0.0
        %1997 = vmatprep.subr.mxu0 0.0
        %1998 = vmatpush1.xpose.msra.mxu0 0.0
        %1999 = vmatprep.subr.mxu0 0.0
        %2000 = vmatpush1.xpose.msra.mxu0 0.0
        %2001 = vmatprep.subr.mxu0 0.0
        %2002 = vmatpush1.xpose.msra.mxu0 0.0
        %2003 = vmatprep.subr.mxu0 0.0
        %2004 = vmatpush1.xpose.msra.mxu0 0.0
        %2005 = vmatprep.subr.mxu0 0.0
        %2006 = vmatpush1.xpose.msra.mxu0 0.0
        %2007 = vmatprep.subr.mxu0 0.0
        %2008 = vmatpush1.xpose.msra.mxu0 0.0
        %2009 = vmatprep.subr.mxu0 0.0
        %2010 = vmatpush1.xpose.msra.mxu0 0.0
        %2011 = vmatprep.subr.mxu0 0.0
        %2012 = vmatpush1.xpose.msra.mxu0 0.0
        %2013 = vmatprep.subr.mxu0 0.0
        %2014 = vmatpush1.xpose.msra.mxu0 0.0
        %2015 = vmatprep.subr.mxu0 0.0
        %2016 = vmatpush1.xpose.msra.mxu0 0.0
        %2017 = vmatprep.subr.mxu0 0.0
        %2018 = vmatpush1.xpose.msra.mxu0 0.0
        %2019 = vmatprep.subr.mxu0 0.0
        %2020 = vmatpush1.xpose.msra.mxu0 0.0
        %2021 = vmatprep.subr.mxu0 0.0
        %2022 = vmatpush1.xpose.msra.mxu0 0.0
        %2023 = vmatprep.subr.mxu0 0.0
        %2024 = vmatpush1.xpose.msra.mxu0 0.0
        %2025 = vmatprep.subr.mxu0 0.0
        %2026 = vmatpush1.xpose.msra.mxu0 0.0
        %2027 = vmatprep.subr.mxu0 0.0
        %2028 = vmatpush1.xpose.msra.mxu0 0.0
        %2029 = vmatprep.subr.mxu0 0.0
        %2030 = vmatpush1.xpose.msra.mxu0 0.0
        %2031 = vmatprep.subr.mxu0 0.0
        %2032 = vmatpush1.xpose.msra.mxu0 0.0
        %2033 = vmatprep.mubr.f32.mxu0 0.0
        %2034 = vmatmul.mubr.f32.gmra.mrb[0].mxu0 %v1965
        %v2035 = vpop.f32.mrb[0].mxu0
        %v2036 = vadd.f32 0.0, %v2035
        %v2037 = vpop.f32.mrb[0].mxu0
        %2038 = vdwg.mxu0
        %v2039 = vmul.f32 %v2036, 0.5
        %v2040 = vsel %vm859, %v2039, -1e+09
        %v2041 = vsel %vm1027, %v2040, -inf
        %2042 = vmax.xlane.f32.xlu0 %v2041
        %v2043 = vpop.xlane.xlu0 %2042
        %v2044 = vsub.f32 %v2040, %v2043
        %v2045 = vmul.f32 %v2044, 1.442695
        %v2046 = vpow.pop %v2045
        %v2047 = vsel %vm1027, %v2046, 0.0
        %2048 = vadd.xlane.f32.xlu0 %v2047
        %v2049 = vpop.xlane.xlu0 %2048
        %v2050 = vrcp.pop %v2049
        %v2051 = vmul.f32 %v2046, %v2050
        %s2052 = scalar_lea.vmem %s832, 48 [#allocation4]
        %2053 = vst.msk [vmem:[%s2052] sm:$0xff] %vm1027, %v2051
        %2054 = vrot.lane.b32.xlu0 %v944, 40
        %v2055 = vpop.permute.xlu0 %2054
        %v2058 = vsel %vm1027, %v2051, 0
        %2060 = vmatprep.subr.mxu0 0.0
        %2061 = vmatpush1.msra.mxu0 %v2055
        %2062 = vmatprep.subr.mxu0 0.0
        %2063 = vmatpush1.msra.mxu0 0.0
        %2064 = vmatprep.subr.mxu0 0.0
        %2065 = vmatpush1.msra.mxu0 0.0
        %2066 = vmatprep.subr.mxu0 0.0
        %2067 = vmatpush1.msra.mxu0 0.0
        %2068 = vmatprep.subr.mxu0 0.0
        %2069 = vmatpush1.msra.mxu0 0.0
        %2070 = vmatprep.subr.mxu0 0.0
        %2071 = vmatpush1.msra.mxu0 0.0
        %2072 = vmatprep.subr.mxu0 0.0
        %2073 = vmatpush1.msra.mxu0 0.0
        %2074 = vmatprep.subr.mxu0 0.0
        %2075 = vmatpush1.msra.mxu0 0.0
        %2076 = vmatprep.subr.mxu0 0.0
        %2077 = vmatpush1.msra.mxu0 0.0
        %2078 = vmatprep.subr.mxu0 0.0
        %2079 = vmatpush1.msra.mxu0 0.0
        %2080 = vmatprep.subr.mxu0 0.0
        %2081 = vmatpush1.msra.mxu0 0.0
        %2082 = vmatprep.subr.mxu0 0.0
        %2083 = vmatpush1.msra.mxu0 0.0
        %2084 = vmatprep.subr.mxu0 0.0
        %2085 = vmatpush1.msra.mxu0 0.0
        %2086 = vmatprep.subr.mxu0 0.0
        %2087 = vmatpush1.msra.mxu0 0.0
        %2088 = vmatprep.subr.mxu0 0.0
        %2089 = vmatpush1.msra.mxu0 0.0
        %2090 = vmatprep.subr.mxu0 0.0
        %2091 = vmatpush1.msra.mxu0 0.0
        %2092 = vmatprep.subr.mxu0 0.0
        %2093 = vmatpush1.msra.mxu0 0.0
        %2094 = vmatprep.subr.mxu0 0.0
        %2095 = vmatpush1.msra.mxu0 0.0
        %2096 = vmatprep.subr.mxu0 0.0
        %2097 = vmatpush1.msra.mxu0 0.0
        %2098 = vmatprep.subr.mxu0 0.0
        %2099 = vmatpush1.msra.mxu0 0.0
        %2100 = vmatprep.subr.mxu0 0.0
        %2101 = vmatpush1.msra.mxu0 0.0
        %2102 = vmatprep.subr.mxu0 0.0
        %2103 = vmatpush1.msra.mxu0 0.0
        %2104 = vmatprep.subr.mxu0 0.0
        %2105 = vmatpush1.msra.mxu0 0.0
        %2106 = vmatprep.subr.mxu0 0.0
        %2107 = vmatpush1.msra.mxu0 0.0
        %2108 = vmatprep.subr.mxu0 0.0
        %2109 = vmatpush1.msra.mxu0 0.0
        %2110 = vmatprep.subr.mxu0 0.0
        %2111 = vmatpush1.msra.mxu0 0.0
        %2112 = vmatprep.subr.mxu0 0.0
        %2113 = vmatpush1.msra.mxu0 0.0
        %2114 = vmatprep.subr.mxu0 0.0
        %2115 = vmatpush1.msra.mxu0 0.0
        %2116 = vmatprep.subr.mxu0 0.0
        %2117 = vmatpush1.msra.mxu0 0.0
        %2118 = vmatprep.subr.mxu0 0.0
        %2119 = vmatpush1.msra.mxu0 0.0
        %2120 = vmatprep.subr.mxu0 0.0
        %2121 = vmatpush1.msra.mxu0 0.0
        %2122 = vmatprep.subr.mxu0 0.0
        %2123 = vmatpush1.msra.mxu0 0.0
        %2124 = vmatprep.mubr.f32.mxu0 0.0
        %2125 = vmatmul.mubr.f32.gmra.mrb[0].mxu0 %v2058
        %v2126 = vpop.f32.mrb[0].mxu0
        %v2127 = vadd.f32 0.0, %v2126
        %v2128 = vpop.f32.mrb[0].mxu0
        %2129 = vdwg.mxu0
        %2130 = vrot.lane.b32.xlu0 %v944, 100
        %v2131 = vpop.permute.xlu0 %2130
        %2132 = vrot.lane.b32.xlu0 %v944, 68
        %v2133 = vpop.permute.xlu0 %2132
        %v2134 = vsel %vm950, %v2131, 0
        %v2136 = vsel %vm950, %v2133, 0
        %2138 = vmatprep.subr.mxu0 0.0
        %2139 = vmatpush1.xpose.msra.mxu0 %v2136
        %2140 = vmatprep.subr.mxu0 0.0
        %2141 = vmatpush1.xpose.msra.mxu0 0.0
        %2142 = vmatprep.subr.mxu0 0.0
        %2143 = vmatpush1.xpose.msra.mxu0 0.0
        %2144 = vmatprep.subr.mxu0 0.0
        %2145 = vmatpush1.xpose.msra.mxu0 0.0
        %2146 = vmatprep.subr.mxu0 0.0
        %2147 = vmatpush1.xpose.msra.mxu0 0.0
        %2148 = vmatprep.subr.mxu0 0.0
        %2149 = vmatpush1.xpose.msra.mxu0 0.0
        %2150 = vmatprep.subr.mxu0 0.0
        %2151 = vmatpush1.xpose.msra.mxu0 0.0
        %2152 = vmatprep.subr.mxu0 0.0
        %2153 = vmatpush1.xpose.msra.mxu0 0.0
        %2154 = vmatprep.subr.mxu0 0.0
        %2155 = vmatpush1.xpose.msra.mxu0 0.0
        %2156 = vmatprep.subr.mxu0 0.0
        %2157 = vmatpush1.xpose.msra.mxu0 0.0
        %2158 = vmatprep.subr.mxu0 0.0
        %2159 = vmatpush1.xpose.msra.mxu0 0.0
        %2160 = vmatprep.subr.mxu0 0.0
        %2161 = vmatpush1.xpose.msra.mxu0 0.0
        %2162 = vmatprep.subr.mxu0 0.0
        %2163 = vmatpush1.xpose.msra.mxu0 0.0
        %2164 = vmatprep.subr.mxu0 0.0
        %2165 = vmatpush1.xpose.msra.mxu0 0.0
        %2166 = vmatprep.subr.mxu0 0.0
        %2167 = vmatpush1.xpose.msra.mxu0 0.0
        %2168 = vmatprep.subr.mxu0 0.0
        %2169 = vmatpush1.xpose.msra.mxu0 0.0
        %2170 = vmatprep.subr.mxu0 0.0
        %2171 = vmatpush1.xpose.msra.mxu0 0.0
        %2172 = vmatprep.subr.mxu0 0.0
        %2173 = vmatpush1.xpose.msra.mxu0 0.0
        %2174 = vmatprep.subr.mxu0 0.0
        %2175 = vmatpush1.xpose.msra.mxu0 0.0
        %2176 = vmatprep.subr.mxu0 0.0
        %2177 = vmatpush1.xpose.msra.mxu0 0.0
        %2178 = vmatprep.subr.mxu0 0.0
        %2179 = vmatpush1.xpose.msra.mxu0 0.0
        %2180 = vmatprep.subr.mxu0 0.0
        %2181 = vmatpush1.xpose.msra.mxu0 0.0
        %2182 = vmatprep.subr.mxu0 0.0
        %2183 = vmatpush1.xpose.msra.mxu0 0.0
        %2184 = vmatprep.subr.mxu0 0.0
        %2185 = vmatpush1.xpose.msra.mxu0 0.0
        %2186 = vmatprep.subr.mxu0 0.0
        %2187 = vmatpush1.xpose.msra.mxu0 0.0
        %2188 = vmatprep.subr.mxu0 0.0
        %2189 = vmatpush1.xpose.msra.mxu0 0.0
        %2190 = vmatprep.subr.mxu0 0.0
        %2191 = vmatpush1.xpose.msra.mxu0 0.0
        %2192 = vmatprep.subr.mxu0 0.0
        %2193 = vmatpush1.xpose.msra.mxu0 0.0
        %2194 = vmatprep.subr.mxu0 0.0
        %2195 = vmatpush1.xpose.msra.mxu0 0.0
        %2196 = vmatprep.subr.mxu0 0.0
        %2197 = vmatpush1.xpose.msra.mxu0 0.0
        %2198 = vmatprep.subr.mxu0 0.0
        %2199 = vmatpush1.xpose.msra.mxu0 0.0
        %2200 = vmatprep.subr.mxu0 0.0
        %2201 = vmatpush1.xpose.msra.mxu0 0.0
        %2202 = vmatprep.mubr.f32.mxu0 0.0
        %2203 = vmatmul.mubr.f32.gmra.mrb[0].mxu0 %v2134
        %v2204 = vpop.f32.mrb[0].mxu0
        %v2205 = vadd.f32 0.0, %v2204
        %v2206 = vpop.f32.mrb[0].mxu0
        %2207 = vdwg.mxu0
        %v2208 = vmul.f32 %v2205, 0.5
        %v2209 = vsel %vm859, %v2208, -1e+09
        %v2210 = vsel %vm1027, %v2209, -inf
        %2211 = vmax.xlane.f32.xlu0 %v2210
        %v2212 = vpop.xlane.xlu0 %2211
        %v2213 = vsub.f32 %v2209, %v2212
        %v2214 = vmul.f32 %v2213, 1.442695
        %v2215 = vpow.pop %v2214
        %v2216 = vsel %vm1027, %v2215, 0.0
        %2217 = vadd.xlane.f32.xlu0 %v2216
        %v2218 = vpop.xlane.xlu0 %2217
        %v2219 = vrcp.pop %v2218
        %v2220 = vmul.f32 %v2215, %v2219
        %s2221 = scalar_lea.vmem %s832, 56 [#allocation4]
        %2222 = vst.msk [vmem:[%s2221] sm:$0xff] %vm1027, %v2220
        %2223 = vrot.lane.b32.xlu0 %v944, 36
        %v2224 = vpop.permute.xlu0 %2223
        %v2227 = vsel %vm1027, %v2220, 0
        %2229 = vmatprep.subr.mxu0 0.0
        %2230 = vmatpush1.msra.mxu0 %v2224
        %2231 = vmatprep.subr.mxu0 0.0
        %2232 = vmatpush1.msra.mxu0 0.0
        %2233 = vmatprep.subr.mxu0 0.0
        %2234 = vmatpush1.msra.mxu0 0.0
        %2235 = vmatprep.subr.mxu0 0.0
        %2236 = vmatpush1.msra.mxu0 0.0
        %2237 = vmatprep.subr.mxu0 0.0
        %2238 = vmatpush1.msra.mxu0 0.0
        %2239 = vmatprep.subr.mxu0 0.0
        %2240 = vmatpush1.msra.mxu0 0.0
        %2241 = vmatprep.subr.mxu0 0.0
        %2242 = vmatpush1.msra.mxu0 0.0
        %2243 = vmatprep.subr.mxu0 0.0
        %2244 = vmatpush1.msra.mxu0 0.0
        %2245 = vmatprep.subr.mxu0 0.0
        %2246 = vmatpush1.msra.mxu0 0.0
        %2247 = vmatprep.subr.mxu0 0.0
        %2248 = vmatpush1.msra.mxu0 0.0
        %2249 = vmatprep.subr.mxu0 0.0
        %2250 = vmatpush1.msra.mxu0 0.0
        %2251 = vmatprep.subr.mxu0 0.0
        %2252 = vmatpush1.msra.mxu0 0.0
        %2253 = vmatprep.subr.mxu0 0.0
        %2254 = vmatpush1.msra.mxu0 0.0
        %2255 = vmatprep.subr.mxu0 0.0
        %2256 = vmatpush1.msra.mxu0 0.0
        %2257 = vmatprep.subr.mxu0 0.0
        %2258 = vmatpush1.msra.mxu0 0.0
        %2259 = vmatprep.subr.mxu0 0.0
        %2260 = vmatpush1.msra.mxu0 0.0
        %2261 = vmatprep.subr.mxu0 0.0
        %2262 = vmatpush1.msra.mxu0 0.0
        %2263 = vmatprep.subr.mxu0 0.0
        %2264 = vmatpush1.msra.mxu0 0.0
        %2265 = vmatprep.subr.mxu0 0.0
        %2266 = vmatpush1.msra.mxu0 0.0
        %2267 = vmatprep.subr.mxu0 0.0
        %2268 = vmatpush1.msra.mxu0 0.0
        %2269 = vmatprep.subr.mxu0 0.0
        %2270 = vmatpush1.msra.mxu0 0.0
        %2271 = vmatprep.subr.mxu0 0.0
        %2272 = vmatpush1.msra.mxu0 0.0
        %2273 = vmatprep.subr.mxu0 0.0
        %2274 = vmatpush1.msra.mxu0 0.0
        %2275 = vmatprep.subr.mxu0 0.0
        %2276 = vmatpush1.msra.mxu0 0.0
        %2277 = vmatprep.subr.mxu0 0.0
        %2278 = vmatpush1.msra.mxu0 0.0
        %2279 = vmatprep.subr.mxu0 0.0
        %2280 = vmatpush1.msra.mxu0 0.0
        %2281 = vmatprep.subr.mxu0 0.0
        %2282 = vmatpush1.msra.mxu0 0.0
        %2283 = vmatprep.subr.mxu0 0.0
        %2284 = vmatpush1.msra.mxu0 0.0
        %2285 = vmatprep.subr.mxu0 0.0
        %2286 = vmatpush1.msra.mxu0 0.0
        %2287 = vmatprep.subr.mxu0 0.0
        %2288 = vmatpush1.msra.mxu0 0.0
        %2289 = vmatprep.subr.mxu0 0.0
        %2290 = vmatpush1.msra.mxu0 0.0
        %2291 = vmatprep.subr.mxu0 0.0
        %2292 = vmatpush1.msra.mxu0 0.0
        %2293 = vmatprep.mubr.f32.mxu0 0.0
        %2294 = vmatmul.mubr.f32.gmra.mrb[0].mxu0 %v2227
        %v2295 = vpop.f32.mrb[0].mxu0
        %v2296 = vadd.f32 0.0, %v2295
        %v2297 = vpop.f32.mrb[0].mxu0
        %2298 = vdwg.mxu0
        %2300 = vrot.lane.b32.xlu0 %v1282, 4
        %v2301 = vpop.permute.xlu0 %2300
        %2304 = vrot.lane.b32.xlu0 %v1451, 8
        %v2305 = vpop.permute.xlu0 %2304
        %2308 = vrot.lane.b32.xlu0 %v1620, 12
        %v2309 = vpop.permute.xlu0 %2308
        %2312 = vrot.lane.b32.xlu0 %v1789, 16
        %v2313 = vpop.permute.xlu0 %2312
        %2316 = vrot.lane.b32.xlu0 %v1958, 20
        %v2317 = vpop.permute.xlu0 %2316
        %2320 = vrot.lane.b32.xlu0 %v2127, 24
        %v2321 = vpop.permute.xlu0 %2320
        %2324 = vrot.lane.b32.xlu0 %v2296, 28
        %v2325 = vpop.permute.xlu0 %2324
        %v2327 = vsel %vm950, %v1113, %v2301
        %v2328 = vsel %vm1027, %v2327, %v2305
        %vm2329 = vcmask 97280
        %v2330 = vsel %vm2329, %v2328, %v2309
        %vm2331 = vcmask 130048
        %v2332 = vsel %vm2331, %v2330, %v2313
        %vm2333 = vcmask 162816
        %v2334 = vsel %vm2333, %v2332, %v2317
        %vm2335 = vcmask 195584
        %v2336 = vsel %vm2335, %v2334, %v2321
        %vm2337 = vcmask 228352
        %v2338 = vsel %vm2337, %v2336, %v2325
        %v2339 = vld [vmem:[%s6] sm:$0xff]
        %v2340 = vld [vmem:[%s6 + $0x8] sm:$0xff]
        %v2341 = vld [vmem:[%s6 + $0x10] sm:$0xff]
        %v2342 = vld [vmem:[%s6 + $0x18] sm:$0xff]
        %v2343 = vld [vmem:[%s7] sm:$0x1]
        %v2345 = vlaneseq
        %v2346 = vshrl.u32 %v2345, 7
        %v2347 = vsub.s32 0, %v2346
        %v2348 = vrot.slane %v2343, %v2347
        %v2351 = vsel %vm873, %v2338, 0
        %2353 = vmatprep.subr.mxu0 0.0
        %2354 = vmatpush1.msra.mxu0 %v2339
        %2355 = vmatprep.subr.mxu0 0.0
        %2356 = vmatpush1.msra.mxu0 %v2340
        %2357 = vmatprep.subr.mxu0 0.0
        %2358 = vmatpush1.msra.mxu0 %v2341
        %2359 = vmatprep.subr.mxu0 0.0
        %2360 = vmatpush1.msra.mxu0 %v2342
        %2361 = vmatprep.subr.mxu0 0.0
        %2362 = vmatpush1.msra.mxu0 0.0
        %2363 = vmatprep.subr.mxu0 0.0
        %2364 = vmatpush1.msra.mxu0 0.0
        %2365 = vmatprep.subr.mxu0 0.0
        %2366 = vmatpush1.msra.mxu0 0.0
        %2367 = vmatprep.subr.mxu0 0.0
        %2368 = vmatpush1.msra.mxu0 0.0
        %2369 = vmatprep.subr.mxu0 0.0
        %2370 = vmatpush1.msra.mxu0 0.0
        %2371 = vmatprep.subr.mxu0 0.0
        %2372 = vmatpush1.msra.mxu0 0.0
        %2373 = vmatprep.subr.mxu0 0.0
        %2374 = vmatpush1.msra.mxu0 0.0
        %2375 = vmatprep.subr.mxu0 0.0
        %2376 = vmatpush1.msra.mxu0 0.0
        %2377 = vmatprep.subr.mxu0 0.0
        %2378 = vmatpush1.msra.mxu0 0.0
        %2379 = vmatprep.subr.mxu0 0.0
        %2380 = vmatpush1.msra.mxu0 0.0
        %2381 = vmatprep.subr.mxu0 0.0
        %2382 = vmatpush1.msra.mxu0 0.0
        %2383 = vmatprep.subr.mxu0 0.0
        %2384 = vmatpush1.msra.mxu0 0.0
        %2385 = vmatprep.subr.mxu0 0.0
        %2386 = vmatpush1.msra.mxu0 0.0
        %2387 = vmatprep.subr.mxu0 0.0
        %2388 = vmatpush1.msra.mxu0 0.0
        %2389 = vmatprep.subr.mxu0 0.0
        %2390 = vmatpush1.msra.mxu0 0.0
        %2391 = vmatprep.subr.mxu0 0.0
        %2392 = vmatpush1.msra.mxu0 0.0
        %2393 = vmatprep.subr.mxu0 0.0
        %2394 = vmatpush1.msra.mxu0 0.0
        %2395 = vmatprep.subr.mxu0 0.0
        %2396 = vmatpush1.msra.mxu0 0.0
        %2397 = vmatprep.subr.mxu0 0.0
        %2398 = vmatpush1.msra.mxu0 0.0
        %2399 = vmatprep.subr.mxu0 0.0
        %2400 = vmatpush1.msra.mxu0 0.0
        %2401 = vmatprep.subr.mxu0 0.0
        %2402 = vmatpush1.msra.mxu0 0.0
        %2403 = vmatprep.subr.mxu0 0.0
        %2404 = vmatpush1.msra.mxu0 0.0
        %2405 = vmatprep.subr.mxu0 0.0
        %2406 = vmatpush1.msra.mxu0 0.0
        %2407 = vmatprep.subr.mxu0 0.0
        %2408 = vmatpush1.msra.mxu0 0.0
        %2409 = vmatprep.subr.mxu0 0.0
        %2410 = vmatpush1.msra.mxu0 0.0
        %2411 = vmatprep.subr.mxu0 0.0
        %2412 = vmatpush1.msra.mxu0 0.0
        %2413 = vmatprep.subr.mxu0 0.0
        %2414 = vmatpush1.msra.mxu0 0.0
        %2415 = vmatprep.subr.mxu0 0.0
        %2416 = vmatpush1.msra.mxu0 0.0
        %2417 = vmatprep.mubr.f32.mxu0 0.0
        %2418 = vmatmul.mubr.f32.gmra.mrb[0].mxu0 %v2351
        %v2419 = vpop.f32.mrb[0].mxu0
        %v2420 = vadd.f32 %v2348, %v2419
        %v2421 = vpop.f32.mrb[0].mxu0
        %2422 = vdwg.mxu0
        %v2423 = vadd.f32 %v856, %v2420
        %v2424 = vld [vmem:[%s18] sm:$0x1]
        %v2425 = vld [vmem:[%s19] sm:$0x1]
        %v2426 = vsel %vm873, %v2423, 0.0
        %2427 = vadd.xlane.f32.xlu0 %v2426
        %v2428 = vpop.xlane.xlu0 %2427
        %v2429 = vrcp.pop 32.0
        %v2430 = vmul.f32 %v2428, %v2429
        %v2431 = vsub.f32 %v2423, %v2430
        %v2432 = vmul.f32 %v2431, %v2431
        %v2433 = vsel %vm873, %v2432, 0.0
        %2434 = vadd.xlane.f32.xlu0 %v2433
        %v2435 = vpop.xlane.xlu0 %2434
        %v2436 = vmul.f32 %v2435, %v2429
        %v2437 = vadd.f32 %v2436, 1e-06
        %v2438 = vrsqrt.pop %v2437
        %v2439 = vmul.f32 %v2431, %v2438
        %v2441 = vlaneseq
        %v2442 = vshrl.u32 %v2441, 7
        %v2443 = vsub.s32 0, %v2442
        %v2444 = vrot.slane %v2424, %v2443
        %v2446 = vmul.f32 %v2444, %v2439
        %v2448 = vlaneseq
        %v2449 = vshrl.u32 %v2448, 7
        %v2450 = vsub.s32 0, %v2449
        %v2451 = vrot.slane %v2425, %v2450
        %v2453 = vadd.f32 %v2446, %v2451
        %v2454 = vld [vmem:[%s8] sm:$0xff]
        %v2455 = vld [vmem:[%s8 + $0x8] sm:$0xff]
        %v2456 = vld [vmem:[%s8 + $0x10] sm:$0xff]
        %v2457 = vld [vmem:[%s8 + $0x18] sm:$0xff]
        %v2458 = vld [vmem:[%s9] sm:$0x1]
        %v2460 = vlaneseq
        %v2461 = vshrl.u32 %v2460, 7
        %v2462 = vsub.s32 0, %v2461
        %v2463 = vrot.slane %v2458, %v2462
        %v2466 = vsel %vm873, %v2453, 0
        %2468 = vmatprep.subr.mxu0 0.0
        %2469 = vmatpush1.msra.mxu0 %v2454
        %2470 = vmatprep.subr.mxu0 0.0
        %2471 = vmatpush1.msra.mxu0 %v2455
        %2472 = vmatprep.subr.mxu0 0.0
        %2473 = vmatpush1.msra.mxu0 %v2456
        %2474 = vmatprep.subr.mxu0 0.0
        %2475 = vmatpush1.msra.mxu0 %v2457
        %2476 = vmatprep.subr.mxu0 0.0
        %2477 = vmatpush1.msra.mxu0 0.0
        %2478 = vmatprep.subr.mxu0 0.0
        %2479 = vmatpush1.msra.mxu0 0.0
        %2480 = vmatprep.subr.mxu0 0.0
        %2481 = vmatpush1.msra.mxu0 0.0
        %2482 = vmatprep.subr.mxu0 0.0
        %2483 = vmatpush1.msra.mxu0 0.0
        %2484 = vmatprep.subr.mxu0 0.0
        %2485 = vmatpush1.msra.mxu0 0.0
        %2486 = vmatprep.subr.mxu0 0.0
        %2487 = vmatpush1.msra.mxu0 0.0
        %2488 = vmatprep.subr.mxu0 0.0
        %2489 = vmatpush1.msra.mxu0 0.0
        %2490 = vmatprep.subr.mxu0 0.0
        %2491 = vmatpush1.msra.mxu0 0.0
        %2492 = vmatprep.subr.mxu0 0.0
        %2493 = vmatpush1.msra.mxu0 0.0
        %2494 = vmatprep.subr.mxu0 0.0
        %2495 = vmatpush1.msra.mxu0 0.0
        %2496 = vmatprep.subr.mxu0 0.0
        %2497 = vmatpush1.msra.mxu0 0.0
        %2498 = vmatprep.subr.mxu0 0.0
        %2499 = vmatpush1.msra.mxu0 0.0
        %2500 = vmatprep.subr.mxu0 0.0
        %2501 = vmatpush1.msra.mxu0 0.0
        %2502 = vmatprep.subr.mxu0 0.0
        %2503 = vmatpush1.msra.mxu0 0.0
        %2504 = vmatprep.subr.mxu0 0.0
        %2505 = vmatpush1.msra.mxu0 0.0
        %2506 = vmatprep.subr.mxu0 0.0
        %2507 = vmatpush1.msra.mxu0 0.0
        %2508 = vmatprep.subr.mxu0 0.0
        %2509 = vmatpush1.msra.mxu0 0.0
        %2510 = vmatprep.subr.mxu0 0.0
        %2511 = vmatpush1.msra.mxu0 0.0
        %2512 = vmatprep.subr.mxu0 0.0
        %2513 = vmatpush1.msra.mxu0 0.0
        %2514 = vmatprep.subr.mxu0 0.0
        %2515 = vmatpush1.msra.mxu0 0.0
        %2516 = vmatprep.subr.mxu0 0.0
        %2517 = vmatpush1.msra.mxu0 0.0
        %2518 = vmatprep.subr.mxu0 0.0
        %2519 = vmatpush1.msra.mxu0 0.0
        %2520 = vmatprep.subr.mxu0 0.0
        %2521 = vmatpush1.msra.mxu0 0.0
        %2522 = vmatprep.subr.mxu0 0.0
        %2523 = vmatpush1.msra.mxu0 0.0
        %2524 = vmatprep.subr.mxu0 0.0
        %2525 = vmatpush1.msra.mxu0 0.0
        %2526 = vmatprep.subr.mxu0 0.0
        %2527 = vmatpush1.msra.mxu0 0.0
        %2528 = vmatprep.subr.mxu0 0.0
        %2529 = vmatpush1.msra.mxu0 0.0
        %2530 = vmatprep.subr.mxu0 0.0
        %2531 = vmatpush1.msra.mxu0 0.0
        %2532 = vmatprep.mubr.f32.mxu0 0.0
        %2533 = vmatmul.mubr.f32.gmra.mrb[0].mxu0 %v2466
        %v2534 = vpop.f32.mrb[0].mxu0
        %v2535 = vadd.f32 %v2463, %v2534
        %v2536 = vpop.f32.mrb[0].mxu0
        %2537 = vdwg.mxu0
        %v2538 = vld [vmem:[%s10] sm:$0xff]
        %v2539 = vld [vmem:[%s10 + $0x8] sm:$0xff]
        %v2540 = vld [vmem:[%s10 + $0x10] sm:$0xff]
        %v2541 = vld [vmem:[%s10 + $0x18] sm:$0xff]
        %v2542 = vld [vmem:[%s11] sm:$0x1]
        %v2544 = vlaneseq
        %v2545 = vshrl.u32 %v2544, 7
        %v2546 = vsub.s32 0, %v2545
        %v2547 = vrot.slane %v2542, %v2546
        %v2550 = vsel %vm873, %v857, 0
        %2552 = vmatprep.subr.mxu0 0.0
        %2553 = vmatpush1.msra.mxu0 %v2538
        %2554 = vmatprep.subr.mxu0 0.0
        %2555 = vmatpush1.msra.mxu0 %v2539
        %2556 = vmatprep.subr.mxu0 0.0
        %2557 = vmatpush1.msra.mxu0 %v2540
        %2558 = vmatprep.subr.mxu0 0.0
        %2559 = vmatpush1.msra.mxu0 %v2541
        %2560 = vmatprep.subr.mxu0 0.0
        %2561 = vmatpush1.msra.mxu0 0.0
        %2562 = vmatprep.subr.mxu0 0.0
        %2563 = vmatpush1.msra.mxu0 0.0
        %2564 = vmatprep.subr.mxu0 0.0
        %2565 = vmatpush1.msra.mxu0 0.0
        %2566 = vmatprep.subr.mxu0 0.0
        %2567 = vmatpush1.msra.mxu0 0.0
        %2568 = vmatprep.subr.mxu0 0.0
        %2569 = vmatpush1.msra.mxu0 0.0
        %2570 = vmatprep.subr.mxu0 0.0
        %2571 = vmatpush1.msra.mxu0 0.0
        %2572 = vmatprep.subr.mxu0 0.0
        %2573 = vmatpush1.msra.mxu0 0.0
        %2574 = vmatprep.subr.mxu0 0.0
        %2575 = vmatpush1.msra.mxu0 0.0
        %2576 = vmatprep.subr.mxu0 0.0
        %2577 = vmatpush1.msra.mxu0 0.0
        %2578 = vmatprep.subr.mxu0 0.0
        %2579 = vmatpush1.msra.mxu0 0.0
        %2580 = vmatprep.subr.mxu0 0.0
        %2581 = vmatpush1.msra.mxu0 0.0
        %2582 = vmatprep.subr.mxu0 0.0
        %2583 = vmatpush1.msra.mxu0 0.0
        %2584 = vmatprep.subr.mxu0 0.0
        %2585 = vmatpush1.msra.mxu0 0.0
        %2586 = vmatprep.subr.mxu0 0.0
        %2587 = vmatpush1.msra.mxu0 0.0
        %2588 = vmatprep.subr.mxu0 0.0
        %2589 = vmatpush1.msra.mxu0 0.0
        %2590 = vmatprep.subr.mxu0 0.0
        %2591 = vmatpush1.msra.mxu0 0.0
        %2592 = vmatprep.subr.mxu0 0.0
        %2593 = vmatpush1.msra.mxu0 0.0
        %2594 = vmatprep.subr.mxu0 0.0
        %2595 = vmatpush1.msra.mxu0 0.0
        %2596 = vmatprep.subr.mxu0 0.0
        %2597 = vmatpush1.msra.mxu0 0.0
        %2598 = vmatprep.subr.mxu0 0.0
        %2599 = vmatpush1.msra.mxu0 0.0
        %2600 = vmatprep.subr.mxu0 0.0
        %2601 = vmatpush1.msra.mxu0 0.0
        %2602 = vmatprep.subr.mxu0 0.0
        %2603 = vmatpush1.msra.mxu0 0.0
        %2604 = vmatprep.subr.mxu0 0.0
        %2605 = vmatpush1.msra.mxu0 0.0
        %2606 = vmatprep.subr.mxu0 0.0
        %2607 = vmatpush1.msra.mxu0 0.0
        %2608 = vmatprep.subr.mxu0 0.0
        %2609 = vmatpush1.msra.mxu0 0.0
        %2610 = vmatprep.subr.mxu0 0.0
        %2611 = vmatpush1.msra.mxu0 0.0
        %2612 = vmatprep.subr.mxu0 0.0
        %2613 = vmatpush1.msra.mxu0 0.0
        %2614 = vmatprep.subr.mxu0 0.0
        %2615 = vmatpush1.msra.mxu0 0.0
        %2616 = vmatprep.mubr.f32.mxu0 0.0
        %2617 = vmatmul.mubr.f32.gmra.mrb[0].mxu0 %v2550
        %v2618 = vpop.f32.mrb[0].mxu0
        %v2619 = vadd.f32 %v2547, %v2618
        %v2620 = vpop.f32.mrb[0].mxu0
        %2621 = vdwg.mxu0
        %v2623 = vsel %vm950, %v2535, 0
        %v2626 = vsel %vm950, %v2619, 0
        %2628 = vmatprep.subr.mxu0 0.0
        %2629 = vmatpush1.xpose.msra.mxu0 %v2626
        %2630 = vmatprep.subr.mxu0 0.0
        %2631 = vmatpush1.xpose.msra.mxu0 0.0
        %2632 = vmatprep.subr.mxu0 0.0
        %2633 = vmatpush1.xpose.msra.mxu0 0.0
        %2634 = vmatprep.subr.mxu0 0.0
        %2635 = vmatpush1.xpose.msra.mxu0 0.0
        %2636 = vmatprep.subr.mxu0 0.0
        %2637 = vmatpush1.xpose.msra.mxu0 0.0
        %2638 = vmatprep.subr.mxu0 0.0
        %2639 = vmatpush1.xpose.msra.mxu0 0.0
        %2640 = vmatprep.subr.mxu0 0.0
        %2641 = vmatpush1.xpose.msra.mxu0 0.0
        %2642 = vmatprep.subr.mxu0 0.0
        %2643 = vmatpush1.xpose.msra.mxu0 0.0
        %2644 = vmatprep.subr.mxu0 0.0
        %2645 = vmatpush1.xpose.msra.mxu0 0.0
        %2646 = vmatprep.subr.mxu0 0.0
        %2647 = vmatpush1.xpose.msra.mxu0 0.0
        %2648 = vmatprep.subr.mxu0 0.0
        %2649 = vmatpush1.xpose.msra.mxu0 0.0
        %2650 = vmatprep.subr.mxu0 0.0
        %2651 = vmatpush1.xpose.msra.mxu0 0.0
        %2652 = vmatprep.subr.mxu0 0.0
        %2653 = vmatpush1.xpose.msra.mxu0 0.0
        %2654 = vmatprep.subr.mxu0 0.0
        %2655 = vmatpush1.xpose.msra.mxu0 0.0
        %2656 = vmatprep.subr.mxu0 0.0
        %2657 = vmatpush1.xpose.msra.mxu0 0.0
        %2658 = vmatprep.subr.mxu0 0.0
        %2659 = vmatpush1.xpose.msra.mxu0 0.0
        %2660 = vmatprep.subr.mxu0 0.0
        %2661 = vmatpush1.xpose.msra.mxu0 0.0
        %2662 = vmatprep.subr.mxu0 0.0
        %2663 = vmatpush1.xpose.msra.mxu0 0.0
        %2664 = vmatprep.subr.mxu0 0.0
        %2665 = vmatpush1.xpose.msra.mxu0 0.0
        %2666 = vmatprep.subr.mxu0 0.0
        %2667 = vmatpush1.xpose.msra.mxu0 0.0
        %2668 = vmatprep.subr.mxu0 0.0
        %2669 = vmatpush1.xpose.msra.mxu0 0.0
        %2670 = vmatprep.subr.mxu0 0.0
        %2671 = vmatpush1.xpose.msra.mxu0 0.0
        %2672 = vmatprep.subr.mxu0 0.0
        %2673 = vmatpush1.xpose.msra.mxu0 0.0
        %2674 = vmatprep.subr.mxu0 0.0
        %2675 = vmatpush1.xpose.msra.mxu0 0.0
        %2676 = vmatprep.subr.mxu0 0.0
        %2677 = vmatpush1.xpose.msra.mxu0 0.0
        %2678 = vmatprep.subr.mxu0 0.0
        %2679 = vmatpush1.xpose.msra.mxu0 0.0
        %2680 = vmatprep.subr.mxu0 0.0
        %2681 = vmatpush1.xpose.msra.mxu0 0.0
        %2682 = vmatprep.subr.mxu0 0.0
        %2683 = vmatpush1.xpose.msra.mxu0 0.0
        %2684 = vmatprep.subr.mxu0 0.0
        %2685 = vmatpush1.xpose.msra.mxu0 0.0
        %2686 = vmatprep.subr.mxu0 0.0
        %2687 = vmatpush1.xpose.msra.mxu0 0.0
        %2688 = vmatprep.subr.mxu0 0.0
        %2689 = vmatpush1.xpose.msra.mxu0 0.0
        %2690 = vmatprep.subr.mxu0 0.0
        %2691 = vmatpush1.xpose.msra.mxu0 0.0
        %2692 = vmatprep.mubr.f32.mxu0 0.0
        %2693 = vmatmul.mubr.f32.gmra.mrb[0].mxu0 %v2623
        %v2694 = vpop.f32.mrb[0].mxu0
        %v2695 = vadd.f32 0.0, %v2694
        %v2696 = vpop.f32.mrb[0].mxu0
        %2697 = vdwg.mxu0
        %v2698 = vmul.f32 %v2695, 0.5
        %v2699 = vsel %vm861, %v2698, -1e+09
        %v2700 = vsel %vm1027, %v2699, -inf
        %2701 = vmax.xlane.f32.xlu0 %v2700
        %v2702 = vpop.xlane.xlu0 %2701
        %v2703 = vsub.f32 %v2699, %v2702
        %v2704 = vmul.f32 %v2703, 1.442695
        %v2705 = vpow.pop %v2704
        %v2706 = vsel %vm1027, %v2705, 0.0
        %2707 = vadd.xlane.f32.xlu0 %v2706
        %v2708 = vpop.xlane.xlu0 %2707
        %v2709 = vrcp.pop %v2708
        %v2710 = vmul.f32 %v2705, %v2709
        %2711 = vst.msk [vmem:[%s839] sm:$0xff] %vm1027, %v2710
        %2712 = vrot.lane.b32.xlu0 %v2619, 96
        %v2713 = vpop.permute.xlu0 %2712
        %v2716 = vsel %vm1027, %v2710, 0
        %2718 = vmatprep.subr.mxu0 0.0
        %2719 = vmatpush1.msra.mxu0 %v2713
        %2720 = vmatprep.subr.mxu0 0.0
        %2721 = vmatpush1.msra.mxu0 0.0
        %2722 = vmatprep.subr.mxu0 0.0
        %2723 = vmatpush1.msra.mxu0 0.0
        %2724 = vmatprep.subr.mxu0 0.0
        %2725 = vmatpush1.msra.mxu0 0.0
        %2726 = vmatprep.subr.mxu0 0.0
        %2727 = vmatpush1.msra.mxu0 0.0
        %2728 = vmatprep.subr.mxu0 0.0
        %2729 = vmatpush1.msra.mxu0 0.0
        %2730 = vmatprep.subr.mxu0 0.0
        %2731 = vmatpush1.msra.mxu0 0.0
        %2732 = vmatprep.subr.mxu0 0.0
        %2733 = vmatpush1.msra.mxu0 0.0
        %2734 = vmatprep.subr.mxu0 0.0
        %2735 = vmatpush1.msra.mxu0 0.0
        %2736 = vmatprep.subr.mxu0 0.0
        %2737 = vmatpush1.msra.mxu0 0.0
        %2738 = vmatprep.subr.mxu0 0.0
        %2739 = vmatpush1.msra.mxu0 0.0
        %2740 = vmatprep.subr.mxu0 0.0
        %2741 = vmatpush1.msra.mxu0 0.0
        %2742 = vmatprep.subr.mxu0 0.0
        %2743 = vmatpush1.msra.mxu0 0.0
        %2744 = vmatprep.subr.mxu0 0.0
        %2745 = vmatpush1.msra.mxu0 0.0
        %2746 = vmatprep.subr.mxu0 0.0
        %2747 = vmatpush1.msra.mxu0 0.0
        %2748 = vmatprep.subr.mxu0 0.0
        %2749 = vmatpush1.msra.mxu0 0.0
        %2750 = vmatprep.subr.mxu0 0.0
        %2751 = vmatpush1.msra.mxu0 0.0
        %2752 = vmatprep.subr.mxu0 0.0
        %2753 = vmatpush1.msra.mxu0 0.0
        %2754 = vmatprep.subr.mxu0 0.0
        %2755 = vmatpush1.msra.mxu0 0.0
        %2756 = vmatprep.subr.mxu0 0.0
        %2757 = vmatpush1.msra.mxu0 0.0
        %2758 = vmatprep.subr.mxu0 0.0
        %2759 = vmatpush1.msra.mxu0 0.0
        %2760 = vmatprep.subr.mxu0 0.0
        %2761 = vmatpush1.msra.mxu0 0.0
        %2762 = vmatprep.subr.mxu0 0.0
        %2763 = vmatpush1.msra.mxu0 0.0
        %2764 = vmatprep.subr.mxu0 0.0
        %2765 = vmatpush1.msra.mxu0 0.0
        %2766 = vmatprep.subr.mxu0 0.0
        %2767 = vmatpush1.msra.mxu0 0.0
        %2768 = vmatprep.subr.mxu0 0.0
        %2769 = vmatpush1.msra.mxu0 0.0
        %2770 = vmatprep.subr.mxu0 0.0
        %2771 = vmatpush1.msra.mxu0 0.0
        %2772 = vmatprep.subr.mxu0 0.0
        %2773 = vmatpush1.msra.mxu0 0.0
        %2774 = vmatprep.subr.mxu0 0.0
        %2775 = vmatpush1.msra.mxu0 0.0
        %2776 = vmatprep.subr.mxu0 0.0
        %2777 = vmatpush1.msra.mxu0 0.0
        %2778 = vmatprep.subr.mxu0 0.0
        %2779 = vmatpush1.msra.mxu0 0.0
        %2780 = vmatprep.subr.mxu0 0.0
        %2781 = vmatpush1.msra.mxu0 0.0
        %2782 = vmatprep.mubr.f32.mxu0 0.0
        %2783 = vmatmul.mubr.f32.gmra.mrb[0].mxu0 %v2716
        %v2784 = vpop.f32.mrb[0].mxu0
        %v2785 = vadd.f32 0.0, %v2784
        %v2786 = vpop.f32.mrb[0].mxu0
        %2787 = vdwg.mxu0
        %2788 = vrot.lane.b32.xlu0 %v2535, 124
        %v2789 = vpop.permute.xlu0 %2788
        %2790 = vrot.lane.b32.xlu0 %v2619, 124
        %v2791 = vpop.permute.xlu0 %2790
        %v2792 = vsel %vm950, %v2789, 0
        %v2794 = vsel %vm950, %v2791, 0
        %2796 = vmatprep.subr.mxu0 0.0
        %2797 = vmatpush1.xpose.msra.mxu0 %v2794
        %2798 = vmatprep.subr.mxu0 0.0
        %2799 = vmatpush1.xpose.msra.mxu0 0.0
        %2800 = vmatprep.subr.mxu0 0.0
        %2801 = vmatpush1.xpose.msra.mxu0 0.0
        %2802 = vmatprep.subr.mxu0 0.0
        %2803 = vmatpush1.xpose.msra.mxu0 0.0
        %2804 = vmatprep.subr.mxu0 0.0
        %2805 = vmatpush1.xpose.msra.mxu0 0.0
        %2806 = vmatprep.subr.mxu0 0.0
        %2807 = vmatpush1.xpose.msra.mxu0 0.0
        %2808 = vmatprep.subr.mxu0 0.0
        %2809 = vmatpush1.xpose.msra.mxu0 0.0
        %2810 = vmatprep.subr.mxu0 0.0
        %2811 = vmatpush1.xpose.msra.mxu0 0.0
        %2812 = vmatprep.subr.mxu0 0.0
        %2813 = vmatpush1.xpose.msra.mxu0 0.0
        %2814 = vmatprep.subr.mxu0 0.0
        %2815 = vmatpush1.xpose.msra.mxu0 0.0
        %2816 = vmatprep.subr.mxu0 0.0
        %2817 = vmatpush1.xpose.msra.mxu0 0.0
        %2818 = vmatprep.subr.mxu0 0.0
        %2819 = vmatpush1.xpose.msra.mxu0 0.0
        %2820 = vmatprep.subr.mxu0 0.0
        %2821 = vmatpush1.xpose.msra.mxu0 0.0
        %2822 = vmatprep.subr.mxu0 0.0
        %2823 = vmatpush1.xpose.msra.mxu0 0.0
        %2824 = vmatprep.subr.mxu0 0.0
        %2825 = vmatpush1.xpose.msra.mxu0 0.0
        %2826 = vmatprep.subr.mxu0 0.0
        %2827 = vmatpush1.xpose.msra.mxu0 0.0
        %2828 = vmatprep.subr.mxu0 0.0
        %2829 = vmatpush1.xpose.msra.mxu0 0.0
        %2830 = vmatprep.subr.mxu0 0.0
        %2831 = vmatpush1.xpose.msra.mxu0 0.0
        %2832 = vmatprep.subr.mxu0 0.0
        %2833 = vmatpush1.xpose.msra.mxu0 0.0
        %2834 = vmatprep.subr.mxu0 0.0
        %2835 = vmatpush1.xpose.msra.mxu0 0.0
        %2836 = vmatprep.subr.mxu0 0.0
        %2837 = vmatpush1.xpose.msra.mxu0 0.0
        %2838 = vmatprep.subr.mxu0 0.0
        %2839 = vmatpush1.xpose.msra.mxu0 0.0
        %2840 = vmatprep.subr.mxu0 0.0
        %2841 = vmatpush1.xpose.msra.mxu0 0.0
        %2842 = vmatprep.subr.mxu0 0.0
        %2843 = vmatpush1.xpose.msra.mxu0 0.0
        %2844 = vmatprep.subr.mxu0 0.0
        %2845 = vmatpush1.xpose.msra.mxu0 0.0
        %2846 = vmatprep.subr.mxu0 0.0
        %2847 = vmatpush1.xpose.msra.mxu0 0.0
        %2848 = vmatprep.subr.mxu0 0.0
        %2849 = vmatpush1.xpose.msra.mxu0 0.0
        %2850 = vmatprep.subr.mxu0 0.0
        %2851 = vmatpush1.xpose.msra.mxu0 0.0
        %2852 = vmatprep.subr.mxu0 0.0
        %2853 = vmatpush1.xpose.msra.mxu0 0.0
        %2854 = vmatprep.subr.mxu0 0.0
        %2855 = vmatpush1.xpose.msra.mxu0 0.0
        %2856 = vmatprep.subr.mxu0 0.0
        %2857 = vmatpush1.xpose.msra.mxu0 0.0
        %2858 = vmatprep.subr.mxu0 0.0
        %2859 = vmatpush1.xpose.msra.mxu0 0.0
        %2860 = vmatprep.mubr.f32.mxu0 0.0
        %2861 = vmatmul.mubr.f32.gmra.mrb[0].mxu0 %v2792
        %v2862 = vpop.f32.mrb[0].mxu0
        %v2863 = vadd.f32 0.0, %v2862
        %v2864 = vpop.f32.mrb[0].mxu0
        %2865 = vdwg.mxu0
        %v2866 = vmul.f32 %v2863, 0.5
        %v2867 = vsel %vm861, %v2866, -1e+09
        %v2868 = vsel %vm1027, %v2867, -inf
        %2869 = vmax.xlane.f32.xlu0 %v2868
        %v2870 = vpop.xlane.xlu0 %2869
        %v2871 = vsub.f32 %v2867, %v2870
        %v2872 = vmul.f32 %v2871, 1.442695
        %v2873 = vpow.pop %v2872
        %v2874 = vsel %vm1027, %v2873, 0.0
        %2875 = vadd.xlane.f32.xlu0 %v2874
        %v2876 = vpop.xlane.xlu0 %2875
        %v2877 = vrcp.pop %v2876
        %v2878 = vmul.f32 %v2873, %v2877
        %s2879 = scalar_lea.vmem %s839, 8 [#allocation6]
        %2880 = vst.msk [vmem:[%s2879] sm:$0xff] %vm1027, %v2878
        %2881 = vrot.lane.b32.xlu0 %v2619, 92
        %v2882 = vpop.permute.xlu0 %2881
        %v2885 = vsel %vm1027, %v2878, 0
        %2887 = vmatprep.subr.mxu0 0.0
        %2888 = vmatpush1.msra.mxu0 %v2882
        %2889 = vmatprep.subr.mxu0 0.0
        %2890 = vmatpush1.msra.mxu0 0.0
        %2891 = vmatprep.subr.mxu0 0.0
        %2892 = vmatpush1.msra.mxu0 0.0
        %2893 = vmatprep.subr.mxu0 0.0
        %2894 = vmatpush1.msra.mxu0 0.0
        %2895 = vmatprep.subr.mxu0 0.0
        %2896 = vmatpush1.msra.mxu0 0.0
        %2897 = vmatprep.subr.mxu0 0.0
        %2898 = vmatpush1.msra.mxu0 0.0
        %2899 = vmatprep.subr.mxu0 0.0
        %2900 = vmatpush1.msra.mxu0 0.0
        %2901 = vmatprep.subr.mxu0 0.0
        %2902 = vmatpush1.msra.mxu0 0.0
        %2903 = vmatprep.subr.mxu0 0.0
        %2904 = vmatpush1.msra.mxu0 0.0
        %2905 = vmatprep.subr.mxu0 0.0
        %2906 = vmatpush1.msra.mxu0 0.0
        %2907 = vmatprep.subr.mxu0 0.0
        %2908 = vmatpush1.msra.mxu0 0.0
        %2909 = vmatprep.subr.mxu0 0.0
        %2910 = vmatpush1.msra.mxu0 0.0
        %2911 = vmatprep.subr.mxu0 0.0
        %2912 = vmatpush1.msra.mxu0 0.0
        %2913 = vmatprep.subr.mxu0 0.0
        %2914 = vmatpush1.msra.mxu0 0.0
        %2915 = vmatprep.subr.mxu0 0.0
        %2916 = vmatpush1.msra.mxu0 0.0
        %2917 = vmatprep.subr.mxu0 0.0
        %2918 = vmatpush1.msra.mxu0 0.0
        %2919 = vmatprep.subr.mxu0 0.0
        %2920 = vmatpush1.msra.mxu0 0.0
        %2921 = vmatprep.subr.mxu0 0.0
        %2922 = vmatpush1.msra.mxu0 0.0
        %2923 = vmatprep.subr.mxu0 0.0
        %2924 = vmatpush1.msra.mxu0 0.0
        %2925 = vmatprep.subr.mxu0 0.0
        %2926 = vmatpush1.msra.mxu0 0.0
        %2927 = vmatprep.subr.mxu0 0.0
        %2928 = vmatpush1.msra.mxu0 0.0
        %2929 = vmatprep.subr.mxu0 0.0
        %2930 = vmatpush1.msra.mxu0 0.0
        %2931 = vmatprep.subr.mxu0 0.0
        %2932 = vmatpush1.msra.mxu0 0.0
        %2933 = vmatprep.subr.mxu0 0.0
        %2934 = vmatpush1.msra.mxu0 0.0
        %2935 = vmatprep.subr.mxu0 0.0
        %2936 = vmatpush1.msra.mxu0 0.0
        %2937 = vmatprep.subr.mxu0 0.0
        %2938 = vmatpush1.msra.mxu0 0.0
        %2939 = vmatprep.subr.mxu0 0.0
        %2940 = vmatpush1.msra.mxu0 0.0
        %2941 = vmatprep.subr.mxu0 0.0
        %2942 = vmatpush1.msra.mxu0 0.0
        %2943 = vmatprep.subr.mxu0 0.0
        %2944 = vmatpush1.msra.mxu0 0.0
        %2945 = vmatprep.subr.mxu0 0.0
        %2946 = vmatpush1.msra.mxu0 0.0
        %2947 = vmatprep.subr.mxu0 0.0
        %2948 = vmatpush1.msra.mxu0 0.0
        %2949 = vmatprep.subr.mxu0 0.0
        %2950 = vmatpush1.msra.mxu0 0.0
        %2951 = vmatprep.mubr.f32.mxu0 0.0
        %2952 = vmatmul.mubr.f32.gmra.mrb[0].mxu0 %v2885
        %v2953 = vpop.f32.mrb[0].mxu0
        %v2954 = vadd.f32 0.0, %v2953
        %v2955 = vpop.f32.mrb[0].mxu0
        %2956 = vdwg.mxu0
        %2957 = vrot.lane.b32.xlu0 %v2535, 120
        %v2958 = vpop.permute.xlu0 %2957
        %2959 = vrot.lane.b32.xlu0 %v2619, 120
        %v2960 = vpop.permute.xlu0 %2959
        %v2961 = vsel %vm950, %v2958, 0
        %v2963 = vsel %vm950, %v2960, 0
        %2965 = vmatprep.subr.mxu0 0.0
        %2966 = vmatpush1.xpose.msra.mxu0 %v2963
        %2967 = vmatprep.subr.mxu0 0.0
        %2968 = vmatpush1.xpose.msra.mxu0 0.0
        %2969 = vmatprep.subr.mxu0 0.0
        %2970 = vmatpush1.xpose.msra.mxu0 0.0
        %2971 = vmatprep.subr.mxu0 0.0
        %2972 = vmatpush1.xpose.msra.mxu0 0.0
        %2973 = vmatprep.subr.mxu0 0.0
        %2974 = vmatpush1.xpose.msra.mxu0 0.0
        %2975 = vmatprep.subr.mxu0 0.0
        %2976 = vmatpush1.xpose.msra.mxu0 0.0
        %2977 = vmatprep.subr.mxu0 0.0
        %2978 = vmatpush1.xpose.msra.mxu0 0.0
        %2979 = vmatprep.subr.mxu0 0.0
        %2980 = vmatpush1.xpose.msra.mxu0 0.0
        %2981 = vmatprep.subr.mxu0 0.0
        %2982 = vmatpush1.xpose.msra.mxu0 0.0
        %2983 = vmatprep.subr.mxu0 0.0
        %2984 = vmatpush1.xpose.msra.mxu0 0.0
        %2985 = vmatprep.subr.mxu0 0.0
        %2986 = vmatpush1.xpose.msra.mxu0 0.0
        %2987 = vmatprep.subr.mxu0 0.0
        %2988 = vmatpush1.xpose.msra.mxu0 0.0
        %2989 = vmatprep.subr.mxu0 0.0
        %2990 = vmatpush1.xpose.msra.mxu0 0.0
        %2991 = vmatprep.subr.mxu0 0.0
        %2992 = vmatpush1.xpose.msra.mxu0 0.0
        %2993 = vmatprep.subr.mxu0 0.0
        %2994 = vmatpush1.xpose.msra.mxu0 0.0
        %2995 = vmatprep.subr.mxu0 0.0
        %2996 = vmatpush1.xpose.msra.mxu0 0.0
        %2997 = vmatprep.subr.mxu0 0.0
        %2998 = vmatpush1.xpose.msra.mxu0 0.0
        %2999 = vmatprep.subr.mxu0 0.0
        %3000 = vmatpush1.xpose.msra.mxu0 0.0
        %3001 = vmatprep.subr.mxu0 0.0
        %3002 = vmatpush1.xpose.msra.mxu0 0.0
        %3003 = vmatprep.subr.mxu0 0.0
        %3004 = vmatpush1.xpose.msra.mxu0 0.0
        %3005 = vmatprep.subr.mxu0 0.0
        %3006 = vmatpush1.xpose.msra.mxu0 0.0
        %3007 = vmatprep.subr.mxu0 0.0
        %3008 = vmatpush1.xpose.msra.mxu0 0.0
        %3009 = vmatprep.subr.mxu0 0.0
        %3010 = vmatpush1.xpose.msra.mxu0 0.0
        %3011 = vmatprep.subr.mxu0 0.0
        %3012 = vmatpush1.xpose.msra.mxu0 0.0
        %3013 = vmatprep.subr.mxu0 0.0
        %3014 = vmatpush1.xpose.msra.mxu0 0.0
        %3015 = vmatprep.subr.mxu0 0.0
        %3016 = vmatpush1.xpose.msra.mxu0 0.0
        %3017 = vmatprep.subr.mxu0 0.0
        %3018 = vmatpush1.xpose.msra.mxu0 0.0
        %3019 = vmatprep.subr.mxu0 0.0
        %3020 = vmatpush1.xpose.msra.mxu0 0.0
        %3021 = vmatprep.subr.mxu0 0.0
        %3022 = vmatpush1.xpose.msra.mxu0 0.0
        %3023 = vmatprep.subr.mxu0 0.0
        %3024 = vmatpush1.xpose.msra.mxu0 0.0
        %3025 = vmatprep.subr.mxu0 0.0
        %3026 = vmatpush1.xpose.msra.mxu0 0.0
        %3027 = vmatprep.subr.mxu0 0.0
        %3028 = vmatpush1.xpose.msra.mxu0 0.0
        %3029 = vmatprep.mubr.f32.mxu0 0.0
        %3030 = vmatmul.mubr.f32.gmra.mrb[0].mxu0 %v2961
        %v3031 = vpop.f32.mrb[0].mxu0
        %v3032 = vadd.f32 0.0, %v3031
        %v3033 = vpop.f32.mrb[0].mxu0
        %3034 = vdwg.mxu0
        %v3035 = vmul.f32 %v3032, 0.5
        %v3036 = vsel %vm861, %v3035, -1e+09
        %v3037 = vsel %vm1027, %v3036, -inf
        %3038 = vmax.xlane.f32.xlu0 %v3037
        %v3039 = vpop.xlane.xlu0 %3038
        %v3040 = vsub.f32 %v3036, %v3039
        %v3041 = vmul.f32 %v3040, 1.442695
        %v3042 = vpow.pop %v3041
        %v3043 = vsel %vm1027, %v3042, 0.0
        %3044 = vadd.xlane.f32.xlu0 %v3043
        %v3045 = vpop.xlane.xlu0 %3044
        %v3046 = vrcp.pop %v3045
        %v3047 = vmul.f32 %v3042, %v3046
        %s3048 = scalar_lea.vmem %s839, 16 [#allocation6]
        %3049 = vst.msk [vmem:[%s3048] sm:$0xff] %vm1027, %v3047
        %3050 = vrot.lane.b32.xlu0 %v2619, 88
        %v3051 = vpop.permute.xlu0 %3050
        %v3054 = vsel %vm1027, %v3047, 0
        %3056 = vmatprep.subr.mxu0 0.0
        %3057 = vmatpush1.msra.mxu0 %v3051
        %3058 = vmatprep.subr.mxu0 0.0
        %3059 = vmatpush1.msra.mxu0 0.0
        %3060 = vmatprep.subr.mxu0 0.0
        %3061 = vmatpush1.msra.mxu0 0.0
        %3062 = vmatprep.subr.mxu0 0.0
        %3063 = vmatpush1.msra.mxu0 0.0
        %3064 = vmatprep.subr.mxu0 0.0
        %3065 = vmatpush1.msra.mxu0 0.0
        %3066 = vmatprep.subr.mxu0 0.0
        %3067 = vmatpush1.msra.mxu0 0.0
        %3068 = vmatprep.subr.mxu0 0.0
        %3069 = vmatpush1.msra.mxu0 0.0
        %3070 = vmatprep.subr.mxu0 0.0
        %3071 = vmatpush1.msra.mxu0 0.0
        %3072 = vmatprep.subr.mxu0 0.0
        %3073 = vmatpush1.msra.mxu0 0.0
        %3074 = vmatprep.subr.mxu0 0.0
        %3075 = vmatpush1.msra.mxu0 0.0
        %3076 = vmatprep.subr.mxu0 0.0
        %3077 = vmatpush1.msra.mxu0 0.0
        %3078 = vmatprep.subr.mxu0 0.0
        %3079 = vmatpush1.msra.mxu0 0.0
        %3080 = vmatprep.subr.mxu0 0.0
        %3081 = vmatpush1.msra.mxu0 0.0
        %3082 = vmatprep.subr.mxu0 0.0
        %3083 = vmatpush1.msra.mxu0 0.0
        %3084 = vmatprep.subr.mxu0 0.0
        %3085 = vmatpush1.msra.mxu0 0.0
        %3086 = vmatprep.subr.mxu0 0.0
        %3087 = vmatpush1.msra.mxu0 0.0
        %3088 = vmatprep.subr.mxu0 0.0
        %3089 = vmatpush1.msra.mxu0 0.0
        %3090 = vmatprep.subr.mxu0 0.0
        %3091 = vmatpush1.msra.mxu0 0.0
        %3092 = vmatprep.subr.mxu0 0.0
        %3093 = vmatpush1.msra.mxu0 0.0
        %3094 = vmatprep.subr.mxu0 0.0
        %3095 = vmatpush1.msra.mxu0 0.0
        %3096 = vmatprep.subr.mxu0 0.0
        %3097 = vmatpush1.msra.mxu0 0.0
        %3098 = vmatprep.subr.mxu0 0.0
        %3099 = vmatpush1.msra.mxu0 0.0
        %3100 = vmatprep.subr.mxu0 0.0
        %3101 = vmatpush1.msra.mxu0 0.0
        %3102 = vmatprep.subr.mxu0 0.0
        %3103 = vmatpush1.msra.mxu0 0.0
        %3104 = vmatprep.subr.mxu0 0.0
        %3105 = vmatpush1.msra.mxu0 0.0
        %3106 = vmatprep.subr.mxu0 0.0
        %3107 = vmatpush1.msra.mxu0 0.0
        %3108 = vmatprep.subr.mxu0 0.0
        %3109 = vmatpush1.msra.mxu0 0.0
        %3110 = vmatprep.subr.mxu0 0.0
        %3111 = vmatpush1.msra.mxu0 0.0
        %3112 = vmatprep.subr.mxu0 0.0
        %3113 = vmatpush1.msra.mxu0 0.0
        %3114 = vmatprep.subr.mxu0 0.0
        %3115 = vmatpush1.msra.mxu0 0.0
        %3116 = vmatprep.subr.mxu0 0.0
        %3117 = vmatpush1.msra.mxu0 0.0
        %3118 = vmatprep.subr.mxu0 0.0
        %3119 = vmatpush1.msra.mxu0 0.0
        %3120 = vmatprep.mubr.f32.mxu0 0.0
        %3121 = vmatmul.mubr.f32.gmra.mrb[0].mxu0 %v3054
        %v3122 = vpop.f32.mrb[0].mxu0
        %v3123 = vadd.f32 0.0, %v3122
        %v3124 = vpop.f32.mrb[0].mxu0
        %3125 = vdwg.mxu0
        %3126 = vrot.lane.b32.xlu0 %v2535, 116
        %v3127 = vpop.permute.xlu0 %3126
        %3128 = vrot.lane.b32.xlu0 %v2619, 116
        %v3129 = vpop.permute.xlu0 %3128
        %v3130 = vsel %vm950, %v3127, 0
        %v3132 = vsel %vm950, %v3129, 0
        %3134 = vmatprep.subr.mxu0 0.0
        %3135 = vmatpush1.xpose.msra.mxu0 %v3132
        %3136 = vmatprep.subr.mxu0 0.0
        %3137 = vmatpush1.xpose.msra.mxu0 0.0
        %3138 = vmatprep.subr.mxu0 0.0
        %3139 = vmatpush1.xpose.msra.mxu0 0.0
        %3140 = vmatprep.subr.mxu0 0.0
        %3141 = vmatpush1.xpose.msra.mxu0 0.0
        %3142 = vmatprep.subr.mxu0 0.0
        %3143 = vmatpush1.xpose.msra.mxu0 0.0
        %3144 = vmatprep.subr.mxu0 0.0
        %3145 = vmatpush1.xpose.msra.mxu0 0.0
        %3146 = vmatprep.subr.mxu0 0.0
        %3147 = vmatpush1.xpose.msra.mxu0 0.0
        %3148 = vmatprep.subr.mxu0 0.0
        %3149 = vmatpush1.xpose.msra.mxu0 0.0
        %3150 = vmatprep.subr.mxu0 0.0
        %3151 = vmatpush1.xpose.msra.mxu0 0.0
        %3152 = vmatprep.subr.mxu0 0.0
        %3153 = vmatpush1.xpose.msra.mxu0 0.0
        %3154 = vmatprep.subr.mxu0 0.0
        %3155 = vmatpush1.xpose.msra.mxu0 0.0
        %3156 = vmatprep.subr.mxu0 0.0
        %3157 = vmatpush1.xpose.msra.mxu0 0.0
        %3158 = vmatprep.subr.mxu0 0.0
        %3159 = vmatpush1.xpose.msra.mxu0 0.0
        %3160 = vmatprep.subr.mxu0 0.0
        %3161 = vmatpush1.xpose.msra.mxu0 0.0
        %3162 = vmatprep.subr.mxu0 0.0
        %3163 = vmatpush1.xpose.msra.mxu0 0.0
        %3164 = vmatprep.subr.mxu0 0.0
        %3165 = vmatpush1.xpose.msra.mxu0 0.0
        %3166 = vmatprep.subr.mxu0 0.0
        %3167 = vmatpush1.xpose.msra.mxu0 0.0
        %3168 = vmatprep.subr.mxu0 0.0
        %3169 = vmatpush1.xpose.msra.mxu0 0.0
        %3170 = vmatprep.subr.mxu0 0.0
        %3171 = vmatpush1.xpose.msra.mxu0 0.0
        %3172 = vmatprep.subr.mxu0 0.0
        %3173 = vmatpush1.xpose.msra.mxu0 0.0
        %3174 = vmatprep.subr.mxu0 0.0
        %3175 = vmatpush1.xpose.msra.mxu0 0.0
        %3176 = vmatprep.subr.mxu0 0.0
        %3177 = vmatpush1.xpose.msra.mxu0 0.0
        %3178 = vmatprep.subr.mxu0 0.0
        %3179 = vmatpush1.xpose.msra.mxu0 0.0
        %3180 = vmatprep.subr.mxu0 0.0
        %3181 = vmatpush1.xpose.msra.mxu0 0.0
        %3182 = vmatprep.subr.mxu0 0.0
        %3183 = vmatpush1.xpose.msra.mxu0 0.0
        %3184 = vmatprep.subr.mxu0 0.0
        %3185 = vmatpush1.xpose.msra.mxu0 0.0
        %3186 = vmatprep.subr.mxu0 0.0
        %3187 = vmatpush1.xpose.msra.mxu0 0.0
        %3188 = vmatprep.subr.mxu0 0.0
        %3189 = vmatpush1.xpose.msra.mxu0 0.0
        %3190 = vmatprep.subr.mxu0 0.0
        %3191 = vmatpush1.xpose.msra.mxu0 0.0
        %3192 = vmatprep.subr.mxu0 0.0
        %3193 = vmatpush1.xpose.msra.mxu0 0.0
        %3194 = vmatprep.subr.mxu0 0.0
        %3195 = vmatpush1.xpose.msra.mxu0 0.0
        %3196 = vmatprep.subr.mxu0 0.0
        %3197 = vmatpush1.xpose.msra.mxu0 0.0
        %3198 = vmatprep.mubr.f32.mxu0 0.0
        %3199 = vmatmul.mubr.f32.gmra.mrb[0].mxu0 %v3130
        %v3200 = vpop.f32.mrb[0].mxu0
        %v3201 = vadd.f32 0.0, %v3200
        %v3202 = vpop.f32.mrb[0].mxu0
        %3203 = vdwg.mxu0
        %v3204 = vmul.f32 %v3201, 0.5
        %v3205 = vsel %vm861, %v3204, -1e+09
        %v3206 = vsel %vm1027, %v3205, -inf
        %3207 = vmax.xlane.f32.xlu0 %v3206
        %v3208 = vpop.xlane.xlu0 %3207
        %v3209 = vsub.f32 %v3205, %v3208
        %v3210 = vmul.f32 %v3209, 1.442695
        %v3211 = vpow.pop %v3210
        %v3212 = vsel %vm1027, %v3211, 0.0
        %3213 = vadd.xlane.f32.xlu0 %v3212
        %v3214 = vpop.xlane.xlu0 %3213
        %v3215 = vrcp.pop %v3214
        %v3216 = vmul.f32 %v3211, %v3215
        %s3217 = scalar_lea.vmem %s839, 24 [#allocation6]
        %3218 = vst.msk [vmem:[%s3217] sm:$0xff] %vm1027, %v3216
        %3219 = vrot.lane.b32.xlu0 %v2619, 84
        %v3220 = vpop.permute.xlu0 %3219
        %v3223 = vsel %vm1027, %v3216, 0
        %3225 = vmatprep.subr.mxu0 0.0
        %3226 = vmatpush1.msra.mxu0 %v3220
        %3227 = vmatprep.subr.mxu0 0.0
        %3228 = vmatpush1.msra.mxu0 0.0
        %3229 = vmatprep.subr.mxu0 0.0
        %3230 = vmatpush1.msra.mxu0 0.0
        %3231 = vmatprep.subr.mxu0 0.0
        %3232 = vmatpush1.msra.mxu0 0.0
        %3233 = vmatprep.subr.mxu0 0.0
        %3234 = vmatpush1.msra.mxu0 0.0
        %3235 = vmatprep.subr.mxu0 0.0
        %3236 = vmatpush1.msra.mxu0 0.0
        %3237 = vmatprep.subr.mxu0 0.0
        %3238 = vmatpush1.msra.mxu0 0.0
        %3239 = vmatprep.subr.mxu0 0.0
        %3240 = vmatpush1.msra.mxu0 0.0
        %3241 = vmatprep.subr.mxu0 0.0
        %3242 = vmatpush1.msra.mxu0 0.0
        %3243 = vmatprep.subr.mxu0 0.0
        %3244 = vmatpush1.msra.mxu0 0.0
        %3245 = vmatprep.subr.mxu0 0.0
        %3246 = vmatpush1.msra.mxu0 0.0
        %3247 = vmatprep.subr.mxu0 0.0
        %3248 = vmatpush1.msra.mxu0 0.0
        %3249 = vmatprep.subr.mxu0 0.0
        %3250 = vmatpush1.msra.mxu0 0.0
        %3251 = vmatprep.subr.mxu0 0.0
        %3252 = vmatpush1.msra.mxu0 0.0
        %3253 = vmatprep.subr.mxu0 0.0
        %3254 = vmatpush1.msra.mxu0 0.0
        %3255 = vmatprep.subr.mxu0 0.0
        %3256 = vmatpush1.msra.mxu0 0.0
        %3257 = vmatprep.subr.mxu0 0.0
        %3258 = vmatpush1.msra.mxu0 0.0
        %3259 = vmatprep.subr.mxu0 0.0
        %3260 = vmatpush1.msra.mxu0 0.0
        %3261 = vmatprep.subr.mxu0 0.0
        %3262 = vmatpush1.msra.mxu0 0.0
        %3263 = vmatprep.subr.mxu0 0.0
        %3264 = vmatpush1.msra.mxu0 0.0
        %3265 = vmatprep.subr.mxu0 0.0
        %3266 = vmatpush1.msra.mxu0 0.0
        %3267 = vmatprep.subr.mxu0 0.0
        %3268 = vmatpush1.msra.mxu0 0.0
        %3269 = vmatprep.subr.mxu0 0.0
        %3270 = vmatpush1.msra.mxu0 0.0
        %3271 = vmatprep.subr.mxu0 0.0
        %3272 = vmatpush1.msra.mxu0 0.0
        %3273 = vmatprep.subr.mxu0 0.0
        %3274 = vmatpush1.msra.mxu0 0.0
        %3275 = vmatprep.subr.mxu0 0.0
        %3276 = vmatpush1.msra.mxu0 0.0
        %3277 = vmatprep.subr.mxu0 0.0
        %3278 = vmatpush1.msra.mxu0 0.0
        %3279 = vmatprep.subr.mxu0 0.0
        %3280 = vmatpush1.msra.mxu0 0.0
        %3281 = vmatprep.subr.mxu0 0.0
        %3282 = vmatpush1.msra.mxu0 0.0
        %3283 = vmatprep.subr.mxu0 0.0
        %3284 = vmatpush1.msra.mxu0 0.0
        %3285 = vmatprep.subr.mxu0 0.0
        %3286 = vmatpush1.msra.mxu0 0.0
        %3287 = vmatprep.subr.mxu0 0.0
        %3288 = vmatpush1.msra.mxu0 0.0
        %3289 = vmatprep.mubr.f32.mxu0 0.0
        %3290 = vmatmul.mubr.f32.gmra.mrb[0].mxu0 %v3223
        %v3291 = vpop.f32.mrb[0].mxu0
        %v3292 = vadd.f32 0.0, %v3291
        %v3293 = vpop.f32.mrb[0].mxu0
        %3294 = vdwg.mxu0
        %3295 = vrot.lane.b32.xlu0 %v2535, 112
        %v3296 = vpop.permute.xlu0 %3295
        %3297 = vrot.lane.b32.xlu0 %v2619, 112
        %v3298 = vpop.permute.xlu0 %3297
        %v3299 = vsel %vm950, %v3296, 0
        %v3301 = vsel %vm950, %v3298, 0
        %3303 = vmatprep.subr.mxu0 0.0
        %3304 = vmatpush1.xpose.msra.mxu0 %v3301
        %3305 = vmatprep.subr.mxu0 0.0
        %3306 = vmatpush1.xpose.msra.mxu0 0.0
        %3307 = vmatprep.subr.mxu0 0.0
        %3308 = vmatpush1.xpose.msra.mxu0 0.0
        %3309 = vmatprep.subr.mxu0 0.0
        %3310 = vmatpush1.xpose.msra.mxu0 0.0
        %3311 = vmatprep.subr.mxu0 0.0
        %3312 = vmatpush1.xpose.msra.mxu0 0.0
        %3313 = vmatprep.subr.mxu0 0.0
        %3314 = vmatpush1.xpose.msra.mxu0 0.0
        %3315 = vmatprep.subr.mxu0 0.0
        %3316 = vmatpush1.xpose.msra.mxu0 0.0
        %3317 = vmatprep.subr.mxu0 0.0
        %3318 = vmatpush1.xpose.msra.mxu0 0.0
        %3319 = vmatprep.subr.mxu0 0.0
        %3320 = vmatpush1.xpose.msra.mxu0 0.0
        %3321 = vmatprep.subr.mxu0 0.0
        %3322 = vmatpush1.xpose.msra.mxu0 0.0
        %3323 = vmatprep.subr.mxu0 0.0
        %3324 = vmatpush1.xpose.msra.mxu0 0.0
        %3325 = vmatprep.subr.mxu0 0.0
        %3326 = vmatpush1.xpose.msra.mxu0 0.0
        %3327 = vmatprep.subr.mxu0 0.0
        %3328 = vmatpush1.xpose.msra.mxu0 0.0
        %3329 = vmatprep.subr.mxu0 0.0
        %3330 = vmatpush1.xpose.msra.mxu0 0.0
        %3331 = vmatprep.subr.mxu0 0.0
        %3332 = vmatpush1.xpose.msra.mxu0 0.0
        %3333 = vmatprep.subr.mxu0 0.0
        %3334 = vmatpush1.xpose.msra.mxu0 0.0
        %3335 = vmatprep.subr.mxu0 0.0
        %3336 = vmatpush1.xpose.msra.mxu0 0.0
        %3337 = vmatprep.subr.mxu0 0.0
        %3338 = vmatpush1.xpose.msra.mxu0 0.0
        %3339 = vmatprep.subr.mxu0 0.0
        %3340 = vmatpush1.xpose.msra.mxu0 0.0
        %3341 = vmatprep.subr.mxu0 0.0
        %3342 = vmatpush1.xpose.msra.mxu0 0.0
        %3343 = vmatprep.subr.mxu0 0.0
        %3344 = vmatpush1.xpose.msra.mxu0 0.0
        %3345 = vmatprep.subr.mxu0 0.0
        %3346 = vmatpush1.xpose.msra.mxu0 0.0
        %3347 = vmatprep.subr.mxu0 0.0
        %3348 = vmatpush1.xpose.msra.mxu0 0.0
        %3349 = vmatprep.subr.mxu0 0.0
        %3350 = vmatpush1.xpose.msra.mxu0 0.0
        %3351 = vmatprep.subr.mxu0 0.0
        %3352 = vmatpush1.xpose.msra.mxu0 0.0
        %3353 = vmatprep.subr.mxu0 0.0
        %3354 = vmatpush1.xpose.msra.mxu0 0.0
        %3355 = vmatprep.subr.mxu0 0.0
        %3356 = vmatpush1.xpose.msra.mxu0 0.0
        %3357 = vmatprep.subr.mxu0 0.0
        %3358 = vmatpush1.xpose.msra.mxu0 0.0
        %3359 = vmatprep.subr.mxu0 0.0
        %3360 = vmatpush1.xpose.msra.mxu0 0.0
        %3361 = vmatprep.subr.mxu0 0.0
        %3362 = vmatpush1.xpose.msra.mxu0 0.0
        %3363 = vmatprep.subr.mxu0 0.0
        %3364 = vmatpush1.xpose.msra.mxu0 0.0
        %3365 = vmatprep.subr.mxu0 0.0
        %3366 = vmatpush1.xpose.msra.mxu0 0.0
        %3367 = vmatprep.mubr.f32.mxu0 0.0
        %3368 = vmatmul.mubr.f32.gmra.mrb[0].mxu0 %v3299
        %v3369 = vpop.f32.mrb[0].mxu0
        %v3370 = vadd.f32 0.0, %v3369
        %v3371 = vpop.f32.mrb[0].mxu0
        %3372 = vdwg.mxu0
        %v3373 = vmul.f32 %v3370, 0.5
        %v3374 = vsel %vm861, %v3373, -1e+09
        %v3375 = vsel %vm1027, %v3374, -inf
        %3376 = vmax.xlane.f32.xlu0 %v3375
        %v3377 = vpop.xlane.xlu0 %3376
        %v3378 = vsub.f32 %v3374, %v3377
        %v3379 = vmul.f32 %v3378, 1.442695
        %v3380 = vpow.pop %v3379
        %v3381 = vsel %vm1027, %v3380, 0.0
        %3382 = vadd.xlane.f32.xlu0 %v3381
        %v3383 = vpop.xlane.xlu0 %3382
        %v3384 = vrcp.pop %v3383
        %v3385 = vmul.f32 %v3380, %v3384
        %s3386 = scalar_lea.vmem %s839, 32 [#allocation6]
        %3387 = vst.msk [vmem:[%s3386] sm:$0xff] %vm1027, %v3385
        %3388 = vrot.lane.b32.xlu0 %v2619, 80
        %v3389 = vpop.permute.xlu0 %3388
        %v3392 = vsel %vm1027, %v3385, 0
        %3394 = vmatprep.subr.mxu0 0.0
        %3395 = vmatpush1.msra.mxu0 %v3389
        %3396 = vmatprep.subr.mxu0 0.0
        %3397 = vmatpush1.msra.mxu0 0.0
        %3398 = vmatprep.subr.mxu0 0.0
        %3399 = vmatpush1.msra.mxu0 0.0
        %3400 = vmatprep.subr.mxu0 0.0
        %3401 = vmatpush1.msra.mxu0 0.0
        %3402 = vmatprep.subr.mxu0 0.0
        %3403 = vmatpush1.msra.mxu0 0.0
        %3404 = vmatprep.subr.mxu0 0.0
        %3405 = vmatpush1.msra.mxu0 0.0
        %3406 = vmatprep.subr.mxu0 0.0
        %3407 = vmatpush1.msra.mxu0 0.0
        %3408 = vmatprep.subr.mxu0 0.0
        %3409 = vmatpush1.msra.mxu0 0.0
        %3410 = vmatprep.subr.mxu0 0.0
        %3411 = vmatpush1.msra.mxu0 0.0
        %3412 = vmatprep.subr.mxu0 0.0
        %3413 = vmatpush1.msra.mxu0 0.0
        %3414 = vmatprep.subr.mxu0 0.0
        %3415 = vmatpush1.msra.mxu0 0.0
        %3416 = vmatprep.subr.mxu0 0.0
        %3417 = vmatpush1.msra.mxu0 0.0
        %3418 = vmatprep.subr.mxu0 0.0
        %3419 = vmatpush1.msra.mxu0 0.0
        %3420 = vmatprep.subr.mxu0 0.0
        %3421 = vmatpush1.msra.mxu0 0.0
        %3422 = vmatprep.subr.mxu0 0.0
        %3423 = vmatpush1.msra.mxu0 0.0
        %3424 = vmatprep.subr.mxu0 0.0
        %3425 = vmatpush1.msra.mxu0 0.0
        %3426 = vmatprep.subr.mxu0 0.0
        %3427 = vmatpush1.msra.mxu0 0.0
        %3428 = vmatprep.subr.mxu0 0.0
        %3429 = vmatpush1.msra.mxu0 0.0
        %3430 = vmatprep.subr.mxu0 0.0
        %3431 = vmatpush1.msra.mxu0 0.0
        %3432 = vmatprep.subr.mxu0 0.0
        %3433 = vmatpush1.msra.mxu0 0.0
        %3434 = vmatprep.subr.mxu0 0.0
        %3435 = vmatpush1.msra.mxu0 0.0
        %3436 = vmatprep.subr.mxu0 0.0
        %3437 = vmatpush1.msra.mxu0 0.0
        %3438 = vmatprep.subr.mxu0 0.0
        %3439 = vmatpush1.msra.mxu0 0.0
        %3440 = vmatprep.subr.mxu0 0.0
        %3441 = vmatpush1.msra.mxu0 0.0
        %3442 = vmatprep.subr.mxu0 0.0
        %3443 = vmatpush1.msra.mxu0 0.0
        %3444 = vmatprep.subr.mxu0 0.0
        %3445 = vmatpush1.msra.mxu0 0.0
        %3446 = vmatprep.subr.mxu0 0.0
        %3447 = vmatpush1.msra.mxu0 0.0
        %3448 = vmatprep.subr.mxu0 0.0
        %3449 = vmatpush1.msra.mxu0 0.0
        %3450 = vmatprep.subr.mxu0 0.0
        %3451 = vmatpush1.msra.mxu0 0.0
        %3452 = vmatprep.subr.mxu0 0.0
        %3453 = vmatpush1.msra.mxu0 0.0
        %3454 = vmatprep.subr.mxu0 0.0
        %3455 = vmatpush1.msra.mxu0 0.0
        %3456 = vmatprep.subr.mxu0 0.0
        %3457 = vmatpush1.msra.mxu0 0.0
        %3458 = vmatprep.mubr.f32.mxu0 0.0
        %3459 = vmatmul.mubr.f32.gmra.mrb[0].mxu0 %v3392
        %v3460 = vpop.f32.mrb[0].mxu0
        %v3461 = vadd.f32 0.0, %v3460
        %v3462 = vpop.f32.mrb[0].mxu0
        %3463 = vdwg.mxu0
        %3464 = vrot.lane.b32.xlu0 %v2535, 108
        %v3465 = vpop.permute.xlu0 %3464
        %3466 = vrot.lane.b32.xlu0 %v2619, 108
        %v3467 = vpop.permute.xlu0 %3466
        %v3468 = vsel %vm950, %v3465, 0
        %v3470 = vsel %vm950, %v3467, 0
        %3472 = vmatprep.subr.mxu0 0.0
        %3473 = vmatpush1.xpose.msra.mxu0 %v3470
        %3474 = vmatprep.subr.mxu0 0.0
        %3475 = vmatpush1.xpose.msra.mxu0 0.0
        %3476 = vmatprep.subr.mxu0 0.0
        %3477 = vmatpush1.xpose.msra.mxu0 0.0
        %3478 = vmatprep.subr.mxu0 0.0
        %3479 = vmatpush1.xpose.msra.mxu0 0.0
        %3480 = vmatprep.subr.mxu0 0.0
        %3481 = vmatpush1.xpose.msra.mxu0 0.0
        %3482 = vmatprep.subr.mxu0 0.0
        %3483 = vmatpush1.xpose.msra.mxu0 0.0
        %3484 = vmatprep.subr.mxu0 0.0
        %3485 = vmatpush1.xpose.msra.mxu0 0.0
        %3486 = vmatprep.subr.mxu0 0.0
        %3487 = vmatpush1.xpose.msra.mxu0 0.0
        %3488 = vmatprep.subr.mxu0 0.0
        %3489 = vmatpush1.xpose.msra.mxu0 0.0
        %3490 = vmatprep.subr.mxu0 0.0
        %3491 = vmatpush1.xpose.msra.mxu0 0.0
        %3492 = vmatprep.subr.mxu0 0.0
        %3493 = vmatpush1.xpose.msra.mxu0 0.0
        %3494 = vmatprep.subr.mxu0 0.0
        %3495 = vmatpush1.xpose.msra.mxu0 0.0
        %3496 = vmatprep.subr.mxu0 0.0
        %3497 = vmatpush1.xpose.msra.mxu0 0.0
        %3498 = vmatprep.subr.mxu0 0.0
        %3499 = vmatpush1.xpose.msra.mxu0 0.0
        %3500 = vmatprep.subr.mxu0 0.0
        %3501 = vmatpush1.xpose.msra.mxu0 0.0
        %3502 = vmatprep.subr.mxu0 0.0
        %3503 = vmatpush1.xpose.msra.mxu0 0.0
        %3504 = vmatprep.subr.mxu0 0.0
        %3505 = vmatpush1.xpose.msra.mxu0 0.0
        %3506 = vmatprep.subr.mxu0 0.0
        %3507 = vmatpush1.xpose.msra.mxu0 0.0
        %3508 = vmatprep.subr.mxu0 0.0
        %3509 = vmatpush1.xpose.msra.mxu0 0.0
        %3510 = vmatprep.subr.mxu0 0.0
        %3511 = vmatpush1.xpose.msra.mxu0 0.0
        %3512 = vmatprep.subr.mxu0 0.0
        %3513 = vmatpush1.xpose.msra.mxu0 0.0
        %3514 = vmatprep.subr.mxu0 0.0
        %3515 = vmatpush1.xpose.msra.mxu0 0.0
        %3516 = vmatprep.subr.mxu0 0.0
        %3517 = vmatpush1.xpose.msra.mxu0 0.0
        %3518 = vmatprep.subr.mxu0 0.0
        %3519 = vmatpush1.xpose.msra.mxu0 0.0
        %3520 = vmatprep.subr.mxu0 0.0
        %3521 = vmatpush1.xpose.msra.mxu0 0.0
        %3522 = vmatprep.subr.mxu0 0.0
        %3523 = vmatpush1.xpose.msra.mxu0 0.0
        %3524 = vmatprep.subr.mxu0 0.0
        %3525 = vmatpush1.xpose.msra.mxu0 0.0
        %3526 = vmatprep.subr.mxu0 0.0
        %3527 = vmatpush1.xpose.msra.mxu0 0.0
        %3528 = vmatprep.subr.mxu0 0.0
        %3529 = vmatpush1.xpose.msra.mxu0 0.0
        %3530 = vmatprep.subr.mxu0 0.0
        %3531 = vmatpush1.xpose.msra.mxu0 0.0
        %3532 = vmatprep.subr.mxu0 0.0
        %3533 = vmatpush1.xpose.msra.mxu0 0.0
        %3534 = vmatprep.subr.mxu0 0.0
        %3535 = vmatpush1.xpose.msra.mxu0 0.0
        %3536 = vmatprep.mubr.f32.mxu0 0.0
        %3537 = vmatmul.mubr.f32.gmra.mrb[0].mxu0 %v3468
        %v3538 = vpop.f32.mrb[0].mxu0
        %v3539 = vadd.f32 0.0, %v3538
        %v3540 = vpop.f32.mrb[0].mxu0
        %3541 = vdwg.mxu0
        %v3542 = vmul.f32 %v3539, 0.5
        %v3543 = vsel %vm861, %v3542, -1e+09
        %v3544 = vsel %vm1027, %v3543, -inf
        %3545 = vmax.xlane.f32.xlu0 %v3544
        %v3546 = vpop.xlane.xlu0 %3545
        %v3547 = vsub.f32 %v3543, %v3546
        %v3548 = vmul.f32 %v3547, 1.442695
        %v3549 = vpow.pop %v3548
        %v3550 = vsel %vm1027, %v3549, 0.0
        %3551 = vadd.xlane.f32.xlu0 %v3550
        %v3552 = vpop.xlane.xlu0 %3551
        %v3553 = vrcp.pop %v3552
        %v3554 = vmul.f32 %v3549, %v3553
        %s3555 = scalar_lea.vmem %s839, 40 [#allocation6]
        %3556 = vst.msk [vmem:[%s3555] sm:$0xff] %vm1027, %v3554
        %3557 = vrot.lane.b32.xlu0 %v2619, 76
        %v3558 = vpop.permute.xlu0 %3557
        %v3561 = vsel %vm1027, %v3554, 0
        %3563 = vmatprep.subr.mxu0 0.0
        %3564 = vmatpush1.msra.mxu0 %v3558
        %3565 = vmatprep.subr.mxu0 0.0
        %3566 = vmatpush1.msra.mxu0 0.0
        %3567 = vmatprep.subr.mxu0 0.0
        %3568 = vmatpush1.msra.mxu0 0.0
        %3569 = vmatprep.subr.mxu0 0.0
        %3570 = vmatpush1.msra.mxu0 0.0
        %3571 = vmatprep.subr.mxu0 0.0
        %3572 = vmatpush1.msra.mxu0 0.0
        %3573 = vmatprep.subr.mxu0 0.0
        %3574 = vmatpush1.msra.mxu0 0.0
        %3575 = vmatprep.subr.mxu0 0.0
        %3576 = vmatpush1.msra.mxu0 0.0
        %3577 = vmatprep.subr.mxu0 0.0
        %3578 = vmatpush1.msra.mxu0 0.0
        %3579 = vmatprep.subr.mxu0 0.0
        %3580 = vmatpush1.msra.mxu0 0.0
        %3581 = vmatprep.subr.mxu0 0.0
        %3582 = vmatpush1.msra.mxu0 0.0
        %3583 = vmatprep.subr.mxu0 0.0
        %3584 = vmatpush1.msra.mxu0 0.0
        %3585 = vmatprep.subr.mxu0 0.0
        %3586 = vmatpush1.msra.mxu0 0.0
        %3587 = vmatprep.subr.mxu0 0.0
        %3588 = vmatpush1.msra.mxu0 0.0
        %3589 = vmatprep.subr.mxu0 0.0
        %3590 = vmatpush1.msra.mxu0 0.0
        %3591 = vmatprep.subr.mxu0 0.0
        %3592 = vmatpush1.msra.mxu0 0.0
        %3593 = vmatprep.subr.mxu0 0.0
        %3594 = vmatpush1.msra.mxu0 0.0
        %3595 = vmatprep.subr.mxu0 0.0
        %3596 = vmatpush1.msra.mxu0 0.0
        %3597 = vmatprep.subr.mxu0 0.0
        %3598 = vmatpush1.msra.mxu0 0.0
        %3599 = vmatprep.subr.mxu0 0.0
        %3600 = vmatpush1.msra.mxu0 0.0
        %3601 = vmatprep.subr.mxu0 0.0
        %3602 = vmatpush1.msra.mxu0 0.0
        %3603 = vmatprep.subr.mxu0 0.0
        %3604 = vmatpush1.msra.mxu0 0.0
        %3605 = vmatprep.subr.mxu0 0.0
        %3606 = vmatpush1.msra.mxu0 0.0
        %3607 = vmatprep.subr.mxu0 0.0
        %3608 = vmatpush1.msra.mxu0 0.0
        %3609 = vmatprep.subr.mxu0 0.0
        %3610 = vmatpush1.msra.mxu0 0.0
        %3611 = vmatprep.subr.mxu0 0.0
        %3612 = vmatpush1.msra.mxu0 0.0
        %3613 = vmatprep.subr.mxu0 0.0
        %3614 = vmatpush1.msra.mxu0 0.0
        %3615 = vmatprep.subr.mxu0 0.0
        %3616 = vmatpush1.msra.mxu0 0.0
        %3617 = vmatprep.subr.mxu0 0.0
        %3618 = vmatpush1.msra.mxu0 0.0
        %3619 = vmatprep.subr.mxu0 0.0
        %3620 = vmatpush1.msra.mxu0 0.0
        %3621 = vmatprep.subr.mxu0 0.0
        %3622 = vmatpush1.msra.mxu0 0.0
        %3623 = vmatprep.subr.mxu0 0.0
        %3624 = vmatpush1.msra.mxu0 0.0
        %3625 = vmatprep.subr.mxu0 0.0
        %3626 = vmatpush1.msra.mxu0 0.0
        %3627 = vmatprep.mubr.f32.mxu0 0.0
        %3628 = vmatmul.mubr.f32.gmra.mrb[0].mxu0 %v3561
        %v3629 = vpop.f32.mrb[0].mxu0
        %v3630 = vadd.f32 0.0, %v3629
        %v3631 = vpop.f32.mrb[0].mxu0
        %3632 = vdwg.mxu0
        %3633 = vrot.lane.b32.xlu0 %v2535, 104
        %v3634 = vpop.permute.xlu0 %3633
        %3635 = vrot.lane.b32.xlu0 %v2619, 104
        %v3636 = vpop.permute.xlu0 %3635
        %v3637 = vsel %vm950, %v3634, 0
        %v3639 = vsel %vm950, %v3636, 0
        %3641 = vmatprep.subr.mxu0 0.0
        %3642 = vmatpush1.xpose.msra.mxu0 %v3639
        %3643 = vmatprep.subr.mxu0 0.0
        %3644 = vmatpush1.xpose.msra.mxu0 0.0
        %3645 = vmatprep.subr.mxu0 0.0
        %3646 = vmatpush1.xpose.msra.mxu0 0.0
        %3647 = vmatprep.subr.mxu0 0.0
        %3648 = vmatpush1.xpose.msra.mxu0 0.0
        %3649 = vmatprep.subr.mxu0 0.0
        %3650 = vmatpush1.xpose.msra.mxu0 0.0
        %3651 = vmatprep.subr.mxu0 0.0
        %3652 = vmatpush1.xpose.msra.mxu0 0.0
        %3653 = vmatprep.subr.mxu0 0.0
        %3654 = vmatpush1.xpose.msra.mxu0 0.0
        %3655 = vmatprep.subr.mxu0 0.0
        %3656 = vmatpush1.xpose.msra.mxu0 0.0
        %3657 = vmatprep.subr.mxu0 0.0
        %3658 = vmatpush1.xpose.msra.mxu0 0.0
        %3659 = vmatprep.subr.mxu0 0.0
        %3660 = vmatpush1.xpose.msra.mxu0 0.0
        %3661 = vmatprep.subr.mxu0 0.0
        %3662 = vmatpush1.xpose.msra.mxu0 0.0
        %3663 = vmatprep.subr.mxu0 0.0
        %3664 = vmatpush1.xpose.msra.mxu0 0.0
        %3665 = vmatprep.subr.mxu0 0.0
        %3666 = vmatpush1.xpose.msra.mxu0 0.0
        %3667 = vmatprep.subr.mxu0 0.0
        %3668 = vmatpush1.xpose.msra.mxu0 0.0
        %3669 = vmatprep.subr.mxu0 0.0
        %3670 = vmatpush1.xpose.msra.mxu0 0.0
        %3671 = vmatprep.subr.mxu0 0.0
        %3672 = vmatpush1.xpose.msra.mxu0 0.0
        %3673 = vmatprep.subr.mxu0 0.0
        %3674 = vmatpush1.xpose.msra.mxu0 0.0
        %3675 = vmatprep.subr.mxu0 0.0
        %3676 = vmatpush1.xpose.msra.mxu0 0.0
        %3677 = vmatprep.subr.mxu0 0.0
        %3678 = vmatpush1.xpose.msra.mxu0 0.0
        %3679 = vmatprep.subr.mxu0 0.0
        %3680 = vmatpush1.xpose.msra.mxu0 0.0
        %3681 = vmatprep.subr.mxu0 0.0
        %3682 = vmatpush1.xpose.msra.mxu0 0.0
        %3683 = vmatprep.subr.mxu0 0.0
        %3684 = vmatpush1.xpose.msra.mxu0 0.0
        %3685 = vmatprep.subr.mxu0 0.0
        %3686 = vmatpush1.xpose.msra.mxu0 0.0
        %3687 = vmatprep.subr.mxu0 0.0
        %3688 = vmatpush1.xpose.msra.mxu0 0.0
        %3689 = vmatprep.subr.mxu0 0.0
        %3690 = vmatpush1.xpose.msra.mxu0 0.0
        %3691 = vmatprep.subr.mxu0 0.0
        %3692 = vmatpush1.xpose.msra.mxu0 0.0
        %3693 = vmatprep.subr.mxu0 0.0
        %3694 = vmatpush1.xpose.msra.mxu0 0.0
        %3695 = vmatprep.subr.mxu0 0.0
        %3696 = vmatpush1.xpose.msra.mxu0 0.0
        %3697 = vmatprep.subr.mxu0 0.0
        %3698 = vmatpush1.xpose.msra.mxu0 0.0
        %3699 = vmatprep.subr.mxu0 0.0
        %3700 = vmatpush1.xpose.msra.mxu0 0.0
        %3701 = vmatprep.subr.mxu0 0.0
        %3702 = vmatpush1.xpose.msra.mxu0 0.0
        %3703 = vmatprep.subr.mxu0 0.0
        %3704 = vmatpush1.xpose.msra.mxu0 0.0
        %3705 = vmatprep.mubr.f32.mxu0 0.0
        %3706 = vmatmul.mubr.f32.gmra.mrb[0].mxu0 %v3637
        %v3707 = vpop.f32.mrb[0].mxu0
        %v3708 = vadd.f32 0.0, %v3707
        %v3709 = vpop.f32.mrb[0].mxu0
        %3710 = vdwg.mxu0
        %v3711 = vmul.f32 %v3708, 0.5
        %v3712 = vsel %vm861, %v3711, -1e+09
        %v3713 = vsel %vm1027, %v3712, -inf
        %3714 = vmax.xlane.f32.xlu0 %v3713
        %v3715 = vpop.xlane.xlu0 %3714
        %v3716 = vsub.f32 %v3712, %v3715
        %v3717 = vmul.f32 %v3716, 1.442695
        %v3718 = vpow.pop %v3717
        %v3719 = vsel %vm1027, %v3718, 0.0
        %3720 = vadd.xlane.f32.xlu0 %v3719
        %v3721 = vpop.xlane.xlu0 %3720
        %v3722 = vrcp.pop %v3721
        %v3723 = vmul.f32 %v3718, %v3722
        %s3724 = scalar_lea.vmem %s839, 48 [#allocation6]
        %3725 = vst.msk [vmem:[%s3724] sm:$0xff] %vm1027, %v3723
        %3726 = vrot.lane.b32.xlu0 %v2619, 72
        %v3727 = vpop.permute.xlu0 %3726
        %v3730 = vsel %vm1027, %v3723, 0
        %3732 = vmatprep.subr.mxu0 0.0
        %3733 = vmatpush1.msra.mxu0 %v3727
        %3734 = vmatprep.subr.mxu0 0.0
        %3735 = vmatpush1.msra.mxu0 0.0
        %3736 = vmatprep.subr.mxu0 0.0
        %3737 = vmatpush1.msra.mxu0 0.0
        %3738 = vmatprep.subr.mxu0 0.0
        %3739 = vmatpush1.msra.mxu0 0.0
        %3740 = vmatprep.subr.mxu0 0.0
        %3741 = vmatpush1.msra.mxu0 0.0
        %3742 = vmatprep.subr.mxu0 0.0
        %3743 = vmatpush1.msra.mxu0 0.0
        %3744 = vmatprep.subr.mxu0 0.0
        %3745 = vmatpush1.msra.mxu0 0.0
        %3746 = vmatprep.subr.mxu0 0.0
        %3747 = vmatpush1.msra.mxu0 0.0
        %3748 = vmatprep.subr.mxu0 0.0
        %3749 = vmatpush1.msra.mxu0 0.0
        %3750 = vmatprep.subr.mxu0 0.0
        %3751 = vmatpush1.msra.mxu0 0.0
        %3752 = vmatprep.subr.mxu0 0.0
        %3753 = vmatpush1.msra.mxu0 0.0
        %3754 = vmatprep.subr.mxu0 0.0
        %3755 = vmatpush1.msra.mxu0 0.0
        %3756 = vmatprep.subr.mxu0 0.0
        %3757 = vmatpush1.msra.mxu0 0.0
        %3758 = vmatprep.subr.mxu0 0.0
        %3759 = vmatpush1.msra.mxu0 0.0
        %3760 = vmatprep.subr.mxu0 0.0
        %3761 = vmatpush1.msra.mxu0 0.0
        %3762 = vmatprep.subr.mxu0 0.0
        %3763 = vmatpush1.msra.mxu0 0.0
        %3764 = vmatprep.subr.mxu0 0.0
        %3765 = vmatpush1.msra.mxu0 0.0
        %3766 = vmatprep.subr.mxu0 0.0
        %3767 = vmatpush1.msra.mxu0 0.0
        %3768 = vmatprep.subr.mxu0 0.0
        %3769 = vmatpush1.msra.mxu0 0.0
        %3770 = vmatprep.subr.mxu0 0.0
        %3771 = vmatpush1.msra.mxu0 0.0
        %3772 = vmatprep.subr.mxu0 0.0
        %3773 = vmatpush1.msra.mxu0 0.0
        %3774 = vmatprep.subr.mxu0 0.0
        %3775 = vmatpush1.msra.mxu0 0.0
        %3776 = vmatprep.subr.mxu0 0.0
        %3777 = vmatpush1.msra.mxu0 0.0
        %3778 = vmatprep.subr.mxu0 0.0
        %3779 = vmatpush1.msra.mxu0 0.0
        %3780 = vmatprep.subr.mxu0 0.0
        %3781 = vmatpush1.msra.mxu0 0.0
        %3782 = vmatprep.subr.mxu0 0.0
        %3783 = vmatpush1.msra.mxu0 0.0
        %3784 = vmatprep.subr.mxu0 0.0
        %3785 = vmatpush1.msra.mxu0 0.0
        %3786 = vmatprep.subr.mxu0 0.0
        %3787 = vmatpush1.msra.mxu0 0.0
        %3788 = vmatprep.subr.mxu0 0.0
        %3789 = vmatpush1.msra.mxu0 0.0
        %3790 = vmatprep.subr.mxu0 0.0
        %3791 = vmatpush1.msra.mxu0 0.0
        %3792 = vmatprep.subr.mxu0 0.0
        %3793 = vmatpush1.msra.mxu0 0.0
        %3794 = vmatprep.subr.mxu0 0.0
        %3795 = vmatpush1.msra.mxu0 0.0
        %3796 = vmatprep.mubr.f32.mxu0 0.0
        %3797 = vmatmul.mubr.f32.gmra.mrb[0].mxu0 %v3730
        %v3798 = vpop.f32.mrb[0].mxu0
        %v3799 = vadd.f32 0.0, %v3798
        %v3800 = vpop.f32.mrb[0].mxu0
        %3801 = vdwg.mxu0
        %3802 = vrot.lane.b32.xlu0 %v2535, 100
        %v3803 = vpop.permute.xlu0 %3802
        %3804 = vrot.lane.b32.xlu0 %v2619, 100
        %v3805 = vpop.permute.xlu0 %3804
        %v3806 = vsel %vm950, %v3803, 0
        %v3808 = vsel %vm950, %v3805, 0
        %3810 = vmatprep.subr.mxu0 0.0
        %3811 = vmatpush1.xpose.msra.mxu0 %v3808
        %3812 = vmatprep.subr.mxu0 0.0
        %3813 = vmatpush1.xpose.msra.mxu0 0.0
        %3814 = vmatprep.subr.mxu0 0.0
        %3815 = vmatpush1.xpose.msra.mxu0 0.0
        %3816 = vmatprep.subr.mxu0 0.0
        %3817 = vmatpush1.xpose.msra.mxu0 0.0
        %3818 = vmatprep.subr.mxu0 0.0
        %3819 = vmatpush1.xpose.msra.mxu0 0.0
        %3820 = vmatprep.subr.mxu0 0.0
        %3821 = vmatpush1.xpose.msra.mxu0 0.0
        %3822 = vmatprep.subr.mxu0 0.0
        %3823 = vmatpush1.xpose.msra.mxu0 0.0
        %3824 = vmatprep.subr.mxu0 0.0
        %3825 = vmatpush1.xpose.msra.mxu0 0.0
        %3826 = vmatprep.subr.mxu0 0.0
        %3827 = vmatpush1.xpose.msra.mxu0 0.0
        %3828 = vmatprep.subr.mxu0 0.0
        %3829 = vmatpush1.xpose.msra.mxu0 0.0
        %3830 = vmatprep.subr.mxu0 0.0
        %3831 = vmatpush1.xpose.msra.mxu0 0.0
        %3832 = vmatprep.subr.mxu0 0.0
        %3833 = vmatpush1.xpose.msra.mxu0 0.0
        %3834 = vmatprep.subr.mxu0 0.0
        %3835 = vmatpush1.xpose.msra.mxu0 0.0
        %3836 = vmatprep.subr.mxu0 0.0
        %3837 = vmatpush1.xpose.msra.mxu0 0.0
        %3838 = vmatprep.subr.mxu0 0.0
        %3839 = vmatpush1.xpose.msra.mxu0 0.0
        %3840 = vmatprep.subr.mxu0 0.0
        %3841 = vmatpush1.xpose.msra.mxu0 0.0
        %3842 = vmatprep.subr.mxu0 0.0
        %3843 = vmatpush1.xpose.msra.mxu0 0.0
        %3844 = vmatprep.subr.mxu0 0.0
        %3845 = vmatpush1.xpose.msra.mxu0 0.0
        %3846 = vmatprep.subr.mxu0 0.0
        %3847 = vmatpush1.xpose.msra.mxu0 0.0
        %3848 = vmatprep.subr.mxu0 0.0
        %3849 = vmatpush1.xpose.msra.mxu0 0.0
        %3850 = vmatprep.subr.mxu0 0.0
        %3851 = vmatpush1.xpose.msra.mxu0 0.0
        %3852 = vmatprep.subr.mxu0 0.0
        %3853 = vmatpush1.xpose.msra.mxu0 0.0
        %3854 = vmatprep.subr.mxu0 0.0
        %3855 = vmatpush1.xpose.msra.mxu0 0.0
        %3856 = vmatprep.subr.mxu0 0.0
        %3857 = vmatpush1.xpose.msra.mxu0 0.0
        %3858 = vmatprep.subr.mxu0 0.0
        %3859 = vmatpush1.xpose.msra.mxu0 0.0
        %3860 = vmatprep.subr.mxu0 0.0
        %3861 = vmatpush1.xpose.msra.mxu0 0.0
        %3862 = vmatprep.subr.mxu0 0.0
        %3863 = vmatpush1.xpose.msra.mxu0 0.0
        %3864 = vmatprep.subr.mxu0 0.0
        %3865 = vmatpush1.xpose.msra.mxu0 0.0
        %3866 = vmatprep.subr.mxu0 0.0
        %3867 = vmatpush1.xpose.msra.mxu0 0.0
        %3868 = vmatprep.subr.mxu0 0.0
        %3869 = vmatpush1.xpose.msra.mxu0 0.0
        %3870 = vmatprep.subr.mxu0 0.0
        %3871 = vmatpush1.xpose.msra.mxu0 0.0
        %3872 = vmatprep.subr.mxu0 0.0
        %3873 = vmatpush1.xpose.msra.mxu0 0.0
        %3874 = vmatprep.mubr.f32.mxu0 0.0
        %3875 = vmatmul.mubr.f32.gmra.mrb[0].mxu0 %v3806
        %v3876 = vpop.f32.mrb[0].mxu0
        %v3877 = vadd.f32 0.0, %v3876
        %v3878 = vpop.f32.mrb[0].mxu0
        %3879 = vdwg.mxu0
        %v3880 = vmul.f32 %v3877, 0.5
        %v3881 = vsel %vm861, %v3880, -1e+09
        %v3882 = vsel %vm1027, %v3881, -inf
        %3883 = vmax.xlane.f32.xlu0 %v3882
        %v3884 = vpop.xlane.xlu0 %3883
        %v3885 = vsub.f32 %v3881, %v3884
        %v3886 = vmul.f32 %v3885, 1.442695
        %v3887 = vpow.pop %v3886
        %v3888 = vsel %vm1027, %v3887, 0.0
        %3889 = vadd.xlane.f32.xlu0 %v3888
        %v3890 = vpop.xlane.xlu0 %3889
        %v3891 = vrcp.pop %v3890
        %v3892 = vmul.f32 %v3887, %v3891
        %s3893 = scalar_lea.vmem %s839, 56 [#allocation6]
        %3894 = vst.msk [vmem:[%s3893] sm:$0xff] %vm1027, %v3892
        %3895 = vrot.lane.b32.xlu0 %v2619, 68
        %v3896 = vpop.permute.xlu0 %3895
        %v3899 = vsel %vm1027, %v3892, 0
        %3901 = vmatprep.subr.mxu0 0.0
        %3902 = vmatpush1.msra.mxu0 %v3896
        %3903 = vmatprep.subr.mxu0 0.0
        %3904 = vmatpush1.msra.mxu0 0.0
        %3905 = vmatprep.subr.mxu0 0.0
        %3906 = vmatpush1.msra.mxu0 0.0
        %3907 = vmatprep.subr.mxu0 0.0
        %3908 = vmatpush1.msra.mxu0 0.0
        %3909 = vmatprep.subr.mxu0 0.0
        %3910 = vmatpush1.msra.mxu0 0.0
        %3911 = vmatprep.subr.mxu0 0.0
        %3912 = vmatpush1.msra.mxu0 0.0
        %3913 = vmatprep.subr.mxu0 0.0
        %3914 = vmatpush1.msra.mxu0 0.0
        %3915 = vmatprep.subr.mxu0 0.0
        %3916 = vmatpush1.msra.mxu0 0.0
        %3917 = vmatprep.subr.mxu0 0.0
        %3918 = vmatpush1.msra.mxu0 0.0
        %3919 = vmatprep.subr.mxu0 0.0
        %3920 = vmatpush1.msra.mxu0 0.0
        %3921 = vmatprep.subr.mxu0 0.0
        %3922 = vmatpush1.msra.mxu0 0.0
        %3923 = vmatprep.subr.mxu0 0.0
        %3924 = vmatpush1.msra.mxu0 0.0
        %3925 = vmatprep.subr.mxu0 0.0
        %3926 = vmatpush1.msra.mxu0 0.0
        %3927 = vmatprep.subr.mxu0 0.0
        %3928 = vmatpush1.msra.mxu0 0.0
        %3929 = vmatprep.subr.mxu0 0.0
        %3930 = vmatpush1.msra.mxu0 0.0
        %3931 = vmatprep.subr.mxu0 0.0
        %3932 = vmatpush1.msra.mxu0 0.0
        %3933 = vmatprep.subr.mxu0 0.0
        %3934 = vmatpush1.msra.mxu0 0.0
        %3935 = vmatprep.subr.mxu0 0.0
        %3936 = vmatpush1.msra.mxu0 0.0
        %3937 = vmatprep.subr.mxu0 0.0
        %3938 = vmatpush1.msra.mxu0 0.0
        %3939 = vmatprep.subr.mxu0 0.0
        %3940 = vmatpush1.msra.mxu0 0.0
        %3941 = vmatprep.subr.mxu0 0.0
        %3942 = vmatpush1.msra.mxu0 0.0
        %3943 = vmatprep.subr.mxu0 0.0
        %3944 = vmatpush1.msra.mxu0 0.0
        %3945 = vmatprep.subr.mxu0 0.0
        %3946 = vmatpush1.msra.mxu0 0.0
        %3947 = vmatprep.subr.mxu0 0.0
        %3948 = vmatpush1.msra.mxu0 0.0
        %3949 = vmatprep.subr.mxu0 0.0
        %3950 = vmatpush1.msra.mxu0 0.0
        %3951 = vmatprep.subr.mxu0 0.0
        %3952 = vmatpush1.msra.mxu0 0.0
        %3953 = vmatprep.subr.mxu0 0.0
        %3954 = vmatpush1.msra.mxu0 0.0
        %3955 = vmatprep.subr.mxu0 0.0
        %3956 = vmatpush1.msra.mxu0 0.0
        %3957 = vmatprep.subr.mxu0 0.0
        %3958 = vmatpush1.msra.mxu0 0.0
        %3959 = vmatprep.subr.mxu0 0.0
        %3960 = vmatpush1.msra.mxu0 0.0
        %3961 = vmatprep.subr.mxu0 0.0
        %3962 = vmatpush1.msra.mxu0 0.0
        %3963 = vmatprep.subr.mxu0 0.0
        %3964 = vmatpush1.msra.mxu0 0.0
        %3965 = vmatprep.mubr.f32.mxu0 0.0
        %3966 = vmatmul.mubr.f32.gmra.mrb[0].mxu0 %v3899
        %v3967 = vpop.f32.mrb[0].mxu0
        %v3968 = vadd.f32 0.0, %v3967
        %v3969 = vpop.f32.mrb[0].mxu0
        %3970 = vdwg.mxu0
        %3972 = vrot.lane.b32.xlu0 %v2954, 4
        %v3973 = vpop.permute.xlu0 %3972
        %3976 = vrot.lane.b32.xlu0 %v3123, 8
        %v3977 = vpop.permute.xlu0 %3976
        %3980 = vrot.lane.b32.xlu0 %v3292, 12
        %v3981 = vpop.permute.xlu0 %3980
        %3984 = vrot.lane.b32.xlu0 %v3461, 16
        %v3985 = vpop.permute.xlu0 %3984
        %3988 = vrot.lane.b32.xlu0 %v3630, 20
        %v3989 = vpop.permute.xlu0 %3988
        %3992 = vrot.lane.b32.xlu0 %v3799, 24
        %v3993 = vpop.permute.xlu0 %3992
        %3996 = vrot.lane.b32.xlu0 %v3968, 28
        %v3997 = vpop.permute.xlu0 %3996
        %v3999 = vsel %vm950, %v2785, %v3973
        %v4000 = vsel %vm1027, %v3999, %v3977
        %v4001 = vsel %vm2329, %v4000, %v3981
        %v4002 = vsel %vm2331, %v4001, %v3985
        %v4003 = vsel %vm2333, %v4002, %v3989
        %v4004 = vsel %vm2335, %v4003, %v3993
        %v4005 = vsel %vm2337, %v4004, %v3997
        %v4006 = vld [vmem:[%s12] sm:$0xff]
        %v4007 = vld [vmem:[%s12 + $0x8] sm:$0xff]
        %v4008 = vld [vmem:[%s12 + $0x10] sm:$0xff]
        %v4009 = vld [vmem:[%s12 + $0x18] sm:$0xff]
        %v4010 = vld [vmem:[%s13] sm:$0x1]
        %v4012 = vlaneseq
        %v4013 = vshrl.u32 %v4012, 7
        %v4014 = vsub.s32 0, %v4013
        %v4015 = vrot.slane %v4010, %v4014
        %v4018 = vsel %vm873, %v4005, 0
        %4020 = vmatprep.subr.mxu0 0.0
        %4021 = vmatpush1.msra.mxu0 %v4006
        %4022 = vmatprep.subr.mxu0 0.0
        %4023 = vmatpush1.msra.mxu0 %v4007
        %4024 = vmatprep.subr.mxu0 0.0
        %4025 = vmatpush1.msra.mxu0 %v4008
        %4026 = vmatprep.subr.mxu0 0.0
        %4027 = vmatpush1.msra.mxu0 %v4009
        %4028 = vmatprep.subr.mxu0 0.0
        %4029 = vmatpush1.msra.mxu0 0.0
        %4030 = vmatprep.subr.mxu0 0.0
        %4031 = vmatpush1.msra.mxu0 0.0
        %4032 = vmatprep.subr.mxu0 0.0
        %4033 = vmatpush1.msra.mxu0 0.0
        %4034 = vmatprep.subr.mxu0 0.0
        %4035 = vmatpush1.msra.mxu0 0.0
        %4036 = vmatprep.subr.mxu0 0.0
        %4037 = vmatpush1.msra.mxu0 0.0
        %4038 = vmatprep.subr.mxu0 0.0
        %4039 = vmatpush1.msra.mxu0 0.0
        %4040 = vmatprep.subr.mxu0 0.0
        %4041 = vmatpush1.msra.mxu0 0.0
        %4042 = vmatprep.subr.mxu0 0.0
        %4043 = vmatpush1.msra.mxu0 0.0
        %4044 = vmatprep.subr.mxu0 0.0
        %4045 = vmatpush1.msra.mxu0 0.0
        %4046 = vmatprep.subr.mxu0 0.0
        %4047 = vmatpush1.msra.mxu0 0.0
        %4048 = vmatprep.subr.mxu0 0.0
        %4049 = vmatpush1.msra.mxu0 0.0
        %4050 = vmatprep.subr.mxu0 0.0
        %4051 = vmatpush1.msra.mxu0 0.0
        %4052 = vmatprep.subr.mxu0 0.0
        %4053 = vmatpush1.msra.mxu0 0.0
        %4054 = vmatprep.subr.mxu0 0.0
        %4055 = vmatpush1.msra.mxu0 0.0
        %4056 = vmatprep.subr.mxu0 0.0
        %4057 = vmatpush1.msra.mxu0 0.0
        %4058 = vmatprep.subr.mxu0 0.0
        %4059 = vmatpush1.msra.mxu0 0.0
        %4060 = vmatprep.subr.mxu0 0.0
        %4061 = vmatpush1.msra.mxu0 0.0
        %4062 = vmatprep.subr.mxu0 0.0
        %4063 = vmatpush1.msra.mxu0 0.0
        %4064 = vmatprep.subr.mxu0 0.0
        %4065 = vmatpush1.msra.mxu0 0.0
        %4066 = vmatprep.subr.mxu0 0.0
        %4067 = vmatpush1.msra.mxu0 0.0
        %4068 = vmatprep.subr.mxu0 0.0
        %4069 = vmatpush1.msra.mxu0 0.0
        %4070 = vmatprep.subr.mxu0 0.0
        %4071 = vmatpush1.msra.mxu0 0.0
        %4072 = vmatprep.subr.mxu0 0.0
        %4073 = vmatpush1.msra.mxu0 0.0
        %4074 = vmatprep.subr.mxu0 0.0
        %4075 = vmatpush1.msra.mxu0 0.0
        %4076 = vmatprep.subr.mxu0 0.0
        %4077 = vmatpush1.msra.mxu0 0.0
        %4078 = vmatprep.subr.mxu0 0.0
        %4079 = vmatpush1.msra.mxu0 0.0
        %4080 = vmatprep.subr.mxu0 0.0
        %4081 = vmatpush1.msra.mxu0 0.0
        %4082 = vmatprep.subr.mxu0 0.0
        %4083 = vmatpush1.msra.mxu0 0.0
        %4084 = vmatprep.mubr.f32.mxu0 0.0
        %4085 = vmatmul.mubr.f32.gmra.mrb[0].mxu0 %v4018
        %v4086 = vpop.f32.mrb[0].mxu0
        %v4087 = vadd.f32 %v4015, %v4086
        %v4088 = vpop.f32.mrb[0].mxu0
        %4089 = vdwg.mxu0
        %v4090 = vadd.f32 %v2453, %v4087
        %v4091 = vld [vmem:[%s20] sm:$0x1]
        %v4092 = vld [vmem:[%s21] sm:$0x1]
        %v4093 = vsel %vm873, %v4090, 0.0
        %4094 = vadd.xlane.f32.xlu0 %v4093
        %v4095 = vpop.xlane.xlu0 %4094
        %v4096 = vmul.f32 %v4095, %v2429
        %v4097 = vsub.f32 %v4090, %v4096
        %v4098 = vmul.f32 %v4097, %v4097
        %v4099 = vsel %vm873, %v4098, 0.0
        %4100 = vadd.xlane.f32.xlu0 %v4099
        %v4101 = vpop.xlane.xlu0 %4100
        %v4102 = vmul.f32 %v4101, %v2429
        %v4103 = vadd.f32 %v4102, 1e-06
        %v4104 = vrsqrt.pop %v4103
        %v4105 = vmul.f32 %v4097, %v4104
        %v4107 = vlaneseq
        %v4108 = vshrl.u32 %v4107, 7
        %v4109 = vsub.s32 0, %v4108
        %v4110 = vrot.slane %v4091, %v4109
        %v4112 = vmul.f32 %v4110, %v4105
        %v4114 = vlaneseq
        %v4115 = vshrl.u32 %v4114, 7
        %v4116 = vsub.s32 0, %v4115
        %v4117 = vrot.slane %v4092, %v4116
        %v4119 = vadd.f32 %v4112, %v4117
        %v4120 = vld [vmem:[%s14] sm:$0xff]
        %v4121 = vld [vmem:[%s14 + $0x8] sm:$0xff]
        %v4122 = vld [vmem:[%s14 + $0x10] sm:$0xff]
        %v4123 = vld [vmem:[%s14 + $0x18] sm:$0xff]
        %v4124 = vld [vmem:[%s15] sm:$0x1]
        %v4126 = vlaneseq
        %v4127 = vshrl.u32 %v4126, 7
        %v4128 = vsub.s32 0, %v4127
        %v4129 = vrot.slane %v4124, %v4128
        %v4132 = vsel %vm873, %v4119, 0
        %4134 = vmatprep.subr.mxu0 0.0
        %4135 = vmatpush1.msra.mxu0 %v4120
        %4136 = vmatprep.subr.mxu0 0.0
        %4137 = vmatpush1.msra.mxu0 %v4121
        %4138 = vmatprep.subr.mxu0 0.0
        %4139 = vmatpush1.msra.mxu0 %v4122
        %4140 = vmatprep.subr.mxu0 0.0
        %4141 = vmatpush1.msra.mxu0 %v4123
        %4142 = vmatprep.subr.mxu0 0.0
        %4143 = vmatpush1.msra.mxu0 0.0
        %4144 = vmatprep.subr.mxu0 0.0
        %4145 = vmatpush1.msra.mxu0 0.0
        %4146 = vmatprep.subr.mxu0 0.0
        %4147 = vmatpush1.msra.mxu0 0.0
        %4148 = vmatprep.subr.mxu0 0.0
        %4149 = vmatpush1.msra.mxu0 0.0
        %4150 = vmatprep.subr.mxu0 0.0
        %4151 = vmatpush1.msra.mxu0 0.0
        %4152 = vmatprep.subr.mxu0 0.0
        %4153 = vmatpush1.msra.mxu0 0.0
        %4154 = vmatprep.subr.mxu0 0.0
        %4155 = vmatpush1.msra.mxu0 0.0
        %4156 = vmatprep.subr.mxu0 0.0
        %4157 = vmatpush1.msra.mxu0 0.0
        %4158 = vmatprep.subr.mxu0 0.0
        %4159 = vmatpush1.msra.mxu0 0.0
        %4160 = vmatprep.subr.mxu0 0.0
        %4161 = vmatpush1.msra.mxu0 0.0
        %4162 = vmatprep.subr.mxu0 0.0
        %4163 = vmatpush1.msra.mxu0 0.0
        %4164 = vmatprep.subr.mxu0 0.0
        %4165 = vmatpush1.msra.mxu0 0.0
        %4166 = vmatprep.subr.mxu0 0.0
        %4167 = vmatpush1.msra.mxu0 0.0
        %4168 = vmatprep.subr.mxu0 0.0
        %4169 = vmatpush1.msra.mxu0 0.0
        %4170 = vmatprep.subr.mxu0 0.0
        %4171 = vmatpush1.msra.mxu0 0.0
        %4172 = vmatprep.subr.mxu0 0.0
        %4173 = vmatpush1.msra.mxu0 0.0
        %4174 = vmatprep.subr.mxu0 0.0
        %4175 = vmatpush1.msra.mxu0 0.0
        %4176 = vmatprep.subr.mxu0 0.0
        %4177 = vmatpush1.msra.mxu0 0.0
        %4178 = vmatprep.subr.mxu0 0.0
        %4179 = vmatpush1.msra.mxu0 0.0
        %4180 = vmatprep.subr.mxu0 0.0
        %4181 = vmatpush1.msra.mxu0 0.0
        %4182 = vmatprep.subr.mxu0 0.0
        %4183 = vmatpush1.msra.mxu0 0.0
        %4184 = vmatprep.subr.mxu0 0.0
        %4185 = vmatpush1.msra.mxu0 0.0
        %4186 = vmatprep.subr.mxu0 0.0
        %4187 = vmatpush1.msra.mxu0 0.0
        %4188 = vmatprep.subr.mxu0 0.0
        %4189 = vmatpush1.msra.mxu0 0.0
        %4190 = vmatprep.subr.mxu0 0.0
        %4191 = vmatpush1.msra.mxu0 0.0
        %4192 = vmatprep.subr.mxu0 0.0
        %4193 = vmatpush1.msra.mxu0 0.0
        %4194 = vmatprep.subr.mxu0 0.0
        %4195 = vmatpush1.msra.mxu0 0.0
        %4196 = vmatprep.subr.mxu0 0.0
        %4197 = vmatpush1.msra.mxu0 0.0
        %4198 = vmatprep.mubr.f32.mxu0 0.0
        %4199 = vmatmul.mubr.f32.gmra.mrb[0].mxu0 %v4132
        %v4200 = vpop.f32.mrb[0].mxu0
        %v4201 = vadd.f32 %v4129, %v4200
        %v4202 = vpop.f32.mrb[0].mxu0
        %4203 = vdwg.mxu0
        %v4204 = vmax.f32 %v4201, 0.0
        %v4205 = vld [vmem:[%s16] sm:$0xff]
        %v4206 = vld [vmem:[%s16 + $0x8] sm:$0xff]
        %v4207 = vld [vmem:[%s16 + $0x10] sm:$0xff]
        %v4208 = vld [vmem:[%s16 + $0x18] sm:$0xff]
        %v4209 = vld [vmem:[%s16 + $0x20] sm:$0xff]
        %v4210 = vld [vmem:[%s16 + $0x28] sm:$0xff]
        %v4211 = vld [vmem:[%s16 + $0x30] sm:$0xff]
        %v4212 = vld [vmem:[%s16 + $0x38] sm:$0xff]
        %v4213 = vld [vmem:[%s17] sm:$0x1]
        %v4215 = vlaneseq
        %v4216 = vshrl.u32 %v4215, 7
        %v4217 = vsub.s32 0, %v4216
        %v4218 = vrot.slane %v4213, %v4217
        %vm4220 = vcmask 523264
        %v4222 = vsel %vm4220, %v4204, 0
        %4224 = vmatprep.subr.mxu0 0.0
        %4225 = vmatpush1.msra.mxu0 %v4205
        %4226 = vmatprep.subr.mxu0 0.0
        %4227 = vmatpush1.msra.mxu0 %v4206
        %4228 = vmatprep.subr.mxu0 0.0
        %4229 = vmatpush1.msra.mxu0 %v4207
        %4230 = vmatprep.subr.mxu0 0.0
        %4231 = vmatpush1.msra.mxu0 %v4208
        %4232 = vmatprep.subr.mxu0 0.0
        %4233 = vmatpush1.msra.mxu0 %v4209
        %4234 = vmatprep.subr.mxu0 0.0
        %4235 = vmatpush1.msra.mxu0 %v4210
        %4236 = vmatprep.subr.mxu0 0.0
        %4237 = vmatpush1.msra.mxu0 %v4211
        %4238 = vmatprep.subr.mxu0 0.0
        %4239 = vmatpush1.msra.mxu0 %v4212
        %4240 = vmatprep.subr.mxu0 0.0
        %4241 = vmatpush1.msra.mxu0 0.0
        %4242 = vmatprep.subr.mxu0 0.0
        %4243 = vmatpush1.msra.mxu0 0.0
        %4244 = vmatprep.subr.mxu0 0.0
        %4245 = vmatpush1.msra.mxu0 0.0
        %4246 = vmatprep.subr.mxu0 0.0
        %4247 = vmatpush1.msra.mxu0 0.0
        %4248 = vmatprep.subr.mxu0 0.0
        %4249 = vmatpush1.msra.mxu0 0.0
        %4250 = vmatprep.subr.mxu0 0.0
        %4251 = vmatpush1.msra.mxu0 0.0
        %4252 = vmatprep.subr.mxu0 0.0
        %4253 = vmatpush1.msra.mxu0 0.0
        %4254 = vmatprep.subr.mxu0 0.0
        %4255 = vmatpush1.msra.mxu0 0.0
        %4256 = vmatprep.subr.mxu0 0.0
        %4257 = vmatpush1.msra.mxu0 0.0
        %4258 = vmatprep.subr.mxu0 0.0
        %4259 = vmatpush1.msra.mxu0 0.0
        %4260 = vmatprep.subr.mxu0 0.0
        %4261 = vmatpush1.msra.mxu0 0.0
        %4262 = vmatprep.subr.mxu0 0.0
        %4263 = vmatpush1.msra.mxu0 0.0
        %4264 = vmatprep.subr.mxu0 0.0
        %4265 = vmatpush1.msra.mxu0 0.0
        %4266 = vmatprep.subr.mxu0 0.0
        %4267 = vmatpush1.msra.mxu0 0.0
        %4268 = vmatprep.subr.mxu0 0.0
        %4269 = vmatpush1.msra.mxu0 0.0
        %4270 = vmatprep.subr.mxu0 0.0
        %4271 = vmatpush1.msra.mxu0 0.0
        %4272 = vmatprep.subr.mxu0 0.0
        %4273 = vmatpush1.msra.mxu0 0.0
        %4274 = vmatprep.subr.mxu0 0.0
        %4275 = vmatpush1.msra.mxu0 0.0
        %4276 = vmatprep.subr.mxu0 0.0
        %4277 = vmatpush1.msra.mxu0 0.0
        %4278 = vmatprep.subr.mxu0 0.0
        %4279 = vmatpush1.msra.mxu0 0.0
        %4280 = vmatprep.subr.mxu0 0.0
        %4281 = vmatpush1.msra.mxu0 0.0
        %4282 = vmatprep.subr.mxu0 0.0
        %4283 = vmatpush1.msra.mxu0 0.0
        %4284 = vmatprep.subr.mxu0 0.0
        %4285 = vmatpush1.msra.mxu0 0.0
        %4286 = vmatprep.subr.mxu0 0.0
        %4287 = vmatpush1.msra.mxu0 0.0
        %4288 = vmatprep.mubr.f32.mxu0 0.0
        %4289 = vmatmul.mubr.f32.gmra.mrb[0].mxu0 %v4222
        %v4290 = vpop.f32.mrb[0].mxu0
        %v4291 = vadd.f32 %v4218, %v4290
        %v4292 = vpop.f32.mrb[0].mxu0
        %4293 = vdwg.mxu0
        %v4294 = vadd.f32 %v4119, %v4291
        %v4295 = vld [vmem:[%s22] sm:$0x1]
        %v4296 = vld [vmem:[%s23] sm:$0x1]
        %v4297 = vsel %vm873, %v4294, 0.0
        %4298 = vadd.xlane.f32.xlu0 %v4297
        %v4299 = vpop.xlane.xlu0 %4298
        %v4300 = vmul.f32 %v4299, %v2429
        %v4301 = vsub.f32 %v4294, %v4300
        %v4302 = vmul.f32 %v4301, %v4301
        %v4303 = vsel %vm873, %v4302, 0.0
        %4304 = vadd.xlane.f32.xlu0 %v4303
        %v4305 = vpop.xlane.xlu0 %4304
        %v4306 = vmul.f32 %v4305, %v2429
        %v4307 = vadd.f32 %v4306, 1e-06
        %v4308 = vrsqrt.pop %v4307
        %v4309 = vmul.f32 %v4301, %v4308
        %v4311 = vlaneseq
        %v4312 = vshrl.u32 %v4311, 7
        %v4313 = vsub.s32 0, %v4312
        %v4314 = vrot.slane %v4295, %v4313
        %v4316 = vmul.f32 %v4314, %v4309
        %v4318 = vlaneseq
        %v4319 = vshrl.u32 %v4318, 7
        %v4320 = vsub.s32 0, %v4319
        %v4321 = vrot.slane %v4296, %v4320
        %v4323 = vadd.f32 %v4316, %v4321
        %4324 = vst.msk [vmem:[%s825] sm:$0xff] %vm873, %v4323
        %s4325 = sand.u32 %s576, 1
        %s4326 = scalar_lea.sflag [#allocation3], %s4325
        %s4327 = sand.u32 %s576, 1
        %s4328 = smul.addr %s4327, 8
        %s4329 = scalar_lea.vmem [#allocation2], %s4328
        %s4330 = sand.u32 %s44, 1
        %s4331 = scalar_lea.sflag [#allocation5], %s4330
        %s4332 = sand.u32 %s602, 1
        %s4333 = smul.addr %s4332, 64
        %s4334 = scalar_lea.vmem [#allocation4], %s4333
        %s4335 = sand.u32 %s44, 1
        %s4336 = scalar_lea.sflag [#allocation5], %s4335
        %s4337 = sand.u32 %s628, 1
        %s4338 = smul.addr %s4337, 64
        %s4339 = scalar_lea.vmem [#allocation6], %s4338
        // Predicated region
        $region117: #{trans_decoder.1} parent=115 // pred_check
          %p4340 = pneg %p586
        $region118: #{trans_decoder.1} parent=115 // pred_check_branch
          %4342 = sbr.rel (%p4340) target = $region120
        $region119: #{trans_decoder.1} parent=115 // pred_region
          %s4344 = ssub.s32 128, 128
          %4345 = vsyncadd %s4326, %s4344
          %s4346 = smul.addr %s44, 128
          %s4347 = scalar_lea.hbm %s24, %s4346
          %s4349 = sshll.u32 %s4329, 4
          %s4350 = int_to_ptr.vmem [resolvable:$true] %s4349
          %4352 = dma.vmem_to_hbm [thread:$0]  %s4350, 128, %s4347, %s4326
        $region120: #{trans_decoder.1} parent=115 // pred_fallthru
          _
        // Predicated region
        $region121: #{trans_decoder.1} parent=115 // pred_check
          %p4353 = pneg %p612
        $region122: #{trans_decoder.1} parent=115 // pred_check_branch
          %4355 = sbr.rel (%p4353) target = $region124
        $region123: #{trans_decoder.1} parent=115 // pred_region
          %s4357 = ssub.s32 1024, 1024
          %4358 = vsyncadd %s4331, %s4357
          %s4359 = smul.addr %s44, 8
          %s4360 = smul.addr %s4359, 128
          %s4361 = scalar_lea.hbm %s25, %s4360
          %s4362 = sshll.u32 %s4334, 4
          %s4363 = int_to_ptr.vmem [resolvable:$true] %s4362
          %4368 = dma.vmem_to_hbm [thread:$0]  %s4363, 1024, %s4361, %s4331, 128, 128, 8
        $region124: #{trans_decoder.1} parent=115 // pred_fallthru
          _
        // Predicated region
        $region125: #{trans_decoder.1} parent=115 // pred_check
          %p4369 = pneg %p638
        $region126: #{trans_decoder.1} parent=115 // pred_check_branch
          %4371 = sbr.rel (%p4369) target = $region128
        $region127: #{trans_decoder.1} parent=115 // pred_region
          %s4373 = ssub.s32 1024, 1024
          %4374 = vsyncadd %s4336, %s4373
          %s4375 = smul.addr %s44, 8
          %s4376 = smul.addr %s4375, 128
          %s4377 = scalar_lea.hbm %s26, %s4376
          %s4378 = sshll.u32 %s4339, 4
          %s4379 = int_to_ptr.vmem [resolvable:$true] %s4378
          %4384 = dma.vmem_to_hbm [thread:$0]  %s4379, 1024, %s4377, %s4336, 128, 128, 8
        $region128: #{trans_decoder.1} parent=115 // pred_fallthru
          _
      $region116: #{trans_decoder.1} parent=5 // pred_fallthru
        _
      %p4385 = scmp.le.s32.totalorder 2, %s39
      // Predicated region
      $region129: #{trans_decoder.1} parent=5 // pred_check
        %p4386 = pneg %p4385
      $region130: #{trans_decoder.1} parent=5 // pred_check_branch
        %4388 = sbr.rel (%p4386) target = $region132
      $region131: #{trans_decoder.1} parent=5 // pred_region
        %s4389 = ssub.s32 %s39, 2
        // Predicated region
        $region133: #{trans_decoder.1} parent=131 // pred_check
          %p4390 = pneg %p592
        $region134: #{trans_decoder.1} parent=131 // pred_check_branch
          %4392 = sbr.rel (%p4390) target = $region136
        $region135: #{trans_decoder.1} parent=131 // pred_region
          %s4393 = sand.u32 %s577, 1
          %s4394 = scalar_lea.sflag [#allocation3], %s4393
          %s4395 = sand.u32 %s577, 1
          %s4396 = smul.addr %s4395, 8
          %s4397 = scalar_lea.vmem [#allocation2], %s4396
          %4398 = dma.done %s4394, 128
        $region136: #{trans_decoder.1} parent=131 // pred_fallthru
          _
        // Predicated region
        $region137: #{trans_decoder.1} parent=131 // pred_check
          %p4399 = pneg %p618
        $region138: #{trans_decoder.1} parent=131 // pred_check_branch
          %4401 = sbr.rel (%p4399) target = $region140
        $region139: #{trans_decoder.1} parent=131 // pred_region
          %s4402 = sand.u32 %s45, 1
          %s4403 = scalar_lea.sflag [#allocation5], %s4402
          %s4404 = sand.u32 %s603, 1
          %s4405 = smul.addr %s4404, 64
          %s4406 = scalar_lea.vmem [#allocation4], %s4405
          %4407 = dma.done %s4403, 1024
        $region140: #{trans_decoder.1} parent=131 // pred_fallthru
          _
        // Predicated region
        $region141: #{trans_decoder.1} parent=131 // pred_check
          %p4408 = pneg %p644
        $region142: #{trans_decoder.1} parent=131 // pred_check_branch
          %4410 = sbr.rel (%p4408) target = $region144
        $region143: #{trans_decoder.1} parent=131 // pred_region
          %s4411 = sand.u32 %s45, 1
          %s4412 = scalar_lea.sflag [#allocation5], %s4411
          %s4413 = sand.u32 %s629, 1
          %s4414 = smul.addr %s4413, 64
          %s4415 = scalar_lea.vmem [#allocation6], %s4414
          %4416 = dma.done %s4412, 1024
        $region144: #{trans_decoder.1} parent=131 // pred_fallthru
          _
      $region132: #{trans_decoder.1} parent=5 // pred_fallthru
        _
    $region6: #{trans_decoder.1} parent=1 // loop_footer
      %s43 = sadd.s32 1, %s39
    $region7: #{trans_decoder.1} parent=1 // loop_footer_branch
      %38 = sbr.rel target = $region3
    $region8: #{trans_decoder.1} parent=1 // loop_exit
      _
    %4417 = vsyncpa [#allocation3], 1
    %s4418 = scalar_lea.sflag [#allocation3], 1
    %4419 = vsyncpa %s4418, 1
    %4420 = vsyncpa [#allocation5], 1
    %s4421 = scalar_lea.sflag [#allocation5], 1
    %4422 = vsyncpa %s4421, 1

</llo_original>
